<compile_context>
chip_gen: v5e
topology: v5e:2x2
jax: 0.10.0
libtpu: 0.0.40
codegen_flags: <defaults>
</compile_context>

<pallas_src>
import functools

import jax
import jax.numpy as jnp
import numpy as np
from jax.experimental import pallas as pl
from jax.experimental.pallas import tpu as pltpu


# --------------------------------------------------------------------------
# Fused Pallas kernel: embeddings -> 2x biLSTM -> FC -> tanh -> LayerNorm
# --------------------------------------------------------------------------
def _qst_fused_kernel(num_layers, T, B, H, *refs):
    """Whole QstEncoder trunk in one Pallas invocation.

    refs layout (inputs, then output, then scratch — as passed by pallas_call):
      x_ref                      (T*B, D)     time-major flattened embeddings
      per layer l (x num_layers):
        wif_ref[l]               (Din_l, 4H)  input->gates, forward dir  [i f g o]
        wib_ref[l]               (Din_l, 4H)  input->gates, backward dir
        whf_ref[l]               (H, 4H)      hidden->gates, forward dir
        whb_ref[l]               (H, 4H)      hidden->gates, backward dir
        bf_ref[l], bb_ref[l]     (1, 4H)      b_ih + b_hh per direction
      fcw_ref (2H, E), fcb_ref (1, E), gamma_ref (1, E), beta_ref (1, E)
      out_ref (B, E)
      gxf_ref, gxb_ref (T*B, 4H) f32   scratch: hoisted input projections
      seqf_ref, seqb_ref (T*B, H)      scratch: per-direction layer outputs
    """
    idx = 0
    x_ref = refs[idx]; idx += 1
    layer_refs = []
    for _ in range(num_layers):
        layer_refs.append(refs[idx:idx + 6])
        idx += 6
    fcw_ref, fcb_ref, gamma_ref, beta_ref = refs[idx:idx + 4]; idx += 4
    out_ref = refs[idx]; idx += 1
    gxf_ref, gxb_ref, seqf_ref, seqb_ref = refs[idx:idx + 4]

    H2, H3, H4 = 2 * H, 3 * H, 4 * H

    h_f = h_b = None
    for layer in range(num_layers):
        wif_ref, wib_ref, whf_ref, whb_ref, bf_ref, bb_ref = layer_refs[layer]
        last = layer == num_layers - 1

        # ---- hoisted, time-independent input projection (one big matmul per
        #      direction; off the serial critical path) ----
        if layer == 0:
            xin = x_ref[...]
            gxf = jnp.dot(xin, wif_ref[...], preferred_element_type=jnp.float32)
            gxb = jnp.dot(xin, wib_ref[...], preferred_element_type=jnp.float32)
        else:
            # Layer input is [fwd_out | bwd_out]; keep the buffers separate and
            # split the weight rows instead of materializing a concat.
            sf = seqf_ref[...]
            sb = seqb_ref[...]
            gxf = (jnp.dot(sf, wif_ref[0:H, :], preferred_element_type=jnp.float32)
                   + jnp.dot(sb, wif_ref[H:H2, :], preferred_element_type=jnp.float32))
            gxb = (jnp.dot(sf, wib_ref[0:H, :], preferred_element_type=jnp.float32)
                   + jnp.dot(sb, wib_ref[H:H2, :], preferred_element_type=jnp.float32))
        gxf_ref[...] = gxf + bf_ref[...]
        gxb_ref[...] = gxb + bb_ref[...]

        # ---- recurrence: only h @ Whh stays on the serial path.  Two dense
        #      (B,H)x(H,4H) matmuls per step (no block-diagonal zero padding). ----
        h_f = jnp.zeros((B, H), jnp.float32); c_f = jnp.zeros((B, H), jnp.float32)
        h_b = jnp.zeros((B, H), jnp.float32); c_b = jnp.zeros((B, H), jnp.float32)
        for t in range(T):                 # T is static & small -> fully unrolled
            rf = t * B                     # forward-time row block
            rb = (T - 1 - t) * B           # backward-time row block

            gates_f = gxf_ref[rf:rf + B, :] + jnp.dot(
                h_f.astype(whf_ref.dtype), whf_ref[...],
                preferred_element_type=jnp.float32)
            gates_b = gxb_ref[rb:rb + B, :] + jnp.dot(
                h_b.astype(whb_ref.dtype), whb_ref[...],
                preferred_element_type=jnp.float32)

            # PyTorch gate order: i, f, g, o
            i_fg = jax.nn.sigmoid(gates_f[:, 0:H])
            f_fg = jax.nn.sigmoid(gates_f[:, H:H2])
            g_fg = jnp.tanh(gates_f[:, H2:H3])
            o_fg = jax.nn.sigmoid(gates_f[:, H3:H4])
            c_f = f_fg * c_f + i_fg * g_fg
            h_f = o_fg * jnp.tanh(c_f)

            i_bg = jax.nn.sigmoid(gates_b[:, 0:H])
            f_bg = jax.nn.sigmoid(gates_b[:, H:H2])
            g_bg = jnp.tanh(gates_b[:, H2:H3])
            o_bg = jax.nn.sigmoid(gates_b[:, H3:H4])
            c_b = f_bg * c_b + i_bg * g_bg
            h_b = o_bg * jnp.tanh(c_b)

            if not last:                   # last layer's sequence output is unused
                seqf_ref[rf:rf + B, :] = h_f.astype(seqf_ref.dtype)
                seqb_ref[rb:rb + B, :] = h_b.astype(seqb_ref.dtype)

    # After the final loop step, (h_f, h_b) == hidden[-2:] of the PyTorch LSTM,
    # i.e. hidden_cat = [h_f | h_b] per batch row.

    # ---- head: Linear -> tanh -> LayerNorm (split-row matmul avoids the concat) ----
    y = jnp.tanh(
        jnp.dot(h_f.astype(fcw_ref.dtype), fcw_ref[0:H, :],
                preferred_element_type=jnp.float32)
        + jnp.dot(h_b.astype(fcw_ref.dtype), fcw_ref[H:H2, :],
                  preferred_element_type=jnp.float32)
        + fcb_ref[...])
    mean = jnp.mean(y, axis=-1, keepdims=True)
    var = jnp.mean((y - mean) ** 2, axis=-1, keepdims=True)
    yn = (y - mean) * jax.lax.rsqrt(var + 1e-5)
    out_ref[...] = yn * gamma_ref[...] + beta_ref[...]


# --------------------------------------------------------------------------
# Weight packing (plain JAX, runs once outside the kernel)
# --------------------------------------------------------------------------
def _pack_dir_weights(p, H, dtype):
    """Transpose one bidirectional layer's weights to matmul-friendly layout.

    Returns (wif, wib, whf, whb, bf, bb):
      wif/wib (Din, 4H): x @ w -> input contribution per direction (gate order i,f,g,o)
      whf/whb (H, 4H):   h @ w -> recurrent contribution per direction
      bf/bb   (1, 4H):   b_ih + b_hh per direction (kept f32)
    """
    wif = jnp.transpose(p["w_ih_f"]).astype(dtype)
    wib = jnp.transpose(p["w_ih_b"]).astype(dtype)
    whf = jnp.transpose(p["w_hh_f"]).astype(dtype)
    whb = jnp.transpose(p["w_hh_b"]).astype(dtype)
    bf = (p["b_ih_f"] + p["b_hh_f"]).reshape(1, 4 * H).astype(jnp.float32)
    bb = (p["b_ih_b"] + p["b_hh_b"]).reshape(1, 4 * H).astype(jnp.float32)
    return wif, wib, whf, whb, bf, bb


# --------------------------------------------------------------------------
# Forward wrapper
# --------------------------------------------------------------------------
def qst_encoder_forward(question, params, num_layers, matmul_dtype=jnp.float32):
    """Full QstEncoder forward: (B, T) int32 -> (B, embed_size) float32.

    matmul_dtype=jnp.bfloat16 is recommended on v6e/v7x (MXU inputs only;
    gate elementwise math and accumulation remain f32 inside the kernel).
    """
    # Embedding lookup (gather; plain-JAX glue). embedding_dropout = identity (eval).
    emb = jnp.take(params["embedding"], question, axis=0)        # (B, T, D)
    B, T, D = emb.shape
    H = params["lstm"][0]["w_hh_f"].shape[1]
    E = params["fc_w"].shape[0]

    # Time-major, flattened to (T*B, D): the whole (tiny) sequence lives in VMEM
    # so the per-layer input projection is one big lane-dense matmul in-kernel.
    x_flat = jnp.transpose(emb, (1, 0, 2)).reshape(T * B, D).astype(matmul_dtype)

    packed = []
    for layer in range(num_layers):
        packed.extend(_pack_dir_weights(params["lstm"][layer], H, matmul_dtype))

    head_args = [
        jnp.transpose(params["fc_w"]).astype(matmul_dtype),      # (2H, E)
        params["fc_b"].reshape(1, E).astype(jnp.float32),
        params["ln_gamma"].reshape(1, E).astype(jnp.float32),
        params["ln_beta"].reshape(1, E).astype(jnp.float32),
    ]

    inputs = [x_flat, *packed, *head_args]
    in_specs = [pl.BlockSpec(a.shape, lambda i: (0, 0)) for a in inputs]

    kernel = functools.partial(_qst_fused_kernel, num_layers, T, B, H)
    out = pl.pallas_call(
        kernel,
        out_shape=jax.ShapeDtypeStruct((B, E), jnp.float32),
        grid_spec=pltpu.PrefetchScalarGridSpec(
            num_scalar_prefetch=0,
            grid=(1,),                    # single invocation; time loop is in-kernel
            in_specs=in_specs,
            out_specs=pl.BlockSpec((B, E), lambda i: (0, 0)),
            scratch_shapes=[
                pltpu.VMEM((T * B, 4 * H), jnp.float32),   # hoisted fwd gate projections
                pltpu.VMEM((T * B, 4 * H), jnp.float32),   # hoisted bwd gate projections
                pltpu.VMEM((T * B, H), matmul_dtype),      # fwd outputs of layer l
                pltpu.VMEM((T * B, H), matmul_dtype),      # bwd outputs of layer l
            ],
        ),
        compiler_params=pltpu.CompilerParams(
            dimension_semantics=("arbitrary",)),
    )(*inputs)
    return out


# --------------------------------------------------------------------------
# Pure-JAX reference (same math, lax.scan LSTM) for validation
# --------------------------------------------------------------------------
def _ref_lstm_direction(x_tbd, w_ih, w_hh, b_ih, b_hh):
    T, B, _ = x_tbd.shape
    H = w_hh.shape[1]

    def step(carry, x_t):
        h, c = carry
        gates = x_t @ w_ih.T + h @ w_hh.T + b_ih + b_hh
        i, f, g, o = jnp.split(gates, 4, axis=-1)
        i, f, o = jax.nn.sigmoid(i), jax.nn.sigmoid(f), jax.nn.sigmoid(o)
        g = jnp.tanh(g)
        c = f * c + i * g
        h = o * jnp.tanh(c)
        return (h, c), h

    init = (jnp.zeros((B, H), jnp.float32), jnp.zeros((B, H), jnp.float32))
    _, outs = jax.lax.scan(step, init, x_tbd)
    return outs


def reference_forward(question, params, num_layers):
    emb = jnp.take(params["embedding"], question, axis=0)
    x = jnp.transpose(emb, (1, 0, 2))
    h_f = h_b = None
    for layer in range(num_layers):
        p = params["lstm"][layer]
        out_f = _ref_lstm_direction(x, p["w_ih_f"], p["w_hh_f"], p["b_ih_f"], p["b_hh_f"])
        out_b_rev = _ref_lstm_direction(x[::-1], p["w_ih_b"], p["w_hh_b"],
                                        p["b_ih_b"], p["b_hh_b"])
        h_f, h_b = out_f[-1], out_b_rev[-1]
        x = jnp.concatenate([out_f, out_b_rev[::-1]], axis=-1)
    hidden_cat = jnp.concatenate([h_f, h_b], axis=-1)
    y = jnp.tanh(hidden_cat @ params["fc_w"].T + params["fc_b"])
    mean = jnp.mean(y, axis=-1, keepdims=True)
    var = jnp.mean((y - mean) ** 2, axis=-1, keepdims=True)
    yn = (y - mean) / jnp.sqrt(var + 1e-5)
    return yn * params["ln_gamma"] + params["ln_beta"]


# --------------------------------------------------------------------------
# Deterministic parameter construction (synthetic, no checkpoint files)
# --------------------------------------------------------------------------
def make_params(key, vocab_size, word_embed_size, hidden_size, embed_size, num_layers):
    keys = jax.random.split(key, 4 + num_layers * 8)
    k = iter(keys)

    # nn.Embedding.from_pretrained(build_embedding_matrix(...)) — synthetic stand-in
    # for GloVe; <pad>/<unk> rows zeroed.
    emb = 0.1 * jax.random.normal(next(k), (vocab_size, word_embed_size), jnp.float32)
    emb = emb.at[0].set(0.0).at[1].set(0.0)

    lstm_params = []
    for layer in range(num_layers):
        din = word_embed_size if layer == 0 else 2 * hidden_size
        scale = 1.0 / np.sqrt(hidden_size)

        def u(kk, shape):
            return jax.random.uniform(kk, shape, jnp.float32, -scale, scale)

        lstm_params.append({
            "w_ih_f": u(next(k), (4 * hidden_size, din)),
            "w_hh_f": u(next(k), (4 * hidden_size, hidden_size)),
            "b_ih_f": u(next(k), (4 * hidden_size,)),
            "b_hh_f": u(next(k), (4 * hidden_size,)),
            "w_ih_b": u(next(k), (4 * hidden_size, din)),
            "w_hh_b": u(next(k), (4 * hidden_size, hidden_size)),
            "b_ih_b": u(next(k), (4 * hidden_size,)),
            "b_hh_b": u(next(k), (4 * hidden_size,)),
        })

    fc_scale = 1.0 / np.sqrt(2 * hidden_size)
    fc_w = jax.random.uniform(next(k), (embed_size, 2 * hidden_size), jnp.float32,
                              -fc_scale, fc_scale)
    fc_b = jax.random.uniform(next(k), (embed_size,), jnp.float32, -fc_scale, fc_scale)

    return {
        "embedding": emb,
        "lstm": lstm_params,
        "fc_w": fc_w,
        "fc_b": fc_b,
        "ln_gamma": jnp.ones((embed_size,), jnp.float32),   # PyTorch LayerNorm default
        "ln_beta": jnp.zeros((embed_size,), jnp.float32),
    }


# --------------------------------------------------------------------------
if __name__ == "__main__":
    B, T = 2, 8
    vocab_size = 50
    word_embed_size = 32      # GloVe-dim surrogate (small)
    hidden_size = 32
    embed_size = 32
    num_layers = 2

    key = jax.random.PRNGKey(0)
    kp, kq = jax.random.split(key)
    params = make_params(kp, vocab_size, word_embed_size, hidden_size,
                         embed_size, num_layers)
    question = jax.random.randint(kq, (B, T), 0, vocab_size, dtype=jnp.int32)

    # f32 matmuls for the exact-correctness check; pass matmul_dtype=jnp.bfloat16
    # on v6e/v7x for MXU-native throughput (accumulation stays f32).
    out = qst_encoder_forward(question, params, num_layers)
    out = jax.block_until_ready(out)

    ref = jax.block_until_ready(reference_forward(question, params, num_layers))
    assert out.shape == (B, embed_size), out.shape
    np.testing.assert_allclose(np.asarray(out), np.asarray(ref), atol=1e-4, rtol=1e-4)

    print("KERNEL_OK")
</pallas_src>

<mosaic_0001>
module attributes {stable_mosaic.version = 11 : i64} {
  func.func @_qst_fused_kernel(%arg0: i32, %arg1: memref<16x32xf32, #tpu.memory_space<vmem>>, %arg2: memref<32x128xf32, #tpu.memory_space<vmem>>, %arg3: memref<32x128xf32, #tpu.memory_space<vmem>>, %arg4: memref<32x128xf32, #tpu.memory_space<vmem>>, %arg5: memref<32x128xf32, #tpu.memory_space<vmem>>, %arg6: memref<1x128xf32, #tpu.memory_space<vmem>>, %arg7: memref<1x128xf32, #tpu.memory_space<vmem>>, %arg8: memref<64x128xf32, #tpu.memory_space<vmem>>, %arg9: memref<64x128xf32, #tpu.memory_space<vmem>>, %arg10: memref<32x128xf32, #tpu.memory_space<vmem>>, %arg11: memref<32x128xf32, #tpu.memory_space<vmem>>, %arg12: memref<1x128xf32, #tpu.memory_space<vmem>>, %arg13: memref<1x128xf32, #tpu.memory_space<vmem>>, %arg14: memref<64x32xf32, #tpu.memory_space<vmem>>, %arg15: memref<1x32xf32, #tpu.memory_space<vmem>>, %arg16: memref<1x32xf32, #tpu.memory_space<vmem>>, %arg17: memref<1x32xf32, #tpu.memory_space<vmem>>, %arg18: memref<2x32xf32, #tpu.memory_space<vmem>>, %arg19: memref<16x128xf32, #tpu.memory_space<vmem>>, %arg20: memref<16x128xf32, #tpu.memory_space<vmem>>, %arg21: memref<16x32xf32, #tpu.memory_space<vmem>>, %arg22: memref<16x32xf32, #tpu.memory_space<vmem>>) attributes {dimension_semantics = [#tpu.dimension_semantics<arbitrary>], iteration_bounds = array<i64: 1>, scalar_prefetch = 0 : i64, scratch_operands = 4 : i64, tpu.core_type = #tpu.core_type<tc>, window_params = [{pipeline_mode = #tpu.pipeline_mode<synchronous>, transform_indices = @transform_0, window_bounds = array<i64: 16, 32>}, {pipeline_mode = #tpu.pipeline_mode<synchronous>, transform_indices = @transform_1, window_bounds = array<i64: 32, 128>}, {pipeline_mode = #tpu.pipeline_mode<synchronous>, transform_indices = @transform_2, window_bounds = array<i64: 32, 128>}, {pipeline_mode = #tpu.pipeline_mode<synchronous>, transform_indices = @transform_3, window_bounds = array<i64: 32, 128>}, {pipeline_mode = #tpu.pipeline_mode<synchronous>, transform_indices = @transform_4, window_bounds = array<i64: 32, 128>}, {pipeline_mode = #tpu.pipeline_mode<synchronous>, transform_indices = @transform_5, window_bounds = array<i64: 1, 128>}, {pipeline_mode = #tpu.pipeline_mode<synchronous>, transform_indices = @transform_6, window_bounds = array<i64: 1, 128>}, {pipeline_mode = #tpu.pipeline_mode<synchronous>, transform_indices = @transform_7, window_bounds = array<i64: 64, 128>}, {pipeline_mode = #tpu.pipeline_mode<synchronous>, transform_indices = @transform_8, window_bounds = array<i64: 64, 128>}, {pipeline_mode = #tpu.pipeline_mode<synchronous>, transform_indices = @transform_9, window_bounds = array<i64: 32, 128>}, {pipeline_mode = #tpu.pipeline_mode<synchronous>, transform_indices = @transform_10, window_bounds = array<i64: 32, 128>}, {pipeline_mode = #tpu.pipeline_mode<synchronous>, transform_indices = @transform_11, window_bounds = array<i64: 1, 128>}, {pipeline_mode = #tpu.pipeline_mode<synchronous>, transform_indices = @transform_12, window_bounds = array<i64: 1, 128>}, {pipeline_mode = #tpu.pipeline_mode<synchronous>, transform_indices = @transform_13, window_bounds = array<i64: 64, 32>}, {pipeline_mode = #tpu.pipeline_mode<synchronous>, transform_indices = @transform_14, window_bounds = array<i64: 1, 32>}, {pipeline_mode = #tpu.pipeline_mode<synchronous>, transform_indices = @transform_15, window_bounds = array<i64: 1, 32>}, {pipeline_mode = #tpu.pipeline_mode<synchronous>, transform_indices = @transform_16, window_bounds = array<i64: 1, 32>}, {pipeline_mode = #tpu.pipeline_mode<synchronous>, transform_indices = @transform_17, window_bounds = array<i64: 2, 32>}]} {
    %c0 = arith.constant 0 : index
    %c0_0 = arith.constant 0 : index
    %0 = vector.load %arg1[%c0, %c0_0] : memref<16x32xf32, #tpu.memory_space<vmem>>, vector<16x32xf32>
    %c0_1 = arith.constant 0 : index
    %c0_2 = arith.constant 0 : index
    %1 = vector.load %arg2[%c0_1, %c0_2] : memref<32x128xf32, #tpu.memory_space<vmem>>, vector<32x128xf32>
    %cst = arith.constant dense<0.000000e+00> : vector<16x128xf32>
    %2 = tpu.matmul %0, %1, %cst {dimension_numbers = #tpu.dot_dimension_numbers<[1], [0], [0], [1], [0, 0, 1, 1], [], []>} : vector<16x32xf32>, vector<32x128xf32>, vector<16x128xf32> -> vector<16x128xf32>
    %c0_3 = arith.constant 0 : index
    %c0_4 = arith.constant 0 : index
    %3 = vector.load %arg3[%c0_3, %c0_4] : memref<32x128xf32, #tpu.memory_space<vmem>>, vector<32x128xf32>
    %cst_5 = arith.constant dense<0.000000e+00> : vector<16x128xf32>
    %4 = tpu.matmul %0, %3, %cst_5 {dimension_numbers = #tpu.dot_dimension_numbers<[1], [0], [0], [1], [0, 0, 1, 1], [], []>} : vector<16x32xf32>, vector<32x128xf32>, vector<16x128xf32> -> vector<16x128xf32>
    %c0_6 = arith.constant 0 : index
    %c0_7 = arith.constant 0 : index
    %5 = vector.load %arg6[%c0_6, %c0_7] : memref<1x128xf32, #tpu.memory_space<vmem>>, vector<1x128xf32>
    %6 = vector.broadcast %5 : vector<1x128xf32> to vector<16x128xf32>
    %7 = arith.addf %2, %6 : vector<16x128xf32>
    %c0_8 = arith.constant 0 : index
    %c0_9 = arith.constant 0 : index
    %8 = vector.load %arg19[%c0_8, %c0_9] : memref<16x128xf32, #tpu.memory_space<vmem>>, vector<16x128xf32>
    tpu.vector_store %arg19[%c0_8, %c0_9], %7 {strides = array<i32>} : memref<16x128xf32, #tpu.memory_space<vmem>>, vector<16x128xf32>,
    %c0_10 = arith.constant 0 : index
    %c0_11 = arith.constant 0 : index
    %9 = vector.load %arg7[%c0_10, %c0_11] : memref<1x128xf32, #tpu.memory_space<vmem>>, vector<1x128xf32>
    %10 = vector.broadcast %9 : vector<1x128xf32> to vector<16x128xf32>
    %11 = arith.addf %4, %10 : vector<16x128xf32>
    %c0_12 = arith.constant 0 : index
    %c0_13 = arith.constant 0 : index
    %12 = vector.load %arg20[%c0_12, %c0_13] : memref<16x128xf32, #tpu.memory_space<vmem>>, vector<16x128xf32>
    tpu.vector_store %arg20[%c0_12, %c0_13], %11 {strides = array<i32>} : memref<16x128xf32, #tpu.memory_space<vmem>>, vector<16x128xf32>,
    %cst_14 = arith.constant 0.000000e+00 : f32
    %13 = vector.broadcast %cst_14 : f32 to vector<2x32xf32>
    %cst_15 = arith.constant 0.000000e+00 : f32
    %14 = vector.broadcast %cst_15 : f32 to vector<2x32xf32>
    %cst_16 = arith.constant 0.000000e+00 : f32
    %15 = vector.broadcast %cst_16 : f32 to vector<2x32xf32>
    %cst_17 = arith.constant 0.000000e+00 : f32
    %16 = vector.broadcast %cst_17 : f32 to vector<2x32xf32>
    %c0_18 = arith.constant 0 : index
    %c0_19 = arith.constant 0 : index
    %17 = vector.load %arg19[%c0_18, %c0_19] : memref<16x128xf32, #tpu.memory_space<vmem>>, vector<2x128xf32>
    %c0_20 = arith.constant 0 : index
    %c0_21 = arith.constant 0 : index
    %18 = vector.load %arg4[%c0_20, %c0_21] : memref<32x128xf32, #tpu.memory_space<vmem>>, vector<32x128xf32>
    %cst_22 = arith.constant dense<0.000000e+00> : vector<2x128xf32>
    %19 = tpu.matmul %13, %18, %cst_22 {dimension_numbers = #tpu.dot_dimension_numbers<[1], [0], [0], [1], [0, 0, 1, 1], [], []>} : vector<2x32xf32>, vector<32x128xf32>, vector<2x128xf32> -> vector<2x128xf32>
    %20 = arith.addf %17, %19 : vector<2x128xf32>
    %c14 = arith.constant 14 : index
    %c0_23 = arith.constant 0 : index
    %21 = vector.load %arg20[%c14, %c0_23] : memref<16x128xf32, #tpu.memory_space<vmem>>, vector<2x128xf32>
    %c0_24 = arith.constant 0 : index
    %c0_25 = arith.constant 0 : index
    %22 = vector.load %arg5[%c0_24, %c0_25] : memref<32x128xf32, #tpu.memory_space<vmem>>, vector<32x128xf32>
    %cst_26 = arith.constant dense<0.000000e+00> : vector<2x128xf32>
    %23 = tpu.matmul %15, %22, %cst_26 {dimension_numbers = #tpu.dot_dimension_numbers<[1], [0], [0], [1], [0, 0, 1, 1], [], []>} : vector<2x32xf32>, vector<32x128xf32>, vector<2x128xf32> -> vector<2x128xf32>
    %24 = arith.addf %21, %23 : vector<2x128xf32>
    %25 = vector.extract_strided_slice %20 {offsets = [0, 0], sizes = [2, 32], strides = [1, 1]} : vector<2x128xf32> to vector<2x32xf32>
    %26 = arith.negf %25 : vector<2x32xf32>
    %27 = math.exp %26 : vector<2x32xf32>
    %cst_27 = arith.constant 1.000000e+00 : f32
    %28 = vector.broadcast %cst_27 : f32 to vector<2x32xf32>
    %29 = arith.addf %28, %27 : vector<2x32xf32>
    %30 = arith.divf %28, %29 : vector<2x32xf32>
    %31 = vector.extract_strided_slice %20 {offsets = [0, 32], sizes = [2, 32], strides = [1, 1]} : vector<2x128xf32> to vector<2x32xf32>
    %32 = arith.negf %31 : vector<2x32xf32>
    %33 = math.exp %32 : vector<2x32xf32>
    %cst_28 = arith.constant 1.000000e+00 : f32
    %34 = vector.broadcast %cst_28 : f32 to vector<2x32xf32>
    %35 = arith.addf %34, %33 : vector<2x32xf32>
    %36 = arith.divf %34, %35 : vector<2x32xf32>
    %37 = vector.extract_strided_slice %20 {offsets = [0, 64], sizes = [2, 32], strides = [1, 1]} : vector<2x128xf32> to vector<2x32xf32>
    %38 = math.tanh %37 : vector<2x32xf32>
    %39 = vector.extract_strided_slice %20 {offsets = [0, 96], sizes = [2, 32], strides = [1, 1]} : vector<2x128xf32> to vector<2x32xf32>
    %40 = arith.negf %39 : vector<2x32xf32>
    %41 = math.exp %40 : vector<2x32xf32>
    %cst_29 = arith.constant 1.000000e+00 : f32
    %42 = vector.broadcast %cst_29 : f32 to vector<2x32xf32>
    %43 = arith.addf %42, %41 : vector<2x32xf32>
    %44 = arith.divf %42, %43 : vector<2x32xf32>
    %45 = arith.mulf %36, %14 : vector<2x32xf32>
    %46 = arith.mulf %30, %38 : vector<2x32xf32>
    %47 = arith.addf %45, %46 : vector<2x32xf32>
    %48 = math.tanh %47 : vector<2x32xf32>
    %49 = arith.mulf %44, %48 : vector<2x32xf32>
    %50 = vector.extract_strided_slice %24 {offsets = [0, 0], sizes = [2, 32], strides = [1, 1]} : vector<2x128xf32> to vector<2x32xf32>
    %51 = arith.negf %50 : vector<2x32xf32>
    %52 = math.exp %51 : vector<2x32xf32>
    %cst_30 = arith.constant 1.000000e+00 : f32
    %53 = vector.broadcast %cst_30 : f32 to vector<2x32xf32>
    %54 = arith.addf %53, %52 : vector<2x32xf32>
    %55 = arith.divf %53, %54 : vector<2x32xf32>
    %56 = vector.extract_strided_slice %24 {offsets = [0, 32], sizes = [2, 32], strides = [1, 1]} : vector<2x128xf32> to vector<2x32xf32>
    %57 = arith.negf %56 : vector<2x32xf32>
    %58 = math.exp %57 : vector<2x32xf32>
    %cst_31 = arith.constant 1.000000e+00 : f32
    %59 = vector.broadcast %cst_31 : f32 to vector<2x32xf32>
    %60 = arith.addf %59, %58 : vector<2x32xf32>
    %61 = arith.divf %59, %60 : vector<2x32xf32>
    %62 = vector.extract_strided_slice %24 {offsets = [0, 64], sizes = [2, 32], strides = [1, 1]} : vector<2x128xf32> to vector<2x32xf32>
    %63 = math.tanh %62 : vector<2x32xf32>
    %64 = vector.extract_strided_slice %24 {offsets = [0, 96], sizes = [2, 32], strides = [1, 1]} : vector<2x128xf32> to vector<2x32xf32>
    %65 = arith.negf %64 : vector<2x32xf32>
    %66 = math.exp %65 : vector<2x32xf32>
    %cst_32 = arith.constant 1.000000e+00 : f32
    %67 = vector.broadcast %cst_32 : f32 to vector<2x32xf32>
    %68 = arith.addf %67, %66 : vector<2x32xf32>
    %69 = arith.divf %67, %68 : vector<2x32xf32>
    %70 = arith.mulf %61, %16 : vector<2x32xf32>
    %71 = arith.mulf %55, %63 : vector<2x32xf32>
    %72 = arith.addf %70, %71 : vector<2x32xf32>
    %73 = math.tanh %72 : vector<2x32xf32>
    %74 = arith.mulf %69, %73 : vector<2x32xf32>
    %c0_33 = arith.constant 0 : index
    %c0_34 = arith.constant 0 : index
    %75 = vector.load %arg21[%c0_33, %c0_34] : memref<16x32xf32, #tpu.memory_space<vmem>>, vector<2x32xf32>
    tpu.vector_store %arg21[%c0_33, %c0_34], %49 {strides = array<i32>} : memref<16x32xf32, #tpu.memory_space<vmem>>, vector<2x32xf32>,
    %c14_35 = arith.constant 14 : index
    %c0_36 = arith.constant 0 : index
    %76 = vector.load %arg22[%c14_35, %c0_36] : memref<16x32xf32, #tpu.memory_space<vmem>>, vector<2x32xf32>
    tpu.vector_store %arg22[%c14_35, %c0_36], %74 {strides = array<i32>} : memref<16x32xf32, #tpu.memory_space<vmem>>, vector<2x32xf32>,
    %c2 = arith.constant 2 : index
    %c0_37 = arith.constant 0 : index
    %77 = vector.load %arg19[%c2, %c0_37] : memref<16x128xf32, #tpu.memory_space<vmem>>, vector<2x128xf32>
    %c0_38 = arith.constant 0 : index
    %c0_39 = arith.constant 0 : index
    %78 = vector.load %arg4[%c0_38, %c0_39] : memref<32x128xf32, #tpu.memory_space<vmem>>, vector<32x128xf32>
    %cst_40 = arith.constant dense<0.000000e+00> : vector<2x128xf32>
    %79 = tpu.matmul %49, %78, %cst_40 {dimension_numbers = #tpu.dot_dimension_numbers<[1], [0], [0], [1], [0, 0, 1, 1], [], []>} : vector<2x32xf32>, vector<32x128xf32>, vector<2x128xf32> -> vector<2x128xf32>
    %80 = arith.addf %77, %79 : vector<2x128xf32>
    %c12 = arith.constant 12 : index
    %c0_41 = arith.constant 0 : index
    %81 = vector.load %arg20[%c12, %c0_41] : memref<16x128xf32, #tpu.memory_space<vmem>>, vector<2x128xf32>
    %c0_42 = arith.constant 0 : index
    %c0_43 = arith.constant 0 : index
    %82 = vector.load %arg5[%c0_42, %c0_43] : memref<32x128xf32, #tpu.memory_space<vmem>>, vector<32x128xf32>
    %cst_44 = arith.constant dense<0.000000e+00> : vector<2x128xf32>
    %83 = tpu.matmul %74, %82, %cst_44 {dimension_numbers = #tpu.dot_dimension_numbers<[1], [0], [0], [1], [0, 0, 1, 1], [], []>} : vector<2x32xf32>, vector<32x128xf32>, vector<2x128xf32> -> vector<2x128xf32>
    %84 = arith.addf %81, %83 : vector<2x128xf32>
    %85 = vector.extract_strided_slice %80 {offsets = [0, 0], sizes = [2, 32], strides = [1, 1]} : vector<2x128xf32> to vector<2x32xf32>
    %86 = arith.negf %85 : vector<2x32xf32>
    %87 = math.exp %86 : vector<2x32xf32>
    %cst_45 = arith.constant 1.000000e+00 : f32
    %88 = vector.broadcast %cst_45 : f32 to vector<2x32xf32>
    %89 = arith.addf %88, %87 : vector<2x32xf32>
    %90 = arith.divf %88, %89 : vector<2x32xf32>
    %91 = vector.extract_strided_slice %80 {offsets = [0, 32], sizes = [2, 32], strides = [1, 1]} : vector<2x128xf32> to vector<2x32xf32>
    %92 = arith.negf %91 : vector<2x32xf32>
    %93 = math.exp %92 : vector<2x32xf32>
    %cst_46 = arith.constant 1.000000e+00 : f32
    %94 = vector.broadcast %cst_46 : f32 to vector<2x32xf32>
    %95 = arith.addf %94, %93 : vector<2x32xf32>
    %96 = arith.divf %94, %95 : vector<2x32xf32>
    %97 = vector.extract_strided_slice %80 {offsets = [0, 64], sizes = [2, 32], strides = [1, 1]} : vector<2x128xf32> to vector<2x32xf32>
    %98 = math.tanh %97 : vector<2x32xf32>
    %99 = vector.extract_strided_slice %80 {offsets = [0, 96], sizes = [2, 32], strides = [1, 1]} : vector<2x128xf32> to vector<2x32xf32>
    %100 = arith.negf %99 : vector<2x32xf32>
    %101 = math.exp %100 : vector<2x32xf32>
    %cst_47 = arith.constant 1.000000e+00 : f32
    %102 = vector.broadcast %cst_47 : f32 to vector<2x32xf32>
    %103 = arith.addf %102, %101 : vector<2x32xf32>
    %104 = arith.divf %102, %103 : vector<2x32xf32>
    %105 = arith.mulf %96, %47 : vector<2x32xf32>
    %106 = arith.mulf %90, %98 : vector<2x32xf32>
    %107 = arith.addf %105, %106 : vector<2x32xf32>
    %108 = math.tanh %107 : vector<2x32xf32>
    %109 = arith.mulf %104, %108 : vector<2x32xf32>
    %110 = vector.extract_strided_slice %84 {offsets = [0, 0], sizes = [2, 32], strides = [1, 1]} : vector<2x128xf32> to vector<2x32xf32>
    %111 = arith.negf %110 : vector<2x32xf32>
    %112 = math.exp %111 : vector<2x32xf32>
    %cst_48 = arith.constant 1.000000e+00 : f32
    %113 = vector.broadcast %cst_48 : f32 to vector<2x32xf32>
    %114 = arith.addf %113, %112 : vector<2x32xf32>
    %115 = arith.divf %113, %114 : vector<2x32xf32>
    %116 = vector.extract_strided_slice %84 {offsets = [0, 32], sizes = [2, 32], strides = [1, 1]} : vector<2x128xf32> to vector<2x32xf32>
    %117 = arith.negf %116 : vector<2x32xf32>
    %118 = math.exp %117 : vector<2x32xf32>
    %cst_49 = arith.constant 1.000000e+00 : f32
    %119 = vector.broadcast %cst_49 : f32 to vector<2x32xf32>
    %120 = arith.addf %119, %118 : vector<2x32xf32>
    %121 = arith.divf %119, %120 : vector<2x32xf32>
    %122 = vector.extract_strided_slice %84 {offsets = [0, 64], sizes = [2, 32], strides = [1, 1]} : vector<2x128xf32> to vector<2x32xf32>
    %123 = math.tanh %122 : vector<2x32xf32>
    %124 = vector.extract_strided_slice %84 {offsets = [0, 96], sizes = [2, 32], strides = [1, 1]} : vector<2x128xf32> to vector<2x32xf32>
    %125 = arith.negf %124 : vector<2x32xf32>
    %126 = math.exp %125 : vector<2x32xf32>
    %cst_50 = arith.constant 1.000000e+00 : f32
    %127 = vector.broadcast %cst_50 : f32 to vector<2x32xf32>
    %128 = arith.addf %127, %126 : vector<2x32xf32>
    %129 = arith.divf %127, %128 : vector<2x32xf32>
    %130 = arith.mulf %121, %72 : vector<2x32xf32>
    %131 = arith.mulf %115, %123 : vector<2x32xf32>
    %132 = arith.addf %130, %131 : vector<2x32xf32>
    %133 = math.tanh %132 : vector<2x32xf32>
    %134 = arith.mulf %129, %133 : vector<2x32xf32>
    %c2_51 = arith.constant 2 : index
    %c0_52 = arith.constant 0 : index
    %135 = vector.load %arg21[%c2_51, %c0_52] : memref<16x32xf32, #tpu.memory_space<vmem>>, vector<2x32xf32>
    tpu.vector_store %arg21[%c2_51, %c0_52], %109 {strides = array<i32>} : memref<16x32xf32, #tpu.memory_space<vmem>>, vector<2x32xf32>,
    %c12_53 = arith.constant 12 : index
    %c0_54 = arith.constant 0 : index
    %136 = vector.load %arg22[%c12_53, %c0_54] : memref<16x32xf32, #tpu.memory_space<vmem>>, vector<2x32xf32>
    tpu.vector_store %arg22[%c12_53, %c0_54], %134 {strides = array<i32>} : memref<16x32xf32, #tpu.memory_space<vmem>>, vector<2x32xf32>,
    %c4 = arith.constant 4 : index
    %c0_55 = arith.constant 0 : index
    %137 = vector.load %arg19[%c4, %c0_55] : memref<16x128xf32, #tpu.memory_space<vmem>>, vector<2x128xf32>
    %c0_56 = arith.constant 0 : index
    %c0_57 = arith.constant 0 : index
    %138 = vector.load %arg4[%c0_56, %c0_57] : memref<32x128xf32, #tpu.memory_space<vmem>>, vector<32x128xf32>
    %cst_58 = arith.constant dense<0.000000e+00> : vector<2x128xf32>
    %139 = tpu.matmul %109, %138, %cst_58 {dimension_numbers = #tpu.dot_dimension_numbers<[1], [0], [0], [1], [0, 0, 1, 1], [], []>} : vector<2x32xf32>, vector<32x128xf32>, vector<2x128xf32> -> vector<2x128xf32>
    %140 = arith.addf %137, %139 : vector<2x128xf32>
    %c10 = arith.constant 10 : index
    %c0_59 = arith.constant 0 : index
    %141 = vector.load %arg20[%c10, %c0_59] : memref<16x128xf32, #tpu.memory_space<vmem>>, vector<2x128xf32>
    %c0_60 = arith.constant 0 : index
    %c0_61 = arith.constant 0 : index
    %142 = vector.load %arg5[%c0_60, %c0_61] : memref<32x128xf32, #tpu.memory_space<vmem>>, vector<32x128xf32>
    %cst_62 = arith.constant dense<0.000000e+00> : vector<2x128xf32>
    %143 = tpu.matmul %134, %142, %cst_62 {dimension_numbers = #tpu.dot_dimension_numbers<[1], [0], [0], [1], [0, 0, 1, 1], [], []>} : vector<2x32xf32>, vector<32x128xf32>, vector<2x128xf32> -> vector<2x128xf32>
    %144 = arith.addf %141, %143 : vector<2x128xf32>
    %145 = vector.extract_strided_slice %140 {offsets = [0, 0], sizes = [2, 32], strides = [1, 1]} : vector<2x128xf32> to vector<2x32xf32>
    %146 = arith.negf %145 : vector<2x32xf32>
    %147 = math.exp %146 : vector<2x32xf32>
    %cst_63 = arith.constant 1.000000e+00 : f32
    %148 = vector.broadcast %cst_63 : f32 to vector<2x32xf32>
    %149 = arith.addf %148, %147 : vector<2x32xf32>
    %150 = arith.divf %148, %149 : vector<2x32xf32>
    %151 = vector.extract_strided_slice %140 {offsets = [0, 32], sizes = [2, 32], strides = [1, 1]} : vector<2x128xf32> to vector<2x32xf32>
    %152 = arith.negf %151 : vector<2x32xf32>
    %153 = math.exp %152 : vector<2x32xf32>
    %cst_64 = arith.constant 1.000000e+00 : f32
    %154 = vector.broadcast %cst_64 : f32 to vector<2x32xf32>
    %155 = arith.addf %154, %153 : vector<2x32xf32>
    %156 = arith.divf %154, %155 : vector<2x32xf32>
    %157 = vector.extract_strided_slice %140 {offsets = [0, 64], sizes = [2, 32], strides = [1, 1]} : vector<2x128xf32> to vector<2x32xf32>
    %158 = math.tanh %157 : vector<2x32xf32>
    %159 = vector.extract_strided_slice %140 {offsets = [0, 96], sizes = [2, 32], strides = [1, 1]} : vector<2x128xf32> to vector<2x32xf32>
    %160 = arith.negf %159 : vector<2x32xf32>
    %161 = math.exp %160 : vector<2x32xf32>
    %cst_65 = arith.constant 1.000000e+00 : f32
    %162 = vector.broadcast %cst_65 : f32 to vector<2x32xf32>
    %163 = arith.addf %162, %161 : vector<2x32xf32>
    %164 = arith.divf %162, %163 : vector<2x32xf32>
    %165 = arith.mulf %156, %107 : vector<2x32xf32>
    %166 = arith.mulf %150, %158 : vector<2x32xf32>
    %167 = arith.addf %165, %166 : vector<2x32xf32>
    %168 = math.tanh %167 : vector<2x32xf32>
    %169 = arith.mulf %164, %168 : vector<2x32xf32>
    %170 = vector.extract_strided_slice %144 {offsets = [0, 0], sizes = [2, 32], strides = [1, 1]} : vector<2x128xf32> to vector<2x32xf32>
    %171 = arith.negf %170 : vector<2x32xf32>
    %172 = math.exp %171 : vector<2x32xf32>
    %cst_66 = arith.constant 1.000000e+00 : f32
    %173 = vector.broadcast %cst_66 : f32 to vector<2x32xf32>
    %174 = arith.addf %173, %172 : vector<2x32xf32>
    %175 = arith.divf %173, %174 : vector<2x32xf32>
    %176 = vector.extract_strided_slice %144 {offsets = [0, 32], sizes = [2, 32], strides = [1, 1]} : vector<2x128xf32> to vector<2x32xf32>
    %177 = arith.negf %176 : vector<2x32xf32>
    %178 = math.exp %177 : vector<2x32xf32>
    %cst_67 = arith.constant 1.000000e+00 : f32
    %179 = vector.broadcast %cst_67 : f32 to vector<2x32xf32>
    %180 = arith.addf %179, %178 : vector<2x32xf32>
    %181 = arith.divf %179, %180 : vector<2x32xf32>
    %182 = vector.extract_strided_slice %144 {offsets = [0, 64], sizes = [2, 32], strides = [1, 1]} : vector<2x128xf32> to vector<2x32xf32>
    %183 = math.tanh %182 : vector<2x32xf32>
    %184 = vector.extract_strided_slice %144 {offsets = [0, 96], sizes = [2, 32], strides = [1, 1]} : vector<2x128xf32> to vector<2x32xf32>
    %185 = arith.negf %184 : vector<2x32xf32>
    %186 = math.exp %185 : vector<2x32xf32>
    %cst_68 = arith.constant 1.000000e+00 : f32
    %187 = vector.broadcast %cst_68 : f32 to vector<2x32xf32>
    %188 = arith.addf %187, %186 : vector<2x32xf32>
    %189 = arith.divf %187, %188 : vector<2x32xf32>
    %190 = arith.mulf %181, %132 : vector<2x32xf32>
    %191 = arith.mulf %175, %183 : vector<2x32xf32>
    %192 = arith.addf %190, %191 : vector<2x32xf32>
    %193 = math.tanh %192 : vector<2x32xf32>
    %194 = arith.mulf %189, %193 : vector<2x32xf32>
    %c4_69 = arith.constant 4 : index
    %c0_70 = arith.constant 0 : index
    %195 = vector.load %arg21[%c4_69, %c0_70] : memref<16x32xf32, #tpu.memory_space<vmem>>, vector<2x32xf32>
    tpu.vector_store %arg21[%c4_69, %c0_70], %169 {strides = array<i32>} : memref<16x32xf32, #tpu.memory_space<vmem>>, vector<2x32xf32>,
    %c10_71 = arith.constant 10 : index
    %c0_72 = arith.constant 0 : index
    %196 = vector.load %arg22[%c10_71, %c0_72] : memref<16x32xf32, #tpu.memory_space<vmem>>, vector<2x32xf32>
    tpu.vector_store %arg22[%c10_71, %c0_72], %194 {strides = array<i32>} : memref<16x32xf32, #tpu.memory_space<vmem>>, vector<2x32xf32>,
    %c6 = arith.constant 6 : index
    %c0_73 = arith.constant 0 : index
    %197 = vector.load %arg19[%c6, %c0_73] : memref<16x128xf32, #tpu.memory_space<vmem>>, vector<2x128xf32>
    %c0_74 = arith.constant 0 : index
    %c0_75 = arith.constant 0 : index
    %198 = vector.load %arg4[%c0_74, %c0_75] : memref<32x128xf32, #tpu.memory_space<vmem>>, vector<32x128xf32>
    %cst_76 = arith.constant dense<0.000000e+00> : vector<2x128xf32>
    %199 = tpu.matmul %169, %198, %cst_76 {dimension_numbers = #tpu.dot_dimension_numbers<[1], [0], [0], [1], [0, 0, 1, 1], [], []>} : vector<2x32xf32>, vector<32x128xf32>, vector<2x128xf32> -> vector<2x128xf32>
    %200 = arith.addf %197, %199 : vector<2x128xf32>
    %c8 = arith.constant 8 : index
    %c0_77 = arith.constant 0 : index
    %201 = vector.load %arg20[%c8, %c0_77] : memref<16x128xf32, #tpu.memory_space<vmem>>, vector<2x128xf32>
    %c0_78 = arith.constant 0 : index
    %c0_79 = arith.constant 0 : index
    %202 = vector.load %arg5[%c0_78, %c0_79] : memref<32x128xf32, #tpu.memory_space<vmem>>, vector<32x128xf32>
    %cst_80 = arith.constant dense<0.000000e+00> : vector<2x128xf32>
    %203 = tpu.matmul %194, %202, %cst_80 {dimension_numbers = #tpu.dot_dimension_numbers<[1], [0], [0], [1], [0, 0, 1, 1], [], []>} : vector<2x32xf32>, vector<32x128xf32>, vector<2x128xf32> -> vector<2x128xf32>
    %204 = arith.addf %201, %203 : vector<2x128xf32>
    %205 = vector.extract_strided_slice %200 {offsets = [0, 0], sizes = [2, 32], strides = [1, 1]} : vector<2x128xf32> to vector<2x32xf32>
    %206 = arith.negf %205 : vector<2x32xf32>
    %207 = math.exp %206 : vector<2x32xf32>
    %cst_81 = arith.constant 1.000000e+00 : f32
    %208 = vector.broadcast %cst_81 : f32 to vector<2x32xf32>
    %209 = arith.addf %208, %207 : vector<2x32xf32>
    %210 = arith.divf %208, %209 : vector<2x32xf32>
    %211 = vector.extract_strided_slice %200 {offsets = [0, 32], sizes = [2, 32], strides = [1, 1]} : vector<2x128xf32> to vector<2x32xf32>
    %212 = arith.negf %211 : vector<2x32xf32>
    %213 = math.exp %212 : vector<2x32xf32>
    %cst_82 = arith.constant 1.000000e+00 : f32
    %214 = vector.broadcast %cst_82 : f32 to vector<2x32xf32>
    %215 = arith.addf %214, %213 : vector<2x32xf32>
    %216 = arith.divf %214, %215 : vector<2x32xf32>
    %217 = vector.extract_strided_slice %200 {offsets = [0, 64], sizes = [2, 32], strides = [1, 1]} : vector<2x128xf32> to vector<2x32xf32>
    %218 = math.tanh %217 : vector<2x32xf32>
    %219 = vector.extract_strided_slice %200 {offsets = [0, 96], sizes = [2, 32], strides = [1, 1]} : vector<2x128xf32> to vector<2x32xf32>
    %220 = arith.negf %219 : vector<2x32xf32>
    %221 = math.exp %220 : vector<2x32xf32>
    %cst_83 = arith.constant 1.000000e+00 : f32
    %222 = vector.broadcast %cst_83 : f32 to vector<2x32xf32>
    %223 = arith.addf %222, %221 : vector<2x32xf32>
    %224 = arith.divf %222, %223 : vector<2x32xf32>
    %225 = arith.mulf %216, %167 : vector<2x32xf32>
    %226 = arith.mulf %210, %218 : vector<2x32xf32>
    %227 = arith.addf %225, %226 : vector<2x32xf32>
    %228 = math.tanh %227 : vector<2x32xf32>
    %229 = arith.mulf %224, %228 : vector<2x32xf32>
    %230 = vector.extract_strided_slice %204 {offsets = [0, 0], sizes = [2, 32], strides = [1, 1]} : vector<2x128xf32> to vector<2x32xf32>
    %231 = arith.negf %230 : vector<2x32xf32>
    %232 = math.exp %231 : vector<2x32xf32>
    %cst_84 = arith.constant 1.000000e+00 : f32
    %233 = vector.broadcast %cst_84 : f32 to vector<2x32xf32>
    %234 = arith.addf %233, %232 : vector<2x32xf32>
    %235 = arith.divf %233, %234 : vector<2x32xf32>
    %236 = vector.extract_strided_slice %204 {offsets = [0, 32], sizes = [2, 32], strides = [1, 1]} : vector<2x128xf32> to vector<2x32xf32>
    %237 = arith.negf %236 : vector<2x32xf32>
    %238 = math.exp %237 : vector<2x32xf32>
    %cst_85 = arith.constant 1.000000e+00 : f32
    %239 = vector.broadcast %cst_85 : f32 to vector<2x32xf32>
    %240 = arith.addf %239, %238 : vector<2x32xf32>
    %241 = arith.divf %239, %240 : vector<2x32xf32>
    %242 = vector.extract_strided_slice %204 {offsets = [0, 64], sizes = [2, 32], strides = [1, 1]} : vector<2x128xf32> to vector<2x32xf32>
    %243 = math.tanh %242 : vector<2x32xf32>
    %244 = vector.extract_strided_slice %204 {offsets = [0, 96], sizes = [2, 32], strides = [1, 1]} : vector<2x128xf32> to vector<2x32xf32>
    %245 = arith.negf %244 : vector<2x32xf32>
    %246 = math.exp %245 : vector<2x32xf32>
    %cst_86 = arith.constant 1.000000e+00 : f32
    %247 = vector.broadcast %cst_86 : f32 to vector<2x32xf32>
    %248 = arith.addf %247, %246 : vector<2x32xf32>
    %249 = arith.divf %247, %248 : vector<2x32xf32>
    %250 = arith.mulf %241, %192 : vector<2x32xf32>
    %251 = arith.mulf %235, %243 : vector<2x32xf32>
    %252 = arith.addf %250, %251 : vector<2x32xf32>
    %253 = math.tanh %252 : vector<2x32xf32>
    %254 = arith.mulf %249, %253 : vector<2x32xf32>
    %c6_87 = arith.constant 6 : index
    %c0_88 = arith.constant 0 : index
    %255 = vector.load %arg21[%c6_87, %c0_88] : memref<16x32xf32, #tpu.memory_space<vmem>>, vector<2x32xf32>
    tpu.vector_store %arg21[%c6_87, %c0_88], %229 {strides = array<i32>} : memref<16x32xf32, #tpu.memory_space<vmem>>, vector<2x32xf32>,
    %c8_89 = arith.constant 8 : index
    %c0_90 = arith.constant 0 : index
    %256 = vector.load %arg22[%c8_89, %c0_90] : memref<16x32xf32, #tpu.memory_space<vmem>>, vector<2x32xf32>
    tpu.vector_store %arg22[%c8_89, %c0_90], %254 {strides = array<i32>} : memref<16x32xf32, #tpu.memory_space<vmem>>, vector<2x32xf32>,
    %c8_91 = arith.constant 8 : index
    %c0_92 = arith.constant 0 : index
    %257 = vector.load %arg19[%c8_91, %c0_92] : memref<16x128xf32, #tpu.memory_space<vmem>>, vector<2x128xf32>
    %c0_93 = arith.constant 0 : index
    %c0_94 = arith.constant 0 : index
    %258 = vector.load %arg4[%c0_93, %c0_94] : memref<32x128xf32, #tpu.memory_space<vmem>>, vector<32x128xf32>
    %cst_95 = arith.constant dense<0.000000e+00> : vector<2x128xf32>
    %259 = tpu.matmul %229, %258, %cst_95 {dimension_numbers = #tpu.dot_dimension_numbers<[1], [0], [0], [1], [0, 0, 1, 1], [], []>} : vector<2x32xf32>, vector<32x128xf32>, vector<2x128xf32> -> vector<2x128xf32>
    %260 = arith.addf %257, %259 : vector<2x128xf32>
    %c6_96 = arith.constant 6 : index
    %c0_97 = arith.constant 0 : index
    %261 = vector.load %arg20[%c6_96, %c0_97] : memref<16x128xf32, #tpu.memory_space<vmem>>, vector<2x128xf32>
    %c0_98 = arith.constant 0 : index
    %c0_99 = arith.constant 0 : index
    %262 = vector.load %arg5[%c0_98, %c0_99] : memref<32x128xf32, #tpu.memory_space<vmem>>, vector<32x128xf32>
    %cst_100 = arith.constant dense<0.000000e+00> : vector<2x128xf32>
    %263 = tpu.matmul %254, %262, %cst_100 {dimension_numbers = #tpu.dot_dimension_numbers<[1], [0], [0], [1], [0, 0, 1, 1], [], []>} : vector<2x32xf32>, vector<32x128xf32>, vector<2x128xf32> -> vector<2x128xf32>
    %264 = arith.addf %261, %263 : vector<2x128xf32>
    %265 = vector.extract_strided_slice %260 {offsets = [0, 0], sizes = [2, 32], strides = [1, 1]} : vector<2x128xf32> to vector<2x32xf32>
    %266 = arith.negf %265 : vector<2x32xf32>
    %267 = math.exp %266 : vector<2x32xf32>
    %cst_101 = arith.constant 1.000000e+00 : f32
    %268 = vector.broadcast %cst_101 : f32 to vector<2x32xf32>
    %269 = arith.addf %268, %267 : vector<2x32xf32>
    %270 = arith.divf %268, %269 : vector<2x32xf32>
    %271 = vector.extract_strided_slice %260 {offsets = [0, 32], sizes = [2, 32], strides = [1, 1]} : vector<2x128xf32> to vector<2x32xf32>
    %272 = arith.negf %271 : vector<2x32xf32>
    %273 = math.exp %272 : vector<2x32xf32>
    %cst_102 = arith.constant 1.000000e+00 : f32
    %274 = vector.broadcast %cst_102 : f32 to vector<2x32xf32>
    %275 = arith.addf %274, %273 : vector<2x32xf32>
    %276 = arith.divf %274, %275 : vector<2x32xf32>
    %277 = vector.extract_strided_slice %260 {offsets = [0, 64], sizes = [2, 32], strides = [1, 1]} : vector<2x128xf32> to vector<2x32xf32>
    %278 = math.tanh %277 : vector<2x32xf32>
    %279 = vector.extract_strided_slice %260 {offsets = [0, 96], sizes = [2, 32], strides = [1, 1]} : vector<2x128xf32> to vector<2x32xf32>
    %280 = arith.negf %279 : vector<2x32xf32>
    %281 = math.exp %280 : vector<2x32xf32>
    %cst_103 = arith.constant 1.000000e+00 : f32
    %282 = vector.broadcast %cst_103 : f32 to vector<2x32xf32>
    %283 = arith.addf %282, %281 : vector<2x32xf32>
    %284 = arith.divf %282, %283 : vector<2x32xf32>
    %285 = arith.mulf %276, %227 : vector<2x32xf32>
    %286 = arith.mulf %270, %278 : vector<2x32xf32>
    %287 = arith.addf %285, %286 : vector<2x32xf32>
    %288 = math.tanh %287 : vector<2x32xf32>
    %289 = arith.mulf %284, %288 : vector<2x32xf32>
    %290 = vector.extract_strided_slice %264 {offsets = [0, 0], sizes = [2, 32], strides = [1, 1]} : vector<2x128xf32> to vector<2x32xf32>
    %291 = arith.negf %290 : vector<2x32xf32>
    %292 = math.exp %291 : vector<2x32xf32>
    %cst_104 = arith.constant 1.000000e+00 : f32
    %293 = vector.broadcast %cst_104 : f32 to vector<2x32xf32>
    %294 = arith.addf %293, %292 : vector<2x32xf32>
    %295 = arith.divf %293, %294 : vector<2x32xf32>
    %296 = vector.extract_strided_slice %264 {offsets = [0, 32], sizes = [2, 32], strides = [1, 1]} : vector<2x128xf32> to vector<2x32xf32>
    %297 = arith.negf %296 : vector<2x32xf32>
    %298 = math.exp %297 : vector<2x32xf32>
    %cst_105 = arith.constant 1.000000e+00 : f32
    %299 = vector.broadcast %cst_105 : f32 to vector<2x32xf32>
    %300 = arith.addf %299, %298 : vector<2x32xf32>
    %301 = arith.divf %299, %300 : vector<2x32xf32>
    %302 = vector.extract_strided_slice %264 {offsets = [0, 64], sizes = [2, 32], strides = [1, 1]} : vector<2x128xf32> to vector<2x32xf32>
    %303 = math.tanh %302 : vector<2x32xf32>
    %304 = vector.extract_strided_slice %264 {offsets = [0, 96], sizes = [2, 32], strides = [1, 1]} : vector<2x128xf32> to vector<2x32xf32>
    %305 = arith.negf %304 : vector<2x32xf32>
    %306 = math.exp %305 : vector<2x32xf32>
    %cst_106 = arith.constant 1.000000e+00 : f32
    %307 = vector.broadcast %cst_106 : f32 to vector<2x32xf32>
    %308 = arith.addf %307, %306 : vector<2x32xf32>
    %309 = arith.divf %307, %308 : vector<2x32xf32>
    %310 = arith.mulf %301, %252 : vector<2x32xf32>
    %311 = arith.mulf %295, %303 : vector<2x32xf32>
    %312 = arith.addf %310, %311 : vector<2x32xf32>
    %313 = math.tanh %312 : vector<2x32xf32>
    %314 = arith.mulf %309, %313 : vector<2x32xf32>
    %c8_107 = arith.constant 8 : index
    %c0_108 = arith.constant 0 : index
    %315 = vector.load %arg21[%c8_107, %c0_108] : memref<16x32xf32, #tpu.memory_space<vmem>>, vector<2x32xf32>
    tpu.vector_store %arg21[%c8_107, %c0_108], %289 {strides = array<i32>} : memref<16x32xf32, #tpu.memory_space<vmem>>, vector<2x32xf32>,
    %c6_109 = arith.constant 6 : index
    %c0_110 = arith.constant 0 : index
    %316 = vector.load %arg22[%c6_109, %c0_110] : memref<16x32xf32, #tpu.memory_space<vmem>>, vector<2x32xf32>
    tpu.vector_store %arg22[%c6_109, %c0_110], %314 {strides = array<i32>} : memref<16x32xf32, #tpu.memory_space<vmem>>, vector<2x32xf32>,
    %c10_111 = arith.constant 10 : index
    %c0_112 = arith.constant 0 : index
    %317 = vector.load %arg19[%c10_111, %c0_112] : memref<16x128xf32, #tpu.memory_space<vmem>>, vector<2x128xf32>
    %c0_113 = arith.constant 0 : index
    %c0_114 = arith.constant 0 : index
    %318 = vector.load %arg4[%c0_113, %c0_114] : memref<32x128xf32, #tpu.memory_space<vmem>>, vector<32x128xf32>
    %cst_115 = arith.constant dense<0.000000e+00> : vector<2x128xf32>
    %319 = tpu.matmul %289, %318, %cst_115 {dimension_numbers = #tpu.dot_dimension_numbers<[1], [0], [0], [1], [0, 0, 1, 1], [], []>} : vector<2x32xf32>, vector<32x128xf32>, vector<2x128xf32> -> vector<2x128xf32>
    %320 = arith.addf %317, %319 : vector<2x128xf32>
    %c4_116 = arith.constant 4 : index
    %c0_117 = arith.constant 0 : index
    %321 = vector.load %arg20[%c4_116, %c0_117] : memref<16x128xf32, #tpu.memory_space<vmem>>, vector<2x128xf32>
    %c0_118 = arith.constant 0 : index
    %c0_119 = arith.constant 0 : index
    %322 = vector.load %arg5[%c0_118, %c0_119] : memref<32x128xf32, #tpu.memory_space<vmem>>, vector<32x128xf32>
    %cst_120 = arith.constant dense<0.000000e+00> : vector<2x128xf32>
    %323 = tpu.matmul %314, %322, %cst_120 {dimension_numbers = #tpu.dot_dimension_numbers<[1], [0], [0], [1], [0, 0, 1, 1], [], []>} : vector<2x32xf32>, vector<32x128xf32>, vector<2x128xf32> -> vector<2x128xf32>
    %324 = arith.addf %321, %323 : vector<2x128xf32>
    %325 = vector.extract_strided_slice %320 {offsets = [0, 0], sizes = [2, 32], strides = [1, 1]} : vector<2x128xf32> to vector<2x32xf32>
    %326 = arith.negf %325 : vector<2x32xf32>
    %327 = math.exp %326 : vector<2x32xf32>
    %cst_121 = arith.constant 1.000000e+00 : f32
    %328 = vector.broadcast %cst_121 : f32 to vector<2x32xf32>
    %329 = arith.addf %328, %327 : vector<2x32xf32>
    %330 = arith.divf %328, %329 : vector<2x32xf32>
    %331 = vector.extract_strided_slice %320 {offsets = [0, 32], sizes = [2, 32], strides = [1, 1]} : vector<2x128xf32> to vector<2x32xf32>
    %332 = arith.negf %331 : vector<2x32xf32>
    %333 = math.exp %332 : vector<2x32xf32>
    %cst_122 = arith.constant 1.000000e+00 : f32
    %334 = vector.broadcast %cst_122 : f32 to vector<2x32xf32>
    %335 = arith.addf %334, %333 : vector<2x32xf32>
    %336 = arith.divf %334, %335 : vector<2x32xf32>
    %337 = vector.extract_strided_slice %320 {offsets = [0, 64], sizes = [2, 32], strides = [1, 1]} : vector<2x128xf32> to vector<2x32xf32>
    %338 = math.tanh %337 : vector<2x32xf32>
    %339 = vector.extract_strided_slice %320 {offsets = [0, 96], sizes = [2, 32], strides = [1, 1]} : vector<2x128xf32> to vector<2x32xf32>
    %340 = arith.negf %339 : vector<2x32xf32>
    %341 = math.exp %340 : vector<2x32xf32>
    %cst_123 = arith.constant 1.000000e+00 : f32
    %342 = vector.broadcast %cst_123 : f32 to vector<2x32xf32>
    %343 = arith.addf %342, %341 : vector<2x32xf32>
    %344 = arith.divf %342, %343 : vector<2x32xf32>
    %345 = arith.mulf %336, %287 : vector<2x32xf32>
    %346 = arith.mulf %330, %338 : vector<2x32xf32>
    %347 = arith.addf %345, %346 : vector<2x32xf32>
    %348 = math.tanh %347 : vector<2x32xf32>
    %349 = arith.mulf %344, %348 : vector<2x32xf32>
    %350 = vector.extract_strided_slice %324 {offsets = [0, 0], sizes = [2, 32], strides = [1, 1]} : vector<2x128xf32> to vector<2x32xf32>
    %351 = arith.negf %350 : vector<2x32xf32>
    %352 = math.exp %351 : vector<2x32xf32>
    %cst_124 = arith.constant 1.000000e+00 : f32
    %353 = vector.broadcast %cst_124 : f32 to vector<2x32xf32>
    %354 = arith.addf %353, %352 : vector<2x32xf32>
    %355 = arith.divf %353, %354 : vector<2x32xf32>
    %356 = vector.extract_strided_slice %324 {offsets = [0, 32], sizes = [2, 32], strides = [1, 1]} : vector<2x128xf32> to vector<2x32xf32>
    %357 = arith.negf %356 : vector<2x32xf32>
    %358 = math.exp %357 : vector<2x32xf32>
    %cst_125 = arith.constant 1.000000e+00 : f32
    %359 = vector.broadcast %cst_125 : f32 to vector<2x32xf32>
    %360 = arith.addf %359, %358 : vector<2x32xf32>
    %361 = arith.divf %359, %360 : vector<2x32xf32>
    %362 = vector.extract_strided_slice %324 {offsets = [0, 64], sizes = [2, 32], strides = [1, 1]} : vector<2x128xf32> to vector<2x32xf32>
    %363 = math.tanh %362 : vector<2x32xf32>
    %364 = vector.extract_strided_slice %324 {offsets = [0, 96], sizes = [2, 32], strides = [1, 1]} : vector<2x128xf32> to vector<2x32xf32>
    %365 = arith.negf %364 : vector<2x32xf32>
    %366 = math.exp %365 : vector<2x32xf32>
    %cst_126 = arith.constant 1.000000e+00 : f32
    %367 = vector.broadcast %cst_126 : f32 to vector<2x32xf32>
    %368 = arith.addf %367, %366 : vector<2x32xf32>
    %369 = arith.divf %367, %368 : vector<2x32xf32>
    %370 = arith.mulf %361, %312 : vector<2x32xf32>
    %371 = arith.mulf %355, %363 : vector<2x32xf32>
    %372 = arith.addf %370, %371 : vector<2x32xf32>
    %373 = math.tanh %372 : vector<2x32xf32>
    %374 = arith.mulf %369, %373 : vector<2x32xf32>
    %c10_127 = arith.constant 10 : index
    %c0_128 = arith.constant 0 : index
    %375 = vector.load %arg21[%c10_127, %c0_128] : memref<16x32xf32, #tpu.memory_space<vmem>>, vector<2x32xf32>
    tpu.vector_store %arg21[%c10_127, %c0_128], %349 {strides = array<i32>} : memref<16x32xf32, #tpu.memory_space<vmem>>, vector<2x32xf32>,
    %c4_129 = arith.constant 4 : index
    %c0_130 = arith.constant 0 : index
    %376 = vector.load %arg22[%c4_129, %c0_130] : memref<16x32xf32, #tpu.memory_space<vmem>>, vector<2x32xf32>
    tpu.vector_store %arg22[%c4_129, %c0_130], %374 {strides = array<i32>} : memref<16x32xf32, #tpu.memory_space<vmem>>, vector<2x32xf32>,
    %c12_131 = arith.constant 12 : index
    %c0_132 = arith.constant 0 : index
    %377 = vector.load %arg19[%c12_131, %c0_132] : memref<16x128xf32, #tpu.memory_space<vmem>>, vector<2x128xf32>
    %c0_133 = arith.constant 0 : index
    %c0_134 = arith.constant 0 : index
    %378 = vector.load %arg4[%c0_133, %c0_134] : memref<32x128xf32, #tpu.memory_space<vmem>>, vector<32x128xf32>
    %cst_135 = arith.constant dense<0.000000e+00> : vector<2x128xf32>
    %379 = tpu.matmul %349, %378, %cst_135 {dimension_numbers = #tpu.dot_dimension_numbers<[1], [0], [0], [1], [0, 0, 1, 1], [], []>} : vector<2x32xf32>, vector<32x128xf32>, vector<2x128xf32> -> vector<2x128xf32>
    %380 = arith.addf %377, %379 : vector<2x128xf32>
    %c2_136 = arith.constant 2 : index
    %c0_137 = arith.constant 0 : index
    %381 = vector.load %arg20[%c2_136, %c0_137] : memref<16x128xf32, #tpu.memory_space<vmem>>, vector<2x128xf32>
    %c0_138 = arith.constant 0 : index
    %c0_139 = arith.constant 0 : index
    %382 = vector.load %arg5[%c0_138, %c0_139] : memref<32x128xf32, #tpu.memory_space<vmem>>, vector<32x128xf32>
    %cst_140 = arith.constant dense<0.000000e+00> : vector<2x128xf32>
    %383 = tpu.matmul %374, %382, %cst_140 {dimension_numbers = #tpu.dot_dimension_numbers<[1], [0], [0], [1], [0, 0, 1, 1], [], []>} : vector<2x32xf32>, vector<32x128xf32>, vector<2x128xf32> -> vector<2x128xf32>
    %384 = arith.addf %381, %383 : vector<2x128xf32>
    %385 = vector.extract_strided_slice %380 {offsets = [0, 0], sizes = [2, 32], strides = [1, 1]} : vector<2x128xf32> to vector<2x32xf32>
    %386 = arith.negf %385 : vector<2x32xf32>
    %387 = math.exp %386 : vector<2x32xf32>
    %cst_141 = arith.constant 1.000000e+00 : f32
    %388 = vector.broadcast %cst_141 : f32 to vector<2x32xf32>
    %389 = arith.addf %388, %387 : vector<2x32xf32>
    %390 = arith.divf %388, %389 : vector<2x32xf32>
    %391 = vector.extract_strided_slice %380 {offsets = [0, 32], sizes = [2, 32], strides = [1, 1]} : vector<2x128xf32> to vector<2x32xf32>
    %392 = arith.negf %391 : vector<2x32xf32>
    %393 = math.exp %392 : vector<2x32xf32>
    %cst_142 = arith.constant 1.000000e+00 : f32
    %394 = vector.broadcast %cst_142 : f32 to vector<2x32xf32>
    %395 = arith.addf %394, %393 : vector<2x32xf32>
    %396 = arith.divf %394, %395 : vector<2x32xf32>
    %397 = vector.extract_strided_slice %380 {offsets = [0, 64], sizes = [2, 32], strides = [1, 1]} : vector<2x128xf32> to vector<2x32xf32>
    %398 = math.tanh %397 : vector<2x32xf32>
    %399 = vector.extract_strided_slice %380 {offsets = [0, 96], sizes = [2, 32], strides = [1, 1]} : vector<2x128xf32> to vector<2x32xf32>
    %400 = arith.negf %399 : vector<2x32xf32>
    %401 = math.exp %400 : vector<2x32xf32>
    %cst_143 = arith.constant 1.000000e+00 : f32
    %402 = vector.broadcast %cst_143 : f32 to vector<2x32xf32>
    %403 = arith.addf %402, %401 : vector<2x32xf32>
    %404 = arith.divf %402, %403 : vector<2x32xf32>
    %405 = arith.mulf %396, %347 : vector<2x32xf32>
    %406 = arith.mulf %390, %398 : vector<2x32xf32>
    %407 = arith.addf %405, %406 : vector<2x32xf32>
    %408 = math.tanh %407 : vector<2x32xf32>
    %409 = arith.mulf %404, %408 : vector<2x32xf32>
    %410 = vector.extract_strided_slice %384 {offsets = [0, 0], sizes = [2, 32], strides = [1, 1]} : vector<2x128xf32> to vector<2x32xf32>
    %411 = arith.negf %410 : vector<2x32xf32>
    %412 = math.exp %411 : vector<2x32xf32>
    %cst_144 = arith.constant 1.000000e+00 : f32
    %413 = vector.broadcast %cst_144 : f32 to vector<2x32xf32>
    %414 = arith.addf %413, %412 : vector<2x32xf32>
    %415 = arith.divf %413, %414 : vector<2x32xf32>
    %416 = vector.extract_strided_slice %384 {offsets = [0, 32], sizes = [2, 32], strides = [1, 1]} : vector<2x128xf32> to vector<2x32xf32>
    %417 = arith.negf %416 : vector<2x32xf32>
    %418 = math.exp %417 : vector<2x32xf32>
    %cst_145 = arith.constant 1.000000e+00 : f32
    %419 = vector.broadcast %cst_145 : f32 to vector<2x32xf32>
    %420 = arith.addf %419, %418 : vector<2x32xf32>
    %421 = arith.divf %419, %420 : vector<2x32xf32>
    %422 = vector.extract_strided_slice %384 {offsets = [0, 64], sizes = [2, 32], strides = [1, 1]} : vector<2x128xf32> to vector<2x32xf32>
    %423 = math.tanh %422 : vector<2x32xf32>
    %424 = vector.extract_strided_slice %384 {offsets = [0, 96], sizes = [2, 32], strides = [1, 1]} : vector<2x128xf32> to vector<2x32xf32>
    %425 = arith.negf %424 : vector<2x32xf32>
    %426 = math.exp %425 : vector<2x32xf32>
    %cst_146 = arith.constant 1.000000e+00 : f32
    %427 = vector.broadcast %cst_146 : f32 to vector<2x32xf32>
    %428 = arith.addf %427, %426 : vector<2x32xf32>
    %429 = arith.divf %427, %428 : vector<2x32xf32>
    %430 = arith.mulf %421, %372 : vector<2x32xf32>
    %431 = arith.mulf %415, %423 : vector<2x32xf32>
    %432 = arith.addf %430, %431 : vector<2x32xf32>
    %433 = math.tanh %432 : vector<2x32xf32>
    %434 = arith.mulf %429, %433 : vector<2x32xf32>
    %c12_147 = arith.constant 12 : index
    %c0_148 = arith.constant 0 : index
    %435 = vector.load %arg21[%c12_147, %c0_148] : memref<16x32xf32, #tpu.memory_space<vmem>>, vector<2x32xf32>
    tpu.vector_store %arg21[%c12_147, %c0_148], %409 {strides = array<i32>} : memref<16x32xf32, #tpu.memory_space<vmem>>, vector<2x32xf32>,
    %c2_149 = arith.constant 2 : index
    %c0_150 = arith.constant 0 : index
    %436 = vector.load %arg22[%c2_149, %c0_150] : memref<16x32xf32, #tpu.memory_space<vmem>>, vector<2x32xf32>
    tpu.vector_store %arg22[%c2_149, %c0_150], %434 {strides = array<i32>} : memref<16x32xf32, #tpu.memory_space<vmem>>, vector<2x32xf32>,
    %c14_151 = arith.constant 14 : index
    %c0_152 = arith.constant 0 : index
    %437 = vector.load %arg19[%c14_151, %c0_152] : memref<16x128xf32, #tpu.memory_space<vmem>>, vector<2x128xf32>
    %c0_153 = arith.constant 0 : index
    %c0_154 = arith.constant 0 : index
    %438 = vector.load %arg4[%c0_153, %c0_154] : memref<32x128xf32, #tpu.memory_space<vmem>>, vector<32x128xf32>
    %cst_155 = arith.constant dense<0.000000e+00> : vector<2x128xf32>
    %439 = tpu.matmul %409, %438, %cst_155 {dimension_numbers = #tpu.dot_dimension_numbers<[1], [0], [0], [1], [0, 0, 1, 1], [], []>} : vector<2x32xf32>, vector<32x128xf32>, vector<2x128xf32> -> vector<2x128xf32>
    %440 = arith.addf %437, %439 : vector<2x128xf32>
    %c0_156 = arith.constant 0 : index
    %c0_157 = arith.constant 0 : index
    %441 = vector.load %arg20[%c0_156, %c0_157] : memref<16x128xf32, #tpu.memory_space<vmem>>, vector<2x128xf32>
    %c0_158 = arith.constant 0 : index
    %c0_159 = arith.constant 0 : index
    %442 = vector.load %arg5[%c0_158, %c0_159] : memref<32x128xf32, #tpu.memory_space<vmem>>, vector<32x128xf32>
    %cst_160 = arith.constant dense<0.000000e+00> : vector<2x128xf32>
    %443 = tpu.matmul %434, %442, %cst_160 {dimension_numbers = #tpu.dot_dimension_numbers<[1], [0], [0], [1], [0, 0, 1, 1], [], []>} : vector<2x32xf32>, vector<32x128xf32>, vector<2x128xf32> -> vector<2x128xf32>
    %444 = arith.addf %441, %443 : vector<2x128xf32>
    %445 = vector.extract_strided_slice %440 {offsets = [0, 0], sizes = [2, 32], strides = [1, 1]} : vector<2x128xf32> to vector<2x32xf32>
    %446 = arith.negf %445 : vector<2x32xf32>
    %447 = math.exp %446 : vector<2x32xf32>
    %cst_161 = arith.constant 1.000000e+00 : f32
    %448 = vector.broadcast %cst_161 : f32 to vector<2x32xf32>
    %449 = arith.addf %448, %447 : vector<2x32xf32>
    %450 = arith.divf %448, %449 : vector<2x32xf32>
    %451 = vector.extract_strided_slice %440 {offsets = [0, 32], sizes = [2, 32], strides = [1, 1]} : vector<2x128xf32> to vector<2x32xf32>
    %452 = arith.negf %451 : vector<2x32xf32>
    %453 = math.exp %452 : vector<2x32xf32>
    %cst_162 = arith.constant 1.000000e+00 : f32
    %454 = vector.broadcast %cst_162 : f32 to vector<2x32xf32>
    %455 = arith.addf %454, %453 : vector<2x32xf32>
    %456 = arith.divf %454, %455 : vector<2x32xf32>
    %457 = vector.extract_strided_slice %440 {offsets = [0, 64], sizes = [2, 32], strides = [1, 1]} : vector<2x128xf32> to vector<2x32xf32>
    %458 = math.tanh %457 : vector<2x32xf32>
    %459 = vector.extract_strided_slice %440 {offsets = [0, 96], sizes = [2, 32], strides = [1, 1]} : vector<2x128xf32> to vector<2x32xf32>
    %460 = arith.negf %459 : vector<2x32xf32>
    %461 = math.exp %460 : vector<2x32xf32>
    %cst_163 = arith.constant 1.000000e+00 : f32
    %462 = vector.broadcast %cst_163 : f32 to vector<2x32xf32>
    %463 = arith.addf %462, %461 : vector<2x32xf32>
    %464 = arith.divf %462, %463 : vector<2x32xf32>
    %465 = arith.mulf %456, %407 : vector<2x32xf32>
    %466 = arith.mulf %450, %458 : vector<2x32xf32>
    %467 = arith.addf %465, %466 : vector<2x32xf32>
    %468 = math.tanh %467 : vector<2x32xf32>
    %469 = arith.mulf %464, %468 : vector<2x32xf32>
    %470 = vector.extract_strided_slice %444 {offsets = [0, 0], sizes = [2, 32], strides = [1, 1]} : vector<2x128xf32> to vector<2x32xf32>
    %471 = arith.negf %470 : vector<2x32xf32>
    %472 = math.exp %471 : vector<2x32xf32>
    %cst_164 = arith.constant 1.000000e+00 : f32
    %473 = vector.broadcast %cst_164 : f32 to vector<2x32xf32>
    %474 = arith.addf %473, %472 : vector<2x32xf32>
    %475 = arith.divf %473, %474 : vector<2x32xf32>
    %476 = vector.extract_strided_slice %444 {offsets = [0, 32], sizes = [2, 32], strides = [1, 1]} : vector<2x128xf32> to vector<2x32xf32>
    %477 = arith.negf %476 : vector<2x32xf32>
    %478 = math.exp %477 : vector<2x32xf32>
    %cst_165 = arith.constant 1.000000e+00 : f32
    %479 = vector.broadcast %cst_165 : f32 to vector<2x32xf32>
    %480 = arith.addf %479, %478 : vector<2x32xf32>
    %481 = arith.divf %479, %480 : vector<2x32xf32>
    %482 = vector.extract_strided_slice %444 {offsets = [0, 64], sizes = [2, 32], strides = [1, 1]} : vector<2x128xf32> to vector<2x32xf32>
    %483 = math.tanh %482 : vector<2x32xf32>
    %484 = vector.extract_strided_slice %444 {offsets = [0, 96], sizes = [2, 32], strides = [1, 1]} : vector<2x128xf32> to vector<2x32xf32>
    %485 = arith.negf %484 : vector<2x32xf32>
    %486 = math.exp %485 : vector<2x32xf32>
    %cst_166 = arith.constant 1.000000e+00 : f32
    %487 = vector.broadcast %cst_166 : f32 to vector<2x32xf32>
    %488 = arith.addf %487, %486 : vector<2x32xf32>
    %489 = arith.divf %487, %488 : vector<2x32xf32>
    %490 = arith.mulf %481, %432 : vector<2x32xf32>
    %491 = arith.mulf %475, %483 : vector<2x32xf32>
    %492 = arith.addf %490, %491 : vector<2x32xf32>
    %493 = math.tanh %492 : vector<2x32xf32>
    %494 = arith.mulf %489, %493 : vector<2x32xf32>
    %c14_167 = arith.constant 14 : index
    %c0_168 = arith.constant 0 : index
    %495 = vector.load %arg21[%c14_167, %c0_168] : memref<16x32xf32, #tpu.memory_space<vmem>>, vector<2x32xf32>
    tpu.vector_store %arg21[%c14_167, %c0_168], %469 {strides = array<i32>} : memref<16x32xf32, #tpu.memory_space<vmem>>, vector<2x32xf32>,
    %c0_169 = arith.constant 0 : index
    %c0_170 = arith.constant 0 : index
    %496 = vector.load %arg22[%c0_169, %c0_170] : memref<16x32xf32, #tpu.memory_space<vmem>>, vector<2x32xf32>
    tpu.vector_store %arg22[%c0_169, %c0_170], %494 {strides = array<i32>} : memref<16x32xf32, #tpu.memory_space<vmem>>, vector<2x32xf32>,
    %c0_171 = arith.constant 0 : index
    %c0_172 = arith.constant 0 : index
    %497 = vector.load %arg21[%c0_171, %c0_172] : memref<16x32xf32, #tpu.memory_space<vmem>>, vector<16x32xf32>
    %c0_173 = arith.constant 0 : index
    %c0_174 = arith.constant 0 : index
    %498 = vector.load %arg22[%c0_173, %c0_174] : memref<16x32xf32, #tpu.memory_space<vmem>>, vector<16x32xf32>
    %c0_175 = arith.constant 0 : index
    %c0_176 = arith.constant 0 : index
    %499 = vector.load %arg8[%c0_175, %c0_176] : memref<64x128xf32, #tpu.memory_space<vmem>>, vector<32x128xf32>
    %cst_177 = arith.constant dense<0.000000e+00> : vector<16x128xf32>
    %500 = tpu.matmul %497, %499, %cst_177 {dimension_numbers = #tpu.dot_dimension_numbers<[1], [0], [0], [1], [0, 0, 1, 1], [], []>} : vector<16x32xf32>, vector<32x128xf32>, vector<16x128xf32> -> vector<16x128xf32>
    %c32 = arith.constant 32 : index
    %c0_178 = arith.constant 0 : index
    %501 = vector.load %arg8[%c32, %c0_178] : memref<64x128xf32, #tpu.memory_space<vmem>>, vector<32x128xf32>
    %cst_179 = arith.constant dense<0.000000e+00> : vector<16x128xf32>
    %502 = tpu.matmul %498, %501, %cst_179 {dimension_numbers = #tpu.dot_dimension_numbers<[1], [0], [0], [1], [0, 0, 1, 1], [], []>} : vector<16x32xf32>, vector<32x128xf32>, vector<16x128xf32> -> vector<16x128xf32>
    %503 = arith.addf %500, %502 : vector<16x128xf32>
    %c0_180 = arith.constant 0 : index
    %c0_181 = arith.constant 0 : index
    %504 = vector.load %arg9[%c0_180, %c0_181] : memref<64x128xf32, #tpu.memory_space<vmem>>, vector<32x128xf32>
    %cst_182 = arith.constant dense<0.000000e+00> : vector<16x128xf32>
    %505 = tpu.matmul %497, %504, %cst_182 {dimension_numbers = #tpu.dot_dimension_numbers<[1], [0], [0], [1], [0, 0, 1, 1], [], []>} : vector<16x32xf32>, vector<32x128xf32>, vector<16x128xf32> -> vector<16x128xf32>
    %c32_183 = arith.constant 32 : index
    %c0_184 = arith.constant 0 : index
    %506 = vector.load %arg9[%c32_183, %c0_184] : memref<64x128xf32, #tpu.memory_space<vmem>>, vector<32x128xf32>
    %cst_185 = arith.constant dense<0.000000e+00> : vector<16x128xf32>
    %507 = tpu.matmul %498, %506, %cst_185 {dimension_numbers = #tpu.dot_dimension_numbers<[1], [0], [0], [1], [0, 0, 1, 1], [], []>} : vector<16x32xf32>, vector<32x128xf32>, vector<16x128xf32> -> vector<16x128xf32>
    %508 = arith.addf %505, %507 : vector<16x128xf32>
    %c0_186 = arith.constant 0 : index
    %c0_187 = arith.constant 0 : index
    %509 = vector.load %arg12[%c0_186, %c0_187] : memref<1x128xf32, #tpu.memory_space<vmem>>, vector<1x128xf32>
    %510 = vector.broadcast %509 : vector<1x128xf32> to vector<16x128xf32>
    %511 = arith.addf %503, %510 : vector<16x128xf32>
    %c0_188 = arith.constant 0 : index
    %c0_189 = arith.constant 0 : index
    %512 = vector.load %arg19[%c0_188, %c0_189] : memref<16x128xf32, #tpu.memory_space<vmem>>, vector<16x128xf32>
    tpu.vector_store %arg19[%c0_188, %c0_189], %511 {strides = array<i32>} : memref<16x128xf32, #tpu.memory_space<vmem>>, vector<16x128xf32>,
    %c0_190 = arith.constant 0 : index
    %c0_191 = arith.constant 0 : index
    %513 = vector.load %arg13[%c0_190, %c0_191] : memref<1x128xf32, #tpu.memory_space<vmem>>, vector<1x128xf32>
    %514 = vector.broadcast %513 : vector<1x128xf32> to vector<16x128xf32>
    %515 = arith.addf %508, %514 : vector<16x128xf32>
    %c0_192 = arith.constant 0 : index
    %c0_193 = arith.constant 0 : index
    %516 = vector.load %arg20[%c0_192, %c0_193] : memref<16x128xf32, #tpu.memory_space<vmem>>, vector<16x128xf32>
    tpu.vector_store %arg20[%c0_192, %c0_193], %515 {strides = array<i32>} : memref<16x128xf32, #tpu.memory_space<vmem>>, vector<16x128xf32>,
    %cst_194 = arith.constant 0.000000e+00 : f32
    %517 = vector.broadcast %cst_194 : f32 to vector<2x32xf32>
    %cst_195 = arith.constant 0.000000e+00 : f32
    %518 = vector.broadcast %cst_195 : f32 to vector<2x32xf32>
    %cst_196 = arith.constant 0.000000e+00 : f32
    %519 = vector.broadcast %cst_196 : f32 to vector<2x32xf32>
    %cst_197 = arith.constant 0.000000e+00 : f32
    %520 = vector.broadcast %cst_197 : f32 to vector<2x32xf32>
    %c0_198 = arith.constant 0 : index
    %c0_199 = arith.constant 0 : index
    %521 = vector.load %arg19[%c0_198, %c0_199] : memref<16x128xf32, #tpu.memory_space<vmem>>, vector<2x128xf32>
    %c0_200 = arith.constant 0 : index
    %c0_201 = arith.constant 0 : index
    %522 = vector.load %arg10[%c0_200, %c0_201] : memref<32x128xf32, #tpu.memory_space<vmem>>, vector<32x128xf32>
    %cst_202 = arith.constant dense<0.000000e+00> : vector<2x128xf32>
    %523 = tpu.matmul %517, %522, %cst_202 {dimension_numbers = #tpu.dot_dimension_numbers<[1], [0], [0], [1], [0, 0, 1, 1], [], []>} : vector<2x32xf32>, vector<32x128xf32>, vector<2x128xf32> -> vector<2x128xf32>
    %524 = arith.addf %521, %523 : vector<2x128xf32>
    %c14_203 = arith.constant 14 : index
    %c0_204 = arith.constant 0 : index
    %525 = vector.load %arg20[%c14_203, %c0_204] : memref<16x128xf32, #tpu.memory_space<vmem>>, vector<2x128xf32>
    %c0_205 = arith.constant 0 : index
    %c0_206 = arith.constant 0 : index
    %526 = vector.load %arg11[%c0_205, %c0_206] : memref<32x128xf32, #tpu.memory_space<vmem>>, vector<32x128xf32>
    %cst_207 = arith.constant dense<0.000000e+00> : vector<2x128xf32>
    %527 = tpu.matmul %519, %526, %cst_207 {dimension_numbers = #tpu.dot_dimension_numbers<[1], [0], [0], [1], [0, 0, 1, 1], [], []>} : vector<2x32xf32>, vector<32x128xf32>, vector<2x128xf32> -> vector<2x128xf32>
    %528 = arith.addf %525, %527 : vector<2x128xf32>
    %529 = vector.extract_strided_slice %524 {offsets = [0, 0], sizes = [2, 32], strides = [1, 1]} : vector<2x128xf32> to vector<2x32xf32>
    %530 = arith.negf %529 : vector<2x32xf32>
    %531 = math.exp %530 : vector<2x32xf32>
    %cst_208 = arith.constant 1.000000e+00 : f32
    %532 = vector.broadcast %cst_208 : f32 to vector<2x32xf32>
    %533 = arith.addf %532, %531 : vector<2x32xf32>
    %534 = arith.divf %532, %533 : vector<2x32xf32>
    %535 = vector.extract_strided_slice %524 {offsets = [0, 32], sizes = [2, 32], strides = [1, 1]} : vector<2x128xf32> to vector<2x32xf32>
    %536 = arith.negf %535 : vector<2x32xf32>
    %537 = math.exp %536 : vector<2x32xf32>
    %cst_209 = arith.constant 1.000000e+00 : f32
    %538 = vector.broadcast %cst_209 : f32 to vector<2x32xf32>
    %539 = arith.addf %538, %537 : vector<2x32xf32>
    %540 = arith.divf %538, %539 : vector<2x32xf32>
    %541 = vector.extract_strided_slice %524 {offsets = [0, 64], sizes = [2, 32], strides = [1, 1]} : vector<2x128xf32> to vector<2x32xf32>
    %542 = math.tanh %541 : vector<2x32xf32>
    %543 = vector.extract_strided_slice %524 {offsets = [0, 96], sizes = [2, 32], strides = [1, 1]} : vector<2x128xf32> to vector<2x32xf32>
    %544 = arith.negf %543 : vector<2x32xf32>
    %545 = math.exp %544 : vector<2x32xf32>
    %cst_210 = arith.constant 1.000000e+00 : f32
    %546 = vector.broadcast %cst_210 : f32 to vector<2x32xf32>
    %547 = arith.addf %546, %545 : vector<2x32xf32>
    %548 = arith.divf %546, %547 : vector<2x32xf32>
    %549 = arith.mulf %540, %518 : vector<2x32xf32>
    %550 = arith.mulf %534, %542 : vector<2x32xf32>
    %551 = arith.addf %549, %550 : vector<2x32xf32>
    %552 = math.tanh %551 : vector<2x32xf32>
    %553 = arith.mulf %548, %552 : vector<2x32xf32>
    %554 = vector.extract_strided_slice %528 {offsets = [0, 0], sizes = [2, 32], strides = [1, 1]} : vector<2x128xf32> to vector<2x32xf32>
    %555 = arith.negf %554 : vector<2x32xf32>
    %556 = math.exp %555 : vector<2x32xf32>
    %cst_211 = arith.constant 1.000000e+00 : f32
    %557 = vector.broadcast %cst_211 : f32 to vector<2x32xf32>
    %558 = arith.addf %557, %556 : vector<2x32xf32>
    %559 = arith.divf %557, %558 : vector<2x32xf32>
    %560 = vector.extract_strided_slice %528 {offsets = [0, 32], sizes = [2, 32], strides = [1, 1]} : vector<2x128xf32> to vector<2x32xf32>
    %561 = arith.negf %560 : vector<2x32xf32>
    %562 = math.exp %561 : vector<2x32xf32>
    %cst_212 = arith.constant 1.000000e+00 : f32
    %563 = vector.broadcast %cst_212 : f32 to vector<2x32xf32>
    %564 = arith.addf %563, %562 : vector<2x32xf32>
    %565 = arith.divf %563, %564 : vector<2x32xf32>
    %566 = vector.extract_strided_slice %528 {offsets = [0, 64], sizes = [2, 32], strides = [1, 1]} : vector<2x128xf32> to vector<2x32xf32>
    %567 = math.tanh %566 : vector<2x32xf32>
    %568 = vector.extract_strided_slice %528 {offsets = [0, 96], sizes = [2, 32], strides = [1, 1]} : vector<2x128xf32> to vector<2x32xf32>
    %569 = arith.negf %568 : vector<2x32xf32>
    %570 = math.exp %569 : vector<2x32xf32>
    %cst_213 = arith.constant 1.000000e+00 : f32
    %571 = vector.broadcast %cst_213 : f32 to vector<2x32xf32>
    %572 = arith.addf %571, %570 : vector<2x32xf32>
    %573 = arith.divf %571, %572 : vector<2x32xf32>
    %574 = arith.mulf %565, %520 : vector<2x32xf32>
    %575 = arith.mulf %559, %567 : vector<2x32xf32>
    %576 = arith.addf %574, %575 : vector<2x32xf32>
    %577 = math.tanh %576 : vector<2x32xf32>
    %578 = arith.mulf %573, %577 : vector<2x32xf32>
    %c2_214 = arith.constant 2 : index
    %c0_215 = arith.constant 0 : index
    %579 = vector.load %arg19[%c2_214, %c0_215] : memref<16x128xf32, #tpu.memory_space<vmem>>, vector<2x128xf32>
    %c0_216 = arith.constant 0 : index
    %c0_217 = arith.constant 0 : index
    %580 = vector.load %arg10[%c0_216, %c0_217] : memref<32x128xf32, #tpu.memory_space<vmem>>, vector<32x128xf32>
    %cst_218 = arith.constant dense<0.000000e+00> : vector<2x128xf32>
    %581 = tpu.matmul %553, %580, %cst_218 {dimension_numbers = #tpu.dot_dimension_numbers<[1], [0], [0], [1], [0, 0, 1, 1], [], []>} : vector<2x32xf32>, vector<32x128xf32>, vector<2x128xf32> -> vector<2x128xf32>
    %582 = arith.addf %579, %581 : vector<2x128xf32>
    %c12_219 = arith.constant 12 : index
    %c0_220 = arith.constant 0 : index
    %583 = vector.load %arg20[%c12_219, %c0_220] : memref<16x128xf32, #tpu.memory_space<vmem>>, vector<2x128xf32>
    %c0_221 = arith.constant 0 : index
    %c0_222 = arith.constant 0 : index
    %584 = vector.load %arg11[%c0_221, %c0_222] : memref<32x128xf32, #tpu.memory_space<vmem>>, vector<32x128xf32>
    %cst_223 = arith.constant dense<0.000000e+00> : vector<2x128xf32>
    %585 = tpu.matmul %578, %584, %cst_223 {dimension_numbers = #tpu.dot_dimension_numbers<[1], [0], [0], [1], [0, 0, 1, 1], [], []>} : vector<2x32xf32>, vector<32x128xf32>, vector<2x128xf32> -> vector<2x128xf32>
    %586 = arith.addf %583, %585 : vector<2x128xf32>
    %587 = vector.extract_strided_slice %582 {offsets = [0, 0], sizes = [2, 32], strides = [1, 1]} : vector<2x128xf32> to vector<2x32xf32>
    %588 = arith.negf %587 : vector<2x32xf32>
    %589 = math.exp %588 : vector<2x32xf32>
    %cst_224 = arith.constant 1.000000e+00 : f32
    %590 = vector.broadcast %cst_224 : f32 to vector<2x32xf32>
    %591 = arith.addf %590, %589 : vector<2x32xf32>
    %592 = arith.divf %590, %591 : vector<2x32xf32>
    %593 = vector.extract_strided_slice %582 {offsets = [0, 32], sizes = [2, 32], strides = [1, 1]} : vector<2x128xf32> to vector<2x32xf32>
    %594 = arith.negf %593 : vector<2x32xf32>
    %595 = math.exp %594 : vector<2x32xf32>
    %cst_225 = arith.constant 1.000000e+00 : f32
    %596 = vector.broadcast %cst_225 : f32 to vector<2x32xf32>
    %597 = arith.addf %596, %595 : vector<2x32xf32>
    %598 = arith.divf %596, %597 : vector<2x32xf32>
    %599 = vector.extract_strided_slice %582 {offsets = [0, 64], sizes = [2, 32], strides = [1, 1]} : vector<2x128xf32> to vector<2x32xf32>
    %600 = math.tanh %599 : vector<2x32xf32>
    %601 = vector.extract_strided_slice %582 {offsets = [0, 96], sizes = [2, 32], strides = [1, 1]} : vector<2x128xf32> to vector<2x32xf32>
    %602 = arith.negf %601 : vector<2x32xf32>
    %603 = math.exp %602 : vector<2x32xf32>
    %cst_226 = arith.constant 1.000000e+00 : f32
    %604 = vector.broadcast %cst_226 : f32 to vector<2x32xf32>
    %605 = arith.addf %604, %603 : vector<2x32xf32>
    %606 = arith.divf %604, %605 : vector<2x32xf32>
    %607 = arith.mulf %598, %551 : vector<2x32xf32>
    %608 = arith.mulf %592, %600 : vector<2x32xf32>
    %609 = arith.addf %607, %608 : vector<2x32xf32>
    %610 = math.tanh %609 : vector<2x32xf32>
    %611 = arith.mulf %606, %610 : vector<2x32xf32>
    %612 = vector.extract_strided_slice %586 {offsets = [0, 0], sizes = [2, 32], strides = [1, 1]} : vector<2x128xf32> to vector<2x32xf32>
    %613 = arith.negf %612 : vector<2x32xf32>
    %614 = math.exp %613 : vector<2x32xf32>
    %cst_227 = arith.constant 1.000000e+00 : f32
    %615 = vector.broadcast %cst_227 : f32 to vector<2x32xf32>
    %616 = arith.addf %615, %614 : vector<2x32xf32>
    %617 = arith.divf %615, %616 : vector<2x32xf32>
    %618 = vector.extract_strided_slice %586 {offsets = [0, 32], sizes = [2, 32], strides = [1, 1]} : vector<2x128xf32> to vector<2x32xf32>
    %619 = arith.negf %618 : vector<2x32xf32>
    %620 = math.exp %619 : vector<2x32xf32>
    %cst_228 = arith.constant 1.000000e+00 : f32
    %621 = vector.broadcast %cst_228 : f32 to vector<2x32xf32>
    %622 = arith.addf %621, %620 : vector<2x32xf32>
    %623 = arith.divf %621, %622 : vector<2x32xf32>
    %624 = vector.extract_strided_slice %586 {offsets = [0, 64], sizes = [2, 32], strides = [1, 1]} : vector<2x128xf32> to vector<2x32xf32>
    %625 = math.tanh %624 : vector<2x32xf32>
    %626 = vector.extract_strided_slice %586 {offsets = [0, 96], sizes = [2, 32], strides = [1, 1]} : vector<2x128xf32> to vector<2x32xf32>
    %627 = arith.negf %626 : vector<2x32xf32>
    %628 = math.exp %627 : vector<2x32xf32>
    %cst_229 = arith.constant 1.000000e+00 : f32
    %629 = vector.broadcast %cst_229 : f32 to vector<2x32xf32>
    %630 = arith.addf %629, %628 : vector<2x32xf32>
    %631 = arith.divf %629, %630 : vector<2x32xf32>
    %632 = arith.mulf %623, %576 : vector<2x32xf32>
    %633 = arith.mulf %617, %625 : vector<2x32xf32>
    %634 = arith.addf %632, %633 : vector<2x32xf32>
    %635 = math.tanh %634 : vector<2x32xf32>
    %636 = arith.mulf %631, %635 : vector<2x32xf32>
    %c4_230 = arith.constant 4 : index
    %c0_231 = arith.constant 0 : index
    %637 = vector.load %arg19[%c4_230, %c0_231] : memref<16x128xf32, #tpu.memory_space<vmem>>, vector<2x128xf32>
    %c0_232 = arith.constant 0 : index
    %c0_233 = arith.constant 0 : index
    %638 = vector.load %arg10[%c0_232, %c0_233] : memref<32x128xf32, #tpu.memory_space<vmem>>, vector<32x128xf32>
    %cst_234 = arith.constant dense<0.000000e+00> : vector<2x128xf32>
    %639 = tpu.matmul %611, %638, %cst_234 {dimension_numbers = #tpu.dot_dimension_numbers<[1], [0], [0], [1], [0, 0, 1, 1], [], []>} : vector<2x32xf32>, vector<32x128xf32>, vector<2x128xf32> -> vector<2x128xf32>
    %640 = arith.addf %637, %639 : vector<2x128xf32>
    %c10_235 = arith.constant 10 : index
    %c0_236 = arith.constant 0 : index
    %641 = vector.load %arg20[%c10_235, %c0_236] : memref<16x128xf32, #tpu.memory_space<vmem>>, vector<2x128xf32>
    %c0_237 = arith.constant 0 : index
    %c0_238 = arith.constant 0 : index
    %642 = vector.load %arg11[%c0_237, %c0_238] : memref<32x128xf32, #tpu.memory_space<vmem>>, vector<32x128xf32>
    %cst_239 = arith.constant dense<0.000000e+00> : vector<2x128xf32>
    %643 = tpu.matmul %636, %642, %cst_239 {dimension_numbers = #tpu.dot_dimension_numbers<[1], [0], [0], [1], [0, 0, 1, 1], [], []>} : vector<2x32xf32>, vector<32x128xf32>, vector<2x128xf32> -> vector<2x128xf32>
    %644 = arith.addf %641, %643 : vector<2x128xf32>
    %645 = vector.extract_strided_slice %640 {offsets = [0, 0], sizes = [2, 32], strides = [1, 1]} : vector<2x128xf32> to vector<2x32xf32>
    %646 = arith.negf %645 : vector<2x32xf32>
    %647 = math.exp %646 : vector<2x32xf32>
    %cst_240 = arith.constant 1.000000e+00 : f32
    %648 = vector.broadcast %cst_240 : f32 to vector<2x32xf32>
    %649 = arith.addf %648, %647 : vector<2x32xf32>
    %650 = arith.divf %648, %649 : vector<2x32xf32>
    %651 = vector.extract_strided_slice %640 {offsets = [0, 32], sizes = [2, 32], strides = [1, 1]} : vector<2x128xf32> to vector<2x32xf32>
    %652 = arith.negf %651 : vector<2x32xf32>
    %653 = math.exp %652 : vector<2x32xf32>
    %cst_241 = arith.constant 1.000000e+00 : f32
    %654 = vector.broadcast %cst_241 : f32 to vector<2x32xf32>
    %655 = arith.addf %654, %653 : vector<2x32xf32>
    %656 = arith.divf %654, %655 : vector<2x32xf32>
    %657 = vector.extract_strided_slice %640 {offsets = [0, 64], sizes = [2, 32], strides = [1, 1]} : vector<2x128xf32> to vector<2x32xf32>
    %658 = math.tanh %657 : vector<2x32xf32>
    %659 = vector.extract_strided_slice %640 {offsets = [0, 96], sizes = [2, 32], strides = [1, 1]} : vector<2x128xf32> to vector<2x32xf32>
    %660 = arith.negf %659 : vector<2x32xf32>
    %661 = math.exp %660 : vector<2x32xf32>
    %cst_242 = arith.constant 1.000000e+00 : f32
    %662 = vector.broadcast %cst_242 : f32 to vector<2x32xf32>
    %663 = arith.addf %662, %661 : vector<2x32xf32>
    %664 = arith.divf %662, %663 : vector<2x32xf32>
    %665 = arith.mulf %656, %609 : vector<2x32xf32>
    %666 = arith.mulf %650, %658 : vector<2x32xf32>
    %667 = arith.addf %665, %666 : vector<2x32xf32>
    %668 = math.tanh %667 : vector<2x32xf32>
    %669 = arith.mulf %664, %668 : vector<2x32xf32>
    %670 = vector.extract_strided_slice %644 {offsets = [0, 0], sizes = [2, 32], strides = [1, 1]} : vector<2x128xf32> to vector<2x32xf32>
    %671 = arith.negf %670 : vector<2x32xf32>
    %672 = math.exp %671 : vector<2x32xf32>
    %cst_243 = arith.constant 1.000000e+00 : f32
    %673 = vector.broadcast %cst_243 : f32 to vector<2x32xf32>
    %674 = arith.addf %673, %672 : vector<2x32xf32>
    %675 = arith.divf %673, %674 : vector<2x32xf32>
    %676 = vector.extract_strided_slice %644 {offsets = [0, 32], sizes = [2, 32], strides = [1, 1]} : vector<2x128xf32> to vector<2x32xf32>
    %677 = arith.negf %676 : vector<2x32xf32>
    %678 = math.exp %677 : vector<2x32xf32>
    %cst_244 = arith.constant 1.000000e+00 : f32
    %679 = vector.broadcast %cst_244 : f32 to vector<2x32xf32>
    %680 = arith.addf %679, %678 : vector<2x32xf32>
    %681 = arith.divf %679, %680 : vector<2x32xf32>
    %682 = vector.extract_strided_slice %644 {offsets = [0, 64], sizes = [2, 32], strides = [1, 1]} : vector<2x128xf32> to vector<2x32xf32>
    %683 = math.tanh %682 : vector<2x32xf32>
    %684 = vector.extract_strided_slice %644 {offsets = [0, 96], sizes = [2, 32], strides = [1, 1]} : vector<2x128xf32> to vector<2x32xf32>
    %685 = arith.negf %684 : vector<2x32xf32>
    %686 = math.exp %685 : vector<2x32xf32>
    %cst_245 = arith.constant 1.000000e+00 : f32
    %687 = vector.broadcast %cst_245 : f32 to vector<2x32xf32>
    %688 = arith.addf %687, %686 : vector<2x32xf32>
    %689 = arith.divf %687, %688 : vector<2x32xf32>
    %690 = arith.mulf %681, %634 : vector<2x32xf32>
    %691 = arith.mulf %675, %683 : vector<2x32xf32>
    %692 = arith.addf %690, %691 : vector<2x32xf32>
    %693 = math.tanh %692 : vector<2x32xf32>
    %694 = arith.mulf %689, %693 : vector<2x32xf32>
    %c6_246 = arith.constant 6 : index
    %c0_247 = arith.constant 0 : index
    %695 = vector.load %arg19[%c6_246, %c0_247] : memref<16x128xf32, #tpu.memory_space<vmem>>, vector<2x128xf32>
    %c0_248 = arith.constant 0 : index
    %c0_249 = arith.constant 0 : index
    %696 = vector.load %arg10[%c0_248, %c0_249] : memref<32x128xf32, #tpu.memory_space<vmem>>, vector<32x128xf32>
    %cst_250 = arith.constant dense<0.000000e+00> : vector<2x128xf32>
    %697 = tpu.matmul %669, %696, %cst_250 {dimension_numbers = #tpu.dot_dimension_numbers<[1], [0], [0], [1], [0, 0, 1, 1], [], []>} : vector<2x32xf32>, vector<32x128xf32>, vector<2x128xf32> -> vector<2x128xf32>
    %698 = arith.addf %695, %697 : vector<2x128xf32>
    %c8_251 = arith.constant 8 : index
    %c0_252 = arith.constant 0 : index
    %699 = vector.load %arg20[%c8_251, %c0_252] : memref<16x128xf32, #tpu.memory_space<vmem>>, vector<2x128xf32>
    %c0_253 = arith.constant 0 : index
    %c0_254 = arith.constant 0 : index
    %700 = vector.load %arg11[%c0_253, %c0_254] : memref<32x128xf32, #tpu.memory_space<vmem>>, vector<32x128xf32>
    %cst_255 = arith.constant dense<0.000000e+00> : vector<2x128xf32>
    %701 = tpu.matmul %694, %700, %cst_255 {dimension_numbers = #tpu.dot_dimension_numbers<[1], [0], [0], [1], [0, 0, 1, 1], [], []>} : vector<2x32xf32>, vector<32x128xf32>, vector<2x128xf32> -> vector<2x128xf32>
    %702 = arith.addf %699, %701 : vector<2x128xf32>
    %703 = vector.extract_strided_slice %698 {offsets = [0, 0], sizes = [2, 32], strides = [1, 1]} : vector<2x128xf32> to vector<2x32xf32>
    %704 = arith.negf %703 : vector<2x32xf32>
    %705 = math.exp %704 : vector<2x32xf32>
    %cst_256 = arith.constant 1.000000e+00 : f32
    %706 = vector.broadcast %cst_256 : f32 to vector<2x32xf32>
    %707 = arith.addf %706, %705 : vector<2x32xf32>
    %708 = arith.divf %706, %707 : vector<2x32xf32>
    %709 = vector.extract_strided_slice %698 {offsets = [0, 32], sizes = [2, 32], strides = [1, 1]} : vector<2x128xf32> to vector<2x32xf32>
    %710 = arith.negf %709 : vector<2x32xf32>
    %711 = math.exp %710 : vector<2x32xf32>
    %cst_257 = arith.constant 1.000000e+00 : f32
    %712 = vector.broadcast %cst_257 : f32 to vector<2x32xf32>
    %713 = arith.addf %712, %711 : vector<2x32xf32>
    %714 = arith.divf %712, %713 : vector<2x32xf32>
    %715 = vector.extract_strided_slice %698 {offsets = [0, 64], sizes = [2, 32], strides = [1, 1]} : vector<2x128xf32> to vector<2x32xf32>
    %716 = math.tanh %715 : vector<2x32xf32>
    %717 = vector.extract_strided_slice %698 {offsets = [0, 96], sizes = [2, 32], strides = [1, 1]} : vector<2x128xf32> to vector<2x32xf32>
    %718 = arith.negf %717 : vector<2x32xf32>
    %719 = math.exp %718 : vector<2x32xf32>
    %cst_258 = arith.constant 1.000000e+00 : f32
    %720 = vector.broadcast %cst_258 : f32 to vector<2x32xf32>
    %721 = arith.addf %720, %719 : vector<2x32xf32>
    %722 = arith.divf %720, %721 : vector<2x32xf32>
    %723 = arith.mulf %714, %667 : vector<2x32xf32>
    %724 = arith.mulf %708, %716 : vector<2x32xf32>
    %725 = arith.addf %723, %724 : vector<2x32xf32>
    %726 = math.tanh %725 : vector<2x32xf32>
    %727 = arith.mulf %722, %726 : vector<2x32xf32>
    %728 = vector.extract_strided_slice %702 {offsets = [0, 0], sizes = [2, 32], strides = [1, 1]} : vector<2x128xf32> to vector<2x32xf32>
    %729 = arith.negf %728 : vector<2x32xf32>
    %730 = math.exp %729 : vector<2x32xf32>
    %cst_259 = arith.constant 1.000000e+00 : f32
    %731 = vector.broadcast %cst_259 : f32 to vector<2x32xf32>
    %732 = arith.addf %731, %730 : vector<2x32xf32>
    %733 = arith.divf %731, %732 : vector<2x32xf32>
    %734 = vector.extract_strided_slice %702 {offsets = [0, 32], sizes = [2, 32], strides = [1, 1]} : vector<2x128xf32> to vector<2x32xf32>
    %735 = arith.negf %734 : vector<2x32xf32>
    %736 = math.exp %735 : vector<2x32xf32>
    %cst_260 = arith.constant 1.000000e+00 : f32
    %737 = vector.broadcast %cst_260 : f32 to vector<2x32xf32>
    %738 = arith.addf %737, %736 : vector<2x32xf32>
    %739 = arith.divf %737, %738 : vector<2x32xf32>
    %740 = vector.extract_strided_slice %702 {offsets = [0, 64], sizes = [2, 32], strides = [1, 1]} : vector<2x128xf32> to vector<2x32xf32>
    %741 = math.tanh %740 : vector<2x32xf32>
    %742 = vector.extract_strided_slice %702 {offsets = [0, 96], sizes = [2, 32], strides = [1, 1]} : vector<2x128xf32> to vector<2x32xf32>
    %743 = arith.negf %742 : vector<2x32xf32>
    %744 = math.exp %743 : vector<2x32xf32>
    %cst_261 = arith.constant 1.000000e+00 : f32
    %745 = vector.broadcast %cst_261 : f32 to vector<2x32xf32>
    %746 = arith.addf %745, %744 : vector<2x32xf32>
    %747 = arith.divf %745, %746 : vector<2x32xf32>
    %748 = arith.mulf %739, %692 : vector<2x32xf32>
    %749 = arith.mulf %733, %741 : vector<2x32xf32>
    %750 = arith.addf %748, %749 : vector<2x32xf32>
    %751 = math.tanh %750 : vector<2x32xf32>
    %752 = arith.mulf %747, %751 : vector<2x32xf32>
    %c8_262 = arith.constant 8 : index
    %c0_263 = arith.constant 0 : index
    %753 = vector.load %arg19[%c8_262, %c0_263] : memref<16x128xf32, #tpu.memory_space<vmem>>, vector<2x128xf32>
    %c0_264 = arith.constant 0 : index
    %c0_265 = arith.constant 0 : index
    %754 = vector.load %arg10[%c0_264, %c0_265] : memref<32x128xf32, #tpu.memory_space<vmem>>, vector<32x128xf32>
    %cst_266 = arith.constant dense<0.000000e+00> : vector<2x128xf32>
    %755 = tpu.matmul %727, %754, %cst_266 {dimension_numbers = #tpu.dot_dimension_numbers<[1], [0], [0], [1], [0, 0, 1, 1], [], []>} : vector<2x32xf32>, vector<32x128xf32>, vector<2x128xf32> -> vector<2x128xf32>
    %756 = arith.addf %753, %755 : vector<2x128xf32>
    %c6_267 = arith.constant 6 : index
    %c0_268 = arith.constant 0 : index
    %757 = vector.load %arg20[%c6_267, %c0_268] : memref<16x128xf32, #tpu.memory_space<vmem>>, vector<2x128xf32>
    %c0_269 = arith.constant 0 : index
    %c0_270 = arith.constant 0 : index
    %758 = vector.load %arg11[%c0_269, %c0_270] : memref<32x128xf32, #tpu.memory_space<vmem>>, vector<32x128xf32>
    %cst_271 = arith.constant dense<0.000000e+00> : vector<2x128xf32>
    %759 = tpu.matmul %752, %758, %cst_271 {dimension_numbers = #tpu.dot_dimension_numbers<[1], [0], [0], [1], [0, 0, 1, 1], [], []>} : vector<2x32xf32>, vector<32x128xf32>, vector<2x128xf32> -> vector<2x128xf32>
    %760 = arith.addf %757, %759 : vector<2x128xf32>
    %761 = vector.extract_strided_slice %756 {offsets = [0, 0], sizes = [2, 32], strides = [1, 1]} : vector<2x128xf32> to vector<2x32xf32>
    %762 = arith.negf %761 : vector<2x32xf32>
    %763 = math.exp %762 : vector<2x32xf32>
    %cst_272 = arith.constant 1.000000e+00 : f32
    %764 = vector.broadcast %cst_272 : f32 to vector<2x32xf32>
    %765 = arith.addf %764, %763 : vector<2x32xf32>
    %766 = arith.divf %764, %765 : vector<2x32xf32>
    %767 = vector.extract_strided_slice %756 {offsets = [0, 32], sizes = [2, 32], strides = [1, 1]} : vector<2x128xf32> to vector<2x32xf32>
    %768 = arith.negf %767 : vector<2x32xf32>
    %769 = math.exp %768 : vector<2x32xf32>
    %cst_273 = arith.constant 1.000000e+00 : f32
    %770 = vector.broadcast %cst_273 : f32 to vector<2x32xf32>
    %771 = arith.addf %770, %769 : vector<2x32xf32>
    %772 = arith.divf %770, %771 : vector<2x32xf32>
    %773 = vector.extract_strided_slice %756 {offsets = [0, 64], sizes = [2, 32], strides = [1, 1]} : vector<2x128xf32> to vector<2x32xf32>
    %774 = math.tanh %773 : vector<2x32xf32>
    %775 = vector.extract_strided_slice %756 {offsets = [0, 96], sizes = [2, 32], strides = [1, 1]} : vector<2x128xf32> to vector<2x32xf32>
    %776 = arith.negf %775 : vector<2x32xf32>
    %777 = math.exp %776 : vector<2x32xf32>
    %cst_274 = arith.constant 1.000000e+00 : f32
    %778 = vector.broadcast %cst_274 : f32 to vector<2x32xf32>
    %779 = arith.addf %778, %777 : vector<2x32xf32>
    %780 = arith.divf %778, %779 : vector<2x32xf32>
    %781 = arith.mulf %772, %725 : vector<2x32xf32>
    %782 = arith.mulf %766, %774 : vector<2x32xf32>
    %783 = arith.addf %781, %782 : vector<2x32xf32>
    %784 = math.tanh %783 : vector<2x32xf32>
    %785 = arith.mulf %780, %784 : vector<2x32xf32>
    %786 = vector.extract_strided_slice %760 {offsets = [0, 0], sizes = [2, 32], strides = [1, 1]} : vector<2x128xf32> to vector<2x32xf32>
    %787 = arith.negf %786 : vector<2x32xf32>
    %788 = math.exp %787 : vector<2x32xf32>
    %cst_275 = arith.constant 1.000000e+00 : f32
    %789 = vector.broadcast %cst_275 : f32 to vector<2x32xf32>
    %790 = arith.addf %789, %788 : vector<2x32xf32>
    %791 = arith.divf %789, %790 : vector<2x32xf32>
    %792 = vector.extract_strided_slice %760 {offsets = [0, 32], sizes = [2, 32], strides = [1, 1]} : vector<2x128xf32> to vector<2x32xf32>
    %793 = arith.negf %792 : vector<2x32xf32>
    %794 = math.exp %793 : vector<2x32xf32>
    %cst_276 = arith.constant 1.000000e+00 : f32
    %795 = vector.broadcast %cst_276 : f32 to vector<2x32xf32>
    %796 = arith.addf %795, %794 : vector<2x32xf32>
    %797 = arith.divf %795, %796 : vector<2x32xf32>
    %798 = vector.extract_strided_slice %760 {offsets = [0, 64], sizes = [2, 32], strides = [1, 1]} : vector<2x128xf32> to vector<2x32xf32>
    %799 = math.tanh %798 : vector<2x32xf32>
    %800 = vector.extract_strided_slice %760 {offsets = [0, 96], sizes = [2, 32], strides = [1, 1]} : vector<2x128xf32> to vector<2x32xf32>
    %801 = arith.negf %800 : vector<2x32xf32>
    %802 = math.exp %801 : vector<2x32xf32>
    %cst_277 = arith.constant 1.000000e+00 : f32
    %803 = vector.broadcast %cst_277 : f32 to vector<2x32xf32>
    %804 = arith.addf %803, %802 : vector<2x32xf32>
    %805 = arith.divf %803, %804 : vector<2x32xf32>
    %806 = arith.mulf %797, %750 : vector<2x32xf32>
    %807 = arith.mulf %791, %799 : vector<2x32xf32>
    %808 = arith.addf %806, %807 : vector<2x32xf32>
    %809 = math.tanh %808 : vector<2x32xf32>
    %810 = arith.mulf %805, %809 : vector<2x32xf32>
    %c10_278 = arith.constant 10 : index
    %c0_279 = arith.constant 0 : index
    %811 = vector.load %arg19[%c10_278, %c0_279] : memref<16x128xf32, #tpu.memory_space<vmem>>, vector<2x128xf32>
    %c0_280 = arith.constant 0 : index
    %c0_281 = arith.constant 0 : index
    %812 = vector.load %arg10[%c0_280, %c0_281] : memref<32x128xf32, #tpu.memory_space<vmem>>, vector<32x128xf32>
    %cst_282 = arith.constant dense<0.000000e+00> : vector<2x128xf32>
    %813 = tpu.matmul %785, %812, %cst_282 {dimension_numbers = #tpu.dot_dimension_numbers<[1], [0], [0], [1], [0, 0, 1, 1], [], []>} : vector<2x32xf32>, vector<32x128xf32>, vector<2x128xf32> -> vector<2x128xf32>
    %814 = arith.addf %811, %813 : vector<2x128xf32>
    %c4_283 = arith.constant 4 : index
    %c0_284 = arith.constant 0 : index
    %815 = vector.load %arg20[%c4_283, %c0_284] : memref<16x128xf32, #tpu.memory_space<vmem>>, vector<2x128xf32>
    %c0_285 = arith.constant 0 : index
    %c0_286 = arith.constant 0 : index
    %816 = vector.load %arg11[%c0_285, %c0_286] : memref<32x128xf32, #tpu.memory_space<vmem>>, vector<32x128xf32>
    %cst_287 = arith.constant dense<0.000000e+00> : vector<2x128xf32>
    %817 = tpu.matmul %810, %816, %cst_287 {dimension_numbers = #tpu.dot_dimension_numbers<[1], [0], [0], [1], [0, 0, 1, 1], [], []>} : vector<2x32xf32>, vector<32x128xf32>, vector<2x128xf32> -> vector<2x128xf32>
    %818 = arith.addf %815, %817 : vector<2x128xf32>
    %819 = vector.extract_strided_slice %814 {offsets = [0, 0], sizes = [2, 32], strides = [1, 1]} : vector<2x128xf32> to vector<2x32xf32>
    %820 = arith.negf %819 : vector<2x32xf32>
    %821 = math.exp %820 : vector<2x32xf32>
    %cst_288 = arith.constant 1.000000e+00 : f32
    %822 = vector.broadcast %cst_288 : f32 to vector<2x32xf32>
    %823 = arith.addf %822, %821 : vector<2x32xf32>
    %824 = arith.divf %822, %823 : vector<2x32xf32>
    %825 = vector.extract_strided_slice %814 {offsets = [0, 32], sizes = [2, 32], strides = [1, 1]} : vector<2x128xf32> to vector<2x32xf32>
    %826 = arith.negf %825 : vector<2x32xf32>
    %827 = math.exp %826 : vector<2x32xf32>
    %cst_289 = arith.constant 1.000000e+00 : f32
    %828 = vector.broadcast %cst_289 : f32 to vector<2x32xf32>
    %829 = arith.addf %828, %827 : vector<2x32xf32>
    %830 = arith.divf %828, %829 : vector<2x32xf32>
    %831 = vector.extract_strided_slice %814 {offsets = [0, 64], sizes = [2, 32], strides = [1, 1]} : vector<2x128xf32> to vector<2x32xf32>
    %832 = math.tanh %831 : vector<2x32xf32>
    %833 = vector.extract_strided_slice %814 {offsets = [0, 96], sizes = [2, 32], strides = [1, 1]} : vector<2x128xf32> to vector<2x32xf32>
    %834 = arith.negf %833 : vector<2x32xf32>
    %835 = math.exp %834 : vector<2x32xf32>
    %cst_290 = arith.constant 1.000000e+00 : f32
    %836 = vector.broadcast %cst_290 : f32 to vector<2x32xf32>
    %837 = arith.addf %836, %835 : vector<2x32xf32>
    %838 = arith.divf %836, %837 : vector<2x32xf32>
    %839 = arith.mulf %830, %783 : vector<2x32xf32>
    %840 = arith.mulf %824, %832 : vector<2x32xf32>
    %841 = arith.addf %839, %840 : vector<2x32xf32>
    %842 = math.tanh %841 : vector<2x32xf32>
    %843 = arith.mulf %838, %842 : vector<2x32xf32>
    %844 = vector.extract_strided_slice %818 {offsets = [0, 0], sizes = [2, 32], strides = [1, 1]} : vector<2x128xf32> to vector<2x32xf32>
    %845 = arith.negf %844 : vector<2x32xf32>
    %846 = math.exp %845 : vector<2x32xf32>
    %cst_291 = arith.constant 1.000000e+00 : f32
    %847 = vector.broadcast %cst_291 : f32 to vector<2x32xf32>
    %848 = arith.addf %847, %846 : vector<2x32xf32>
    %849 = arith.divf %847, %848 : vector<2x32xf32>
    %850 = vector.extract_strided_slice %818 {offsets = [0, 32], sizes = [2, 32], strides = [1, 1]} : vector<2x128xf32> to vector<2x32xf32>
    %851 = arith.negf %850 : vector<2x32xf32>
    %852 = math.exp %851 : vector<2x32xf32>
    %cst_292 = arith.constant 1.000000e+00 : f32
    %853 = vector.broadcast %cst_292 : f32 to vector<2x32xf32>
    %854 = arith.addf %853, %852 : vector<2x32xf32>
    %855 = arith.divf %853, %854 : vector<2x32xf32>
    %856 = vector.extract_strided_slice %818 {offsets = [0, 64], sizes = [2, 32], strides = [1, 1]} : vector<2x128xf32> to vector<2x32xf32>
    %857 = math.tanh %856 : vector<2x32xf32>
    %858 = vector.extract_strided_slice %818 {offsets = [0, 96], sizes = [2, 32], strides = [1, 1]} : vector<2x128xf32> to vector<2x32xf32>
    %859 = arith.negf %858 : vector<2x32xf32>
    %860 = math.exp %859 : vector<2x32xf32>
    %cst_293 = arith.constant 1.000000e+00 : f32
    %861 = vector.broadcast %cst_293 : f32 to vector<2x32xf32>
    %862 = arith.addf %861, %860 : vector<2x32xf32>
    %863 = arith.divf %861, %862 : vector<2x32xf32>
    %864 = arith.mulf %855, %808 : vector<2x32xf32>
    %865 = arith.mulf %849, %857 : vector<2x32xf32>
    %866 = arith.addf %864, %865 : vector<2x32xf32>
    %867 = math.tanh %866 : vector<2x32xf32>
    %868 = arith.mulf %863, %867 : vector<2x32xf32>
    %c12_294 = arith.constant 12 : index
    %c0_295 = arith.constant 0 : index
    %869 = vector.load %arg19[%c12_294, %c0_295] : memref<16x128xf32, #tpu.memory_space<vmem>>, vector<2x128xf32>
    %c0_296 = arith.constant 0 : index
    %c0_297 = arith.constant 0 : index
    %870 = vector.load %arg10[%c0_296, %c0_297] : memref<32x128xf32, #tpu.memory_space<vmem>>, vector<32x128xf32>
    %cst_298 = arith.constant dense<0.000000e+00> : vector<2x128xf32>
    %871 = tpu.matmul %843, %870, %cst_298 {dimension_numbers = #tpu.dot_dimension_numbers<[1], [0], [0], [1], [0, 0, 1, 1], [], []>} : vector<2x32xf32>, vector<32x128xf32>, vector<2x128xf32> -> vector<2x128xf32>
    %872 = arith.addf %869, %871 : vector<2x128xf32>
    %c2_299 = arith.constant 2 : index
    %c0_300 = arith.constant 0 : index
    %873 = vector.load %arg20[%c2_299, %c0_300] : memref<16x128xf32, #tpu.memory_space<vmem>>, vector<2x128xf32>
    %c0_301 = arith.constant 0 : index
    %c0_302 = arith.constant 0 : index
    %874 = vector.load %arg11[%c0_301, %c0_302] : memref<32x128xf32, #tpu.memory_space<vmem>>, vector<32x128xf32>
    %cst_303 = arith.constant dense<0.000000e+00> : vector<2x128xf32>
    %875 = tpu.matmul %868, %874, %cst_303 {dimension_numbers = #tpu.dot_dimension_numbers<[1], [0], [0], [1], [0, 0, 1, 1], [], []>} : vector<2x32xf32>, vector<32x128xf32>, vector<2x128xf32> -> vector<2x128xf32>
    %876 = arith.addf %873, %875 : vector<2x128xf32>
    %877 = vector.extract_strided_slice %872 {offsets = [0, 0], sizes = [2, 32], strides = [1, 1]} : vector<2x128xf32> to vector<2x32xf32>
    %878 = arith.negf %877 : vector<2x32xf32>
    %879 = math.exp %878 : vector<2x32xf32>
    %cst_304 = arith.constant 1.000000e+00 : f32
    %880 = vector.broadcast %cst_304 : f32 to vector<2x32xf32>
    %881 = arith.addf %880, %879 : vector<2x32xf32>
    %882 = arith.divf %880, %881 : vector<2x32xf32>
    %883 = vector.extract_strided_slice %872 {offsets = [0, 32], sizes = [2, 32], strides = [1, 1]} : vector<2x128xf32> to vector<2x32xf32>
    %884 = arith.negf %883 : vector<2x32xf32>
    %885 = math.exp %884 : vector<2x32xf32>
    %cst_305 = arith.constant 1.000000e+00 : f32
    %886 = vector.broadcast %cst_305 : f32 to vector<2x32xf32>
    %887 = arith.addf %886, %885 : vector<2x32xf32>
    %888 = arith.divf %886, %887 : vector<2x32xf32>
    %889 = vector.extract_strided_slice %872 {offsets = [0, 64], sizes = [2, 32], strides = [1, 1]} : vector<2x128xf32> to vector<2x32xf32>
    %890 = math.tanh %889 : vector<2x32xf32>
    %891 = vector.extract_strided_slice %872 {offsets = [0, 96], sizes = [2, 32], strides = [1, 1]} : vector<2x128xf32> to vector<2x32xf32>
    %892 = arith.negf %891 : vector<2x32xf32>
    %893 = math.exp %892 : vector<2x32xf32>
    %cst_306 = arith.constant 1.000000e+00 : f32
    %894 = vector.broadcast %cst_306 : f32 to vector<2x32xf32>
    %895 = arith.addf %894, %893 : vector<2x32xf32>
    %896 = arith.divf %894, %895 : vector<2x32xf32>
    %897 = arith.mulf %888, %841 : vector<2x32xf32>
    %898 = arith.mulf %882, %890 : vector<2x32xf32>
    %899 = arith.addf %897, %898 : vector<2x32xf32>
    %900 = math.tanh %899 : vector<2x32xf32>
    %901 = arith.mulf %896, %900 : vector<2x32xf32>
    %902 = vector.extract_strided_slice %876 {offsets = [0, 0], sizes = [2, 32], strides = [1, 1]} : vector<2x128xf32> to vector<2x32xf32>
    %903 = arith.negf %902 : vector<2x32xf32>
    %904 = math.exp %903 : vector<2x32xf32>
    %cst_307 = arith.constant 1.000000e+00 : f32
    %905 = vector.broadcast %cst_307 : f32 to vector<2x32xf32>
    %906 = arith.addf %905, %904 : vector<2x32xf32>
    %907 = arith.divf %905, %906 : vector<2x32xf32>
    %908 = vector.extract_strided_slice %876 {offsets = [0, 32], sizes = [2, 32], strides = [1, 1]} : vector<2x128xf32> to vector<2x32xf32>
    %909 = arith.negf %908 : vector<2x32xf32>
    %910 = math.exp %909 : vector<2x32xf32>
    %cst_308 = arith.constant 1.000000e+00 : f32
    %911 = vector.broadcast %cst_308 : f32 to vector<2x32xf32>
    %912 = arith.addf %911, %910 : vector<2x32xf32>
    %913 = arith.divf %911, %912 : vector<2x32xf32>
    %914 = vector.extract_strided_slice %876 {offsets = [0, 64], sizes = [2, 32], strides = [1, 1]} : vector<2x128xf32> to vector<2x32xf32>
    %915 = math.tanh %914 : vector<2x32xf32>
    %916 = vector.extract_strided_slice %876 {offsets = [0, 96], sizes = [2, 32], strides = [1, 1]} : vector<2x128xf32> to vector<2x32xf32>
    %917 = arith.negf %916 : vector<2x32xf32>
    %918 = math.exp %917 : vector<2x32xf32>
    %cst_309 = arith.constant 1.000000e+00 : f32
    %919 = vector.broadcast %cst_309 : f32 to vector<2x32xf32>
    %920 = arith.addf %919, %918 : vector<2x32xf32>
    %921 = arith.divf %919, %920 : vector<2x32xf32>
    %922 = arith.mulf %913, %866 : vector<2x32xf32>
    %923 = arith.mulf %907, %915 : vector<2x32xf32>
    %924 = arith.addf %922, %923 : vector<2x32xf32>
    %925 = math.tanh %924 : vector<2x32xf32>
    %926 = arith.mulf %921, %925 : vector<2x32xf32>
    %c14_310 = arith.constant 14 : index
    %c0_311 = arith.constant 0 : index
    %927 = vector.load %arg19[%c14_310, %c0_311] : memref<16x128xf32, #tpu.memory_space<vmem>>, vector<2x128xf32>
    %c0_312 = arith.constant 0 : index
    %c0_313 = arith.constant 0 : index
    %928 = vector.load %arg10[%c0_312, %c0_313] : memref<32x128xf32, #tpu.memory_space<vmem>>, vector<32x128xf32>
    %cst_314 = arith.constant dense<0.000000e+00> : vector<2x128xf32>
    %929 = tpu.matmul %901, %928, %cst_314 {dimension_numbers = #tpu.dot_dimension_numbers<[1], [0], [0], [1], [0, 0, 1, 1], [], []>} : vector<2x32xf32>, vector<32x128xf32>, vector<2x128xf32> -> vector<2x128xf32>
    %930 = arith.addf %927, %929 : vector<2x128xf32>
    %c0_315 = arith.constant 0 : index
    %c0_316 = arith.constant 0 : index
    %931 = vector.load %arg20[%c0_315, %c0_316] : memref<16x128xf32, #tpu.memory_space<vmem>>, vector<2x128xf32>
    %c0_317 = arith.constant 0 : index
    %c0_318 = arith.constant 0 : index
    %932 = vector.load %arg11[%c0_317, %c0_318] : memref<32x128xf32, #tpu.memory_space<vmem>>, vector<32x128xf32>
    %cst_319 = arith.constant dense<0.000000e+00> : vector<2x128xf32>
    %933 = tpu.matmul %926, %932, %cst_319 {dimension_numbers = #tpu.dot_dimension_numbers<[1], [0], [0], [1], [0, 0, 1, 1], [], []>} : vector<2x32xf32>, vector<32x128xf32>, vector<2x128xf32> -> vector<2x128xf32>
    %934 = arith.addf %931, %933 : vector<2x128xf32>
    %935 = vector.extract_strided_slice %930 {offsets = [0, 0], sizes = [2, 32], strides = [1, 1]} : vector<2x128xf32> to vector<2x32xf32>
    %936 = arith.negf %935 : vector<2x32xf32>
    %937 = math.exp %936 : vector<2x32xf32>
    %cst_320 = arith.constant 1.000000e+00 : f32
    %938 = vector.broadcast %cst_320 : f32 to vector<2x32xf32>
    %939 = arith.addf %938, %937 : vector<2x32xf32>
    %940 = arith.divf %938, %939 : vector<2x32xf32>
    %941 = vector.extract_strided_slice %930 {offsets = [0, 32], sizes = [2, 32], strides = [1, 1]} : vector<2x128xf32> to vector<2x32xf32>
    %942 = arith.negf %941 : vector<2x32xf32>
    %943 = math.exp %942 : vector<2x32xf32>
    %cst_321 = arith.constant 1.000000e+00 : f32
    %944 = vector.broadcast %cst_321 : f32 to vector<2x32xf32>
    %945 = arith.addf %944, %943 : vector<2x32xf32>
    %946 = arith.divf %944, %945 : vector<2x32xf32>
    %947 = vector.extract_strided_slice %930 {offsets = [0, 64], sizes = [2, 32], strides = [1, 1]} : vector<2x128xf32> to vector<2x32xf32>
    %948 = math.tanh %947 : vector<2x32xf32>
    %949 = vector.extract_strided_slice %930 {offsets = [0, 96], sizes = [2, 32], strides = [1, 1]} : vector<2x128xf32> to vector<2x32xf32>
    %950 = arith.negf %949 : vector<2x32xf32>
    %951 = math.exp %950 : vector<2x32xf32>
    %cst_322 = arith.constant 1.000000e+00 : f32
    %952 = vector.broadcast %cst_322 : f32 to vector<2x32xf32>
    %953 = arith.addf %952, %951 : vector<2x32xf32>
    %954 = arith.divf %952, %953 : vector<2x32xf32>
    %955 = arith.mulf %946, %899 : vector<2x32xf32>
    %956 = arith.mulf %940, %948 : vector<2x32xf32>
    %957 = arith.addf %955, %956 : vector<2x32xf32>
    %958 = math.tanh %957 : vector<2x32xf32>
    %959 = arith.mulf %954, %958 : vector<2x32xf32>
    %960 = vector.extract_strided_slice %934 {offsets = [0, 0], sizes = [2, 32], strides = [1, 1]} : vector<2x128xf32> to vector<2x32xf32>
    %961 = arith.negf %960 : vector<2x32xf32>
    %962 = math.exp %961 : vector<2x32xf32>
    %cst_323 = arith.constant 1.000000e+00 : f32
    %963 = vector.broadcast %cst_323 : f32 to vector<2x32xf32>
    %964 = arith.addf %963, %962 : vector<2x32xf32>
    %965 = arith.divf %963, %964 : vector<2x32xf32>
    %966 = vector.extract_strided_slice %934 {offsets = [0, 32], sizes = [2, 32], strides = [1, 1]} : vector<2x128xf32> to vector<2x32xf32>
    %967 = arith.negf %966 : vector<2x32xf32>
    %968 = math.exp %967 : vector<2x32xf32>
    %cst_324 = arith.constant 1.000000e+00 : f32
    %969 = vector.broadcast %cst_324 : f32 to vector<2x32xf32>
    %970 = arith.addf %969, %968 : vector<2x32xf32>
    %971 = arith.divf %969, %970 : vector<2x32xf32>
    %972 = vector.extract_strided_slice %934 {offsets = [0, 64], sizes = [2, 32], strides = [1, 1]} : vector<2x128xf32> to vector<2x32xf32>
    %973 = math.tanh %972 : vector<2x32xf32>
    %974 = vector.extract_strided_slice %934 {offsets = [0, 96], sizes = [2, 32], strides = [1, 1]} : vector<2x128xf32> to vector<2x32xf32>
    %975 = arith.negf %974 : vector<2x32xf32>
    %976 = math.exp %975 : vector<2x32xf32>
    %cst_325 = arith.constant 1.000000e+00 : f32
    %977 = vector.broadcast %cst_325 : f32 to vector<2x32xf32>
    %978 = arith.addf %977, %976 : vector<2x32xf32>
    %979 = arith.divf %977, %978 : vector<2x32xf32>
    %980 = arith.mulf %971, %924 : vector<2x32xf32>
    %981 = arith.mulf %965, %973 : vector<2x32xf32>
    %982 = arith.addf %980, %981 : vector<2x32xf32>
    %983 = math.tanh %982 : vector<2x32xf32>
    %984 = arith.mulf %979, %983 : vector<2x32xf32>
    %c0_326 = arith.constant 0 : index
    %c0_327 = arith.constant 0 : index
    %985 = vector.load %arg14[%c0_326, %c0_327] : memref<64x32xf32, #tpu.memory_space<vmem>>, vector<32x32xf32>
    %cst_328 = arith.constant dense<0.000000e+00> : vector<2x32xf32>
    %986 = tpu.matmul %959, %985, %cst_328 {dimension_numbers = #tpu.dot_dimension_numbers<[1], [0], [0], [1], [0, 0, 1, 1], [], []>} : vector<2x32xf32>, vector<32x32xf32>, vector<2x32xf32> -> vector<2x32xf32>
    %c32_329 = arith.constant 32 : index
    %c0_330 = arith.constant 0 : index
    %987 = vector.load %arg14[%c32_329, %c0_330] : memref<64x32xf32, #tpu.memory_space<vmem>>, vector<32x32xf32>
    %cst_331 = arith.constant dense<0.000000e+00> : vector<2x32xf32>
    %988 = tpu.matmul %984, %987, %cst_331 {dimension_numbers = #tpu.dot_dimension_numbers<[1], [0], [0], [1], [0, 0, 1, 1], [], []>} : vector<2x32xf32>, vector<32x32xf32>, vector<2x32xf32> -> vector<2x32xf32>
    %989 = arith.addf %986, %988 : vector<2x32xf32>
    %c0_332 = arith.constant 0 : index
    %c0_333 = arith.constant 0 : index
    %990 = vector.load %arg15[%c0_332, %c0_333] : memref<1x32xf32, #tpu.memory_space<vmem>>, vector<1x32xf32>
    %991 = vector.broadcast %990 : vector<1x32xf32> to vector<2x32xf32>
    %992 = arith.addf %989, %991 : vector<2x32xf32>
    %993 = math.tanh %992 : vector<2x32xf32>
    %cst_334 = arith.constant dense<0.000000e+00> : vector<2xf32>
    %994 = vector.multi_reduction <add>, %993, %cst_334 [1] : vector<2x32xf32> to vector<2xf32>
    %995 = vector.shape_cast %994 : vector<2xf32> to vector<2x1xf32>
    %cst_335 = arith.constant 3.200000e+01 : f32
    %996 = vector.broadcast %cst_335 : f32 to vector<2x1xf32>
    %997 = arith.divf %995, %996 : vector<2x1xf32>
    %998 = vector.broadcast %997 : vector<2x1xf32> to vector<2x32xf32>
    %999 = arith.subf %993, %998 : vector<2x32xf32>
    %1000 = arith.mulf %999, %999 : vector<2x32xf32>
    %cst_336 = arith.constant dense<0.000000e+00> : vector<2xf32>
    %1001 = vector.multi_reduction <add>, %1000, %cst_336 [1] : vector<2x32xf32> to vector<2xf32>
    %1002 = vector.shape_cast %1001 : vector<2xf32> to vector<2x1xf32>
    %cst_337 = arith.constant 3.200000e+01 : f32
    %1003 = vector.broadcast %cst_337 : f32 to vector<2x1xf32>
    %1004 = arith.divf %1002, %1003 : vector<2x1xf32>
    %1005 = vector.broadcast %997 : vector<2x1xf32> to vector<2x32xf32>
    %1006 = arith.subf %993, %1005 : vector<2x32xf32>
    %cst_338 = arith.constant 9.99999974E-6 : f32
    %1007 = vector.broadcast %cst_338 : f32 to vector<2x1xf32>
    %1008 = arith.addf %1004, %1007 : vector<2x1xf32>
    %1009 = math.rsqrt %1008 : vector<2x1xf32>
    %1010 = vector.broadcast %1009 : vector<2x1xf32> to vector<2x32xf32>
    %1011 = arith.mulf %1006, %1010 : vector<2x32xf32>
    %c0_339 = arith.constant 0 : index
    %c0_340 = arith.constant 0 : index
    %1012 = vector.load %arg16[%c0_339, %c0_340] : memref<1x32xf32, #tpu.memory_space<vmem>>, vector<1x32xf32>
    %1013 = vector.broadcast %1012 : vector<1x32xf32> to vector<2x32xf32>
    %1014 = arith.mulf %1011, %1013 : vector<2x32xf32>
    %c0_341 = arith.constant 0 : index
    %c0_342 = arith.constant 0 : index
    %1015 = vector.load %arg17[%c0_341, %c0_342] : memref<1x32xf32, #tpu.memory_space<vmem>>, vector<1x32xf32>
    %1016 = vector.broadcast %1015 : vector<1x32xf32> to vector<2x32xf32>
    %1017 = arith.addf %1014, %1016 : vector<2x32xf32>
    %c0_343 = arith.constant 0 : index
    %c0_344 = arith.constant 0 : index
    %1018 = vector.load %arg18[%c0_343, %c0_344] : memref<2x32xf32, #tpu.memory_space<vmem>>, vector<2x32xf32>
    tpu.vector_store %arg18[%c0_343, %c0_344], %1017 {strides = array<i32>} : memref<2x32xf32, #tpu.memory_space<vmem>>, vector<2x32xf32>,
    return
  }
  func.func @transform_0(%arg0: i32) -> (i32, i32) {
    %c0_i32 = arith.constant 0 : i32
    %c0_i32_0 = arith.constant 0 : i32
    %c0_i32_1 = arith.constant 0 : i32
    return %c0_i32, %c0_i32_0 : i32, i32
  }
  func.func @transform_1(%arg0: i32) -> (i32, i32) {
    %c0_i32 = arith.constant 0 : i32
    %c0_i32_0 = arith.constant 0 : i32
    %c0_i32_1 = arith.constant 0 : i32
    return %c0_i32, %c0_i32_0 : i32, i32
  }
  func.func @transform_2(%arg0: i32) -> (i32, i32) {
    %c0_i32 = arith.constant 0 : i32
    %c0_i32_0 = arith.constant 0 : i32
    %c0_i32_1 = arith.constant 0 : i32
    return %c0_i32, %c0_i32_0 : i32, i32
  }
  func.func @transform_3(%arg0: i32) -> (i32, i32) {
    %c0_i32 = arith.constant 0 : i32
    %c0_i32_0 = arith.constant 0 : i32
    %c0_i32_1 = arith.constant 0 : i32
    return %c0_i32, %c0_i32_0 : i32, i32
  }
  func.func @transform_4(%arg0: i32) -> (i32, i32) {
    %c0_i32 = arith.constant 0 : i32
    %c0_i32_0 = arith.constant 0 : i32
    %c0_i32_1 = arith.constant 0 : i32
    return %c0_i32, %c0_i32_0 : i32, i32
  }
  func.func @transform_5(%arg0: i32) -> (i32, i32) {
    %c0_i32 = arith.constant 0 : i32
    %c0_i32_0 = arith.constant 0 : i32
    %c0_i32_1 = arith.constant 0 : i32
    return %c0_i32, %c0_i32_0 : i32, i32
  }
  func.func @transform_6(%arg0: i32) -> (i32, i32) {
    %c0_i32 = arith.constant 0 : i32
    %c0_i32_0 = arith.constant 0 : i32
    %c0_i32_1 = arith.constant 0 : i32
    return %c0_i32, %c0_i32_0 : i32, i32
  }
  func.func @transform_7(%arg0: i32) -> (i32, i32) {
    %c0_i32 = arith.constant 0 : i32
    %c0_i32_0 = arith.constant 0 : i32
    %c0_i32_1 = arith.constant 0 : i32
    return %c0_i32, %c0_i32_0 : i32, i32
  }
  func.func @transform_8(%arg0: i32) -> (i32, i32) {
    %c0_i32 = arith.constant 0 : i32
    %c0_i32_0 = arith.constant 0 : i32
    %c0_i32_1 = arith.constant 0 : i32
    return %c0_i32, %c0_i32_0 : i32, i32
  }
  func.func @transform_9(%arg0: i32) -> (i32, i32) {
    %c0_i32 = arith.constant 0 : i32
    %c0_i32_0 = arith.constant 0 : i32
    %c0_i32_1 = arith.constant 0 : i32
    return %c0_i32, %c0_i32_0 : i32, i32
  }
  func.func @transform_10(%arg0: i32) -> (i32, i32) {
    %c0_i32 = arith.constant 0 : i32
    %c0_i32_0 = arith.constant 0 : i32
    %c0_i32_1 = arith.constant 0 : i32
    return %c0_i32, %c0_i32_0 : i32, i32
  }
  func.func @transform_11(%arg0: i32) -> (i32, i32) {
    %c0_i32 = arith.constant 0 : i32
    %c0_i32_0 = arith.constant 0 : i32
    %c0_i32_1 = arith.constant 0 : i32
    return %c0_i32, %c0_i32_0 : i32, i32
  }
  func.func @transform_12(%arg0: i32) -> (i32, i32) {
    %c0_i32 = arith.constant 0 : i32
    %c0_i32_0 = arith.constant 0 : i32
    %c0_i32_1 = arith.constant 0 : i32
    return %c0_i32, %c0_i32_0 : i32, i32
  }
  func.func @transform_13(%arg0: i32) -> (i32, i32) {
    %c0_i32 = arith.constant 0 : i32
    %c0_i32_0 = arith.constant 0 : i32
    %c0_i32_1 = arith.constant 0 : i32
    return %c0_i32, %c0_i32_0 : i32, i32
  }
  func.func @transform_14(%arg0: i32) -> (i32, i32) {
    %c0_i32 = arith.constant 0 : i32
    %c0_i32_0 = arith.constant 0 : i32
    %c0_i32_1 = arith.constant 0 : i32
    return %c0_i32, %c0_i32_0 : i32, i32
  }
  func.func @transform_15(%arg0: i32) -> (i32, i32) {
    %c0_i32 = arith.constant 0 : i32
    %c0_i32_0 = arith.constant 0 : i32
    %c0_i32_1 = arith.constant 0 : i32
    return %c0_i32, %c0_i32_0 : i32, i32
  }
  func.func @transform_16(%arg0: i32) -> (i32, i32) {
    %c0_i32 = arith.constant 0 : i32
    %c0_i32_0 = arith.constant 0 : i32
    %c0_i32_1 = arith.constant 0 : i32
    return %c0_i32, %c0_i32_0 : i32, i32
  }
  func.func @transform_17(%arg0: i32) -> (i32, i32) {
    %c0_i32 = arith.constant 0 : i32
    %c0_i32_0 = arith.constant 0 : i32
    %c0_i32_1 = arith.constant 0 : i32
    return %c0_i32, %c0_i32_0 : i32, i32
  }
}

</mosaic_0001>

<llo_original>
// kernel: tpu_custom_call.1
$region0: #{tpu_custom_call.1}
  #allocation0 [shape = 'u32[]', space=smem, size = 0x4, offset = 0x4, fixed_abs, tag = 'smem constant byte address 0x4 - core index']
  #allocation1 [shape = 'u32[72,128]{1,0:T(1,128)}', space=vmem, size = 0x9000, scoped, tag = 'internal scratch']
  #allocation2 [shape = 'f32[16,128]{1,0:T(8,128)}', space=vmem, size = 0x2000, scoped, tag = 'scratch operand']
  #allocation3 [shape = 'f32[16,128]{1,0:T(8,128)}', space=vmem, size = 0x2000, scoped, tag = 'scratch operand']
  #allocation4 [shape = 'f32[16,32]{1,0:T(8,128)}', space=vmem, size = 0x2000, scoped, tag = 'scratch operand']
  #allocation5 [shape = 'f32[16,32]{1,0:T(8,128)}', space=vmem, size = 0x2000, scoped, tag = 'scratch operand']
  %s0 = inlined_call_operand.hbm [shape: f32[16,32], index: 0, kind: input, shape index: {}]
  %s1 = inlined_call_operand.vmem [shape: f32[32,128], index: 1, kind: input, shape index: {}]
  %s2 = inlined_call_operand.hbm [shape: f32[32,128], index: 2, kind: input, shape index: {}]
  %s3 = inlined_call_operand.hbm [shape: f32[32,128], index: 3, kind: input, shape index: {}]
  %s4 = inlined_call_operand.hbm [shape: f32[32,128], index: 4, kind: input, shape index: {}]
  %s5 = inlined_call_operand.vmem [shape: f32[1,128], index: 5, kind: input, shape index: {}]
  %s6 = inlined_call_operand.vmem [shape: f32[1,128], index: 6, kind: input, shape index: {}]
  %s7 = inlined_call_operand.vmem [shape: f32[64,128], index: 7, kind: input, shape index: {}]
  %s8 = inlined_call_operand.hbm [shape: f32[64,128], index: 8, kind: input, shape index: {}]
  %s9 = inlined_call_operand.hbm [shape: f32[32,128], index: 9, kind: input, shape index: {}]
  %s10 = inlined_call_operand.hbm [shape: f32[32,128], index: 10, kind: input, shape index: {}]
  %s11 = inlined_call_operand.vmem [shape: f32[1,128], index: 11, kind: input, shape index: {}]
  %s12 = inlined_call_operand.vmem [shape: f32[1,128], index: 12, kind: input, shape index: {}]
  %s13 = inlined_call_operand.vmem [shape: f32[64,32], index: 13, kind: input, shape index: {}]
  %s14 = inlined_call_operand.vmem [shape: f32[1,32], index: 14, kind: input, shape index: {}]
  %s15 = inlined_call_operand.vmem [shape: f32[1,32], index: 15, kind: input, shape index: {}]
  %s16 = inlined_call_operand.vmem [shape: f32[1,32], index: 16, kind: input, shape index: {}]
  %s17 = inlined_call_operand.hbm [shape: f32[2,32], index: 17, kind: output, shape index: {}]
  %s18 = sld [smem:[#allocation0]]
  $region106: #{tpu_custom_call.1} parent=0
    _
  %s20 = ssub.s32 1, %s18
  %s21 = scalar_select 0, %s20, %s18
  $region1: #{tpu_custom_call.1} parent=0
    #allocation6 [shape = 'u8[8192]{0}', space=vmem, size = 0x2000, scoped, tag = 'input window, operand 0, single buffered']
    #allocation7 [shape = 's32[1]{0}', space=sflag, size = 0x4, scoped, tag = 'scoped memory for tpu_custom_call.1']
    #allocation8 [shape = 's32[1]{0}', space=sflag, size = 0x4, scoped, tag = 'scoped memory for tpu_custom_call.1']
    #allocation9 [shape = 'u8[16384]{0}', space=vmem, size = 0x4000, scoped, tag = 'input window, operand 2, single buffered']
    #allocation10 [shape = 's32[1]{0}', space=sflag, size = 0x4, scoped, tag = 'scoped memory for tpu_custom_call.1']
    #allocation11 [shape = 'u8[16384]{0}', space=vmem, size = 0x4000, scoped, tag = 'input window, operand 3, single buffered']
    #allocation12 [shape = 'u8[16384]{0}', space=vmem, size = 0x4000, scoped, tag = 'input window, operand 4, single buffered']
    #allocation13 [shape = 's32[1]{0}', space=sflag, size = 0x4, scoped, tag = 'scoped memory for tpu_custom_call.1']
    #allocation14 [shape = 'u8[32768]{0}', space=vmem, size = 0x8000, scoped, tag = 'input window, operand 8, single buffered']
    #allocation15 [shape = 'u8[16384]{0}', space=vmem, size = 0x4000, scoped, tag = 'input window, operand 9, single buffered']
    #allocation16 [shape = 's32[1]{0}', space=sflag, size = 0x4, scoped, tag = 'scoped memory for tpu_custom_call.1']
    #allocation17 [shape = 'u8[16384]{0}', space=vmem, size = 0x4000, scoped, tag = 'input window, operand 10, single buffered']
    #allocation18 [shape = 'u8[1024]{0}', space=vmem, size = 0x400, scoped, tag = 'output window, operand 0, single buffered']
    %22 = vsyncpa [#allocation7], 0
    %23 = vsyncpa [#allocation10], 0
    %24 = vsyncpa [#allocation13], 0
    %25 = vsyncpa [#allocation16], 0
    %26 = vsyncpa [#allocation8], 0
    // Predicated region
    $region2: #{tpu_custom_call.1} parent=1 // pred_check
      _
    $region3: #{tpu_custom_call.1} parent=1 // pred_check_branch
      %28 = sbr.rel (0) target = $region5
    $region4: #{tpu_custom_call.1} parent=1 // pred_region
      %30 = vsyncadd [#allocation7], 0
      %s31 = sshll.u32 %s0, 4
      %s32 = int_to_ptr.hbm [resolvable:$true] %s31
      %s33 = sshll.u32 [#allocation6], 4
      %s34 = int_to_ptr.vmem [resolvable:$true] %s33
      %39 = dma.hbm_to_vmem [thread:$0]  %s32, 256, %s34, [#allocation7], 128, 128, 8
    $region5: #{tpu_custom_call.1} parent=1 // pred_fallthru
      _
    // Predicated region
    $region6: #{tpu_custom_call.1} parent=1 // pred_check
      _
    $region7: #{tpu_custom_call.1} parent=1 // pred_check_branch
      %41 = sbr.rel (0) target = $region9
    $region8: #{tpu_custom_call.1} parent=1 // pred_region
      _
    $region9: #{tpu_custom_call.1} parent=1 // pred_fallthru
      _
    // Predicated region
    $region10: #{tpu_custom_call.1} parent=1 // pred_check
      _
    $region11: #{tpu_custom_call.1} parent=1 // pred_check_branch
      %43 = sbr.rel (0) target = $region13
    $region12: #{tpu_custom_call.1} parent=1 // pred_region
      %45 = vsyncadd [#allocation10], 0
      %s46 = sshll.u32 %s2, 4
      %s47 = int_to_ptr.hbm [resolvable:$true] %s46
      %s48 = sshll.u32 [#allocation9], 4
      %s49 = int_to_ptr.vmem [resolvable:$true] %s48
      %54 = dma.hbm_to_vmem [thread:$0]  %s47, 512, %s49, [#allocation10], 128, 128, 8
    $region13: #{tpu_custom_call.1} parent=1 // pred_fallthru
      _
    // Predicated region
    $region14: #{tpu_custom_call.1} parent=1 // pred_check
      _
    $region15: #{tpu_custom_call.1} parent=1 // pred_check_branch
      %56 = sbr.rel (0) target = $region17
    $region16: #{tpu_custom_call.1} parent=1 // pred_region
      %58 = vsyncadd [#allocation10], 0
      %s59 = sshll.u32 %s3, 4
      %s60 = int_to_ptr.hbm [resolvable:$true] %s59
      %s61 = sshll.u32 [#allocation11], 4
      %s62 = int_to_ptr.vmem [resolvable:$true] %s61
      %67 = dma.hbm_to_vmem [thread:$0]  %s60, 512, %s62, [#allocation10], 128, 128, 8
    $region17: #{tpu_custom_call.1} parent=1 // pred_fallthru
      _
    // Predicated region
    $region18: #{tpu_custom_call.1} parent=1 // pred_check
      _
    $region19: #{tpu_custom_call.1} parent=1 // pred_check_branch
      %69 = sbr.rel (0) target = $region21
    $region20: #{tpu_custom_call.1} parent=1 // pred_region
      %71 = vsyncadd [#allocation13], 0
      %s72 = sshll.u32 %s4, 4
      %s73 = int_to_ptr.hbm [resolvable:$true] %s72
      %s74 = sshll.u32 [#allocation12], 4
      %s75 = int_to_ptr.vmem [resolvable:$true] %s74
      %80 = dma.hbm_to_vmem [thread:$0]  %s73, 512, %s75, [#allocation13], 128, 128, 8
    $region21: #{tpu_custom_call.1} parent=1 // pred_fallthru
      _
    // Predicated region
    $region22: #{tpu_custom_call.1} parent=1 // pred_check
      _
    $region23: #{tpu_custom_call.1} parent=1 // pred_check_branch
      %82 = sbr.rel (0) target = $region25
    $region24: #{tpu_custom_call.1} parent=1 // pred_region
      _
    $region25: #{tpu_custom_call.1} parent=1 // pred_fallthru
      _
    // Predicated region
    $region26: #{tpu_custom_call.1} parent=1 // pred_check
      _
    $region27: #{tpu_custom_call.1} parent=1 // pred_check_branch
      %84 = sbr.rel (0) target = $region29
    $region28: #{tpu_custom_call.1} parent=1 // pred_region
      _
    $region29: #{tpu_custom_call.1} parent=1 // pred_fallthru
      _
    // Predicated region
    $region30: #{tpu_custom_call.1} parent=1 // pred_check
      _
    $region31: #{tpu_custom_call.1} parent=1 // pred_check_branch
      %86 = sbr.rel (0) target = $region33
    $region32: #{tpu_custom_call.1} parent=1 // pred_region
      _
    $region33: #{tpu_custom_call.1} parent=1 // pred_fallthru
      _
    // Predicated region
    $region34: #{tpu_custom_call.1} parent=1 // pred_check
      _
    $region35: #{tpu_custom_call.1} parent=1 // pred_check_branch
      %88 = sbr.rel (0) target = $region37
    $region36: #{tpu_custom_call.1} parent=1 // pred_region
      %90 = vsyncadd [#allocation13], 0
      %s91 = sshll.u32 %s8, 4
      %s92 = int_to_ptr.hbm [resolvable:$true] %s91
      %s93 = sshll.u32 [#allocation14], 4
      %s94 = int_to_ptr.vmem [resolvable:$true] %s93
      %99 = dma.hbm_to_vmem [thread:$0]  %s92, 1024, %s94, [#allocation13], 128, 128, 8
    $region37: #{tpu_custom_call.1} parent=1 // pred_fallthru
      _
    // Predicated region
    $region38: #{tpu_custom_call.1} parent=1 // pred_check
      _
    $region39: #{tpu_custom_call.1} parent=1 // pred_check_branch
      %101 = sbr.rel (0) target = $region41
    $region40: #{tpu_custom_call.1} parent=1 // pred_region
      %103 = vsyncadd [#allocation16], 0
      %s104 = sshll.u32 %s9, 4
      %s105 = int_to_ptr.hbm [resolvable:$true] %s104
      %s106 = sshll.u32 [#allocation15], 4
      %s107 = int_to_ptr.vmem [resolvable:$true] %s106
      %112 = dma.hbm_to_vmem [thread:$0]  %s105, 512, %s107, [#allocation16], 128, 128, 8
    $region41: #{tpu_custom_call.1} parent=1 // pred_fallthru
      _
    // Predicated region
    $region42: #{tpu_custom_call.1} parent=1 // pred_check
      _
    $region43: #{tpu_custom_call.1} parent=1 // pred_check_branch
      %114 = sbr.rel (0) target = $region45
    $region44: #{tpu_custom_call.1} parent=1 // pred_region
      %116 = vsyncadd [#allocation16], 0
      %s117 = sshll.u32 %s10, 4
      %s118 = int_to_ptr.hbm [resolvable:$true] %s117
      %s119 = sshll.u32 [#allocation17], 4
      %s120 = int_to_ptr.vmem [resolvable:$true] %s119
      %125 = dma.hbm_to_vmem [thread:$0]  %s118, 512, %s120, [#allocation16], 128, 128, 8
    $region45: #{tpu_custom_call.1} parent=1 // pred_fallthru
      _
    // Predicated region
    $region46: #{tpu_custom_call.1} parent=1 // pred_check
      _
    $region47: #{tpu_custom_call.1} parent=1 // pred_check_branch
      %127 = sbr.rel (0) target = $region49
    $region48: #{tpu_custom_call.1} parent=1 // pred_region
      _
    $region49: #{tpu_custom_call.1} parent=1 // pred_fallthru
      _
    // Predicated region
    $region50: #{tpu_custom_call.1} parent=1 // pred_check
      _
    $region51: #{tpu_custom_call.1} parent=1 // pred_check_branch
      %129 = sbr.rel (0) target = $region53
    $region52: #{tpu_custom_call.1} parent=1 // pred_region
      _
    $region53: #{tpu_custom_call.1} parent=1 // pred_fallthru
      _
    // Predicated region
    $region54: #{tpu_custom_call.1} parent=1 // pred_check
      _
    $region55: #{tpu_custom_call.1} parent=1 // pred_check_branch
      %131 = sbr.rel (0) target = $region57
    $region56: #{tpu_custom_call.1} parent=1 // pred_region
      _
    $region57: #{tpu_custom_call.1} parent=1 // pred_fallthru
      _
    // Predicated region
    $region58: #{tpu_custom_call.1} parent=1 // pred_check
      _
    $region59: #{tpu_custom_call.1} parent=1 // pred_check_branch
      %133 = sbr.rel (0) target = $region61
    $region60: #{tpu_custom_call.1} parent=1 // pred_region
      _
    $region61: #{tpu_custom_call.1} parent=1 // pred_fallthru
      _
    // Predicated region
    $region62: #{tpu_custom_call.1} parent=1 // pred_check
      _
    $region63: #{tpu_custom_call.1} parent=1 // pred_check_branch
      %135 = sbr.rel (0) target = $region65
    $region64: #{tpu_custom_call.1} parent=1 // pred_region
      _
    $region65: #{tpu_custom_call.1} parent=1 // pred_fallthru
      _
    // Predicated region
    $region66: #{tpu_custom_call.1} parent=1 // pred_check
      _
    $region67: #{tpu_custom_call.1} parent=1 // pred_check_branch
      %137 = sbr.rel (0) target = $region69
    $region68: #{tpu_custom_call.1} parent=1 // pred_region
      _
    $region69: #{tpu_custom_call.1} parent=1 // pred_fallthru
      _
    // Predicated region
    $region70: #{tpu_custom_call.1} parent=1 // pred_check
      _
    $region71: #{tpu_custom_call.1} parent=1 // pred_check_branch
      %139 = sbr.rel (0) target = $region73
    $region72: #{tpu_custom_call.1} parent=1 // pred_region
      %141 = dma.done [#allocation7], 256
    $region73: #{tpu_custom_call.1} parent=1 // pred_fallthru
      _
    // Predicated region
    $region74: #{tpu_custom_call.1} parent=1 // pred_check
      _
    $region75: #{tpu_custom_call.1} parent=1 // pred_check_branch
      %143 = sbr.rel (0) target = $region77
    $region76: #{tpu_custom_call.1} parent=1 // pred_region
      %145 = dma.done [#allocation10], 512
    $region77: #{tpu_custom_call.1} parent=1 // pred_fallthru
      _
    // Predicated region
    $region78: #{tpu_custom_call.1} parent=1 // pred_check
      _
    $region79: #{tpu_custom_call.1} parent=1 // pred_check_branch
      %147 = sbr.rel (0) target = $region81
    $region80: #{tpu_custom_call.1} parent=1 // pred_region
      %149 = dma.done [#allocation10], 512
    $region81: #{tpu_custom_call.1} parent=1 // pred_fallthru
      _
    // Predicated region
    $region82: #{tpu_custom_call.1} parent=1 // pred_check
      _
    $region83: #{tpu_custom_call.1} parent=1 // pred_check_branch
      %151 = sbr.rel (0) target = $region85
    $region84: #{tpu_custom_call.1} parent=1 // pred_region
      %153 = dma.done [#allocation13], 512
    $region85: #{tpu_custom_call.1} parent=1 // pred_fallthru
      _
    // Predicated region
    $region86: #{tpu_custom_call.1} parent=1 // pred_check
      _
    $region87: #{tpu_custom_call.1} parent=1 // pred_check_branch
      %155 = sbr.rel (0) target = $region89
    $region88: #{tpu_custom_call.1} parent=1 // pred_region
      %157 = dma.done [#allocation13], 1024
    $region89: #{tpu_custom_call.1} parent=1 // pred_fallthru
      _
    // Predicated region
    $region90: #{tpu_custom_call.1} parent=1 // pred_check
      _
    $region91: #{tpu_custom_call.1} parent=1 // pred_check_branch
      %159 = sbr.rel (0) target = $region93
    $region92: #{tpu_custom_call.1} parent=1 // pred_region
      %161 = dma.done [#allocation16], 512
    $region93: #{tpu_custom_call.1} parent=1 // pred_fallthru
      _
    // Predicated region
    $region94: #{tpu_custom_call.1} parent=1 // pred_check
      _
    $region95: #{tpu_custom_call.1} parent=1 // pred_check_branch
      %163 = sbr.rel (0) target = $region97
    $region96: #{tpu_custom_call.1} parent=1 // pred_region
      %165 = dma.done [#allocation16], 512
    $region97: #{tpu_custom_call.1} parent=1 // pred_fallthru
      _
    %v166 = vld [vmem:[#allocation6] sm:$0xff]
    %v167 = vld [vmem:[#allocation6 + $0x8] sm:$0xff]
    %v168 = vld [vmem:[%s1] sm:$0xff]
    %v169 = vld [vmem:[%s1 + $0x8] sm:$0xff]
    %v170 = vld [vmem:[%s1 + $0x10] sm:$0xff]
    %v171 = vld [vmem:[%s1 + $0x18] sm:$0xff]
    %v172 = vld [vmem:[#allocation9] sm:$0xff]
    %v173 = vld [vmem:[#allocation9 + $0x8] sm:$0xff]
    %v174 = vld [vmem:[#allocation9 + $0x10] sm:$0xff]
    %v175 = vld [vmem:[#allocation9 + $0x18] sm:$0xff]
    %v176 = vld [vmem:[%s5] sm:$0x1]
    %v178 = vperm.slane %v176, 0
    %vm180 = vcmask 261120
    %v182 = vsel %vm180, %v166, 0
    %v185 = vsel %vm180, %v167, 0
    %187 = vmatpush.msra.mxu0 0.0
    %188 = vmatpush.msra.mxu0 0.0
    %189 = vmatpush.msra.mxu0 0.0
    %190 = vmatpush.msra.mxu0 0.0
    %191 = vmatpush.msra.mxu0 0.0
    %192 = vmatpush.msra.mxu0 0.0
    %193 = vmatpush.msra.mxu0 0.0
    %194 = vmatpush.msra.mxu0 0.0
    %195 = vmatpush.msra.mxu0 0.0
    %196 = vmatpush.msra.mxu0 0.0
    %197 = vmatpush.msra.mxu0 0.0
    %198 = vmatpush.msra.mxu0 0.0
    %199 = vmatpush.msra.mxu0 %v171
    %200 = vmatpush.msra.mxu0 %v170
    %201 = vmatpush.msra.mxu0 %v169
    %202 = vmatpush.msra.mxu0 %v168
    %203 = vmatmul.f32.gmra.mxu0 %v182
    %v204 = vpop.f32.mrf.mxu0
    %v205 = vadd.f32 %v178, %v204
    %206 = vmatmul.f32.gmra.mxu0 %v185
    %v207 = vpop.f32.mrf.mxu0
    %v208 = vadd.f32 %v178, %v207
    %209 = vdwg.mxu0
    %210 = vst [vmem:[#allocation2] sm:$0xff] %v205
    %211 = vst [vmem:[#allocation2 + $0x8] sm:$0xff] %v208
    %v212 = vld [vmem:[%s6] sm:$0x1]
    %v214 = vperm.slane %v212, 0
    %216 = vmatpush.msra.mxu0 0.0
    %217 = vmatpush.msra.mxu0 0.0
    %218 = vmatpush.msra.mxu0 0.0
    %219 = vmatpush.msra.mxu0 0.0
    %220 = vmatpush.msra.mxu0 0.0
    %221 = vmatpush.msra.mxu0 0.0
    %222 = vmatpush.msra.mxu0 0.0
    %223 = vmatpush.msra.mxu0 0.0
    %224 = vmatpush.msra.mxu0 0.0
    %225 = vmatpush.msra.mxu0 0.0
    %226 = vmatpush.msra.mxu0 0.0
    %227 = vmatpush.msra.mxu0 0.0
    %228 = vmatpush.msra.mxu0 %v175
    %229 = vmatpush.msra.mxu0 %v174
    %230 = vmatpush.msra.mxu0 %v173
    %231 = vmatpush.msra.mxu0 %v172
    %232 = vmatmul.f32.gmra.mxu0 %v182
    %v233 = vpop.f32.mrf.mxu0
    %v234 = vadd.f32 %v214, %v233
    %235 = vmatmul.f32.gmra.mxu0 %v185
    %v236 = vpop.f32.mrf.mxu0
    %v237 = vadd.f32 %v214, %v236
    %238 = vdwg.mxu0
    %239 = vst [vmem:[#allocation3] sm:$0xff] %v234
    %240 = vst [vmem:[#allocation3 + $0x8] sm:$0xff] %v237
    %v241 = vld [vmem:[#allocation2] sm:$0x3]
    %v242 = vld [vmem:[#allocation11] sm:$0xff]
    %v243 = vld [vmem:[#allocation11 + $0x8] sm:$0xff]
    %v244 = vld [vmem:[#allocation11 + $0x10] sm:$0xff]
    %v245 = vld [vmem:[#allocation11 + $0x18] sm:$0xff]
    %v247 = vsel %vm180, 0.0, 0
    %249 = vmatpush.msra.mxu0 0.0
    %250 = vmatpush.msra.mxu0 0.0
    %251 = vmatpush.msra.mxu0 0.0
    %252 = vmatpush.msra.mxu0 0.0
    %253 = vmatpush.msra.mxu0 0.0
    %254 = vmatpush.msra.mxu0 0.0
    %255 = vmatpush.msra.mxu0 0.0
    %256 = vmatpush.msra.mxu0 0.0
    %257 = vmatpush.msra.mxu0 0.0
    %258 = vmatpush.msra.mxu0 0.0
    %259 = vmatpush.msra.mxu0 0.0
    %260 = vmatpush.msra.mxu0 0.0
    %261 = vmatpush.msra.mxu0 %v245
    %262 = vmatpush.msra.mxu0 %v244
    %263 = vmatpush.msra.mxu0 %v243
    %264 = vmatpush.msra.mxu0 %v242
    %265 = vmatmul.f32.gmra.mxu0 %v247
    %v266 = vpop.f32.mrf.mxu0
    %v267 = vadd.f32 0.0, %v266
    %268 = vdwg.mxu0
    %v269 = vadd.f32 %v241, %v267
    %v270 = vld [vmem:[#allocation3 + $0xe] sm:$0x3]
    %v271 = vld [vmem:[#allocation12] sm:$0xff]
    %v272 = vld [vmem:[#allocation12 + $0x8] sm:$0xff]
    %v273 = vld [vmem:[#allocation12 + $0x10] sm:$0xff]
    %v274 = vld [vmem:[#allocation12 + $0x18] sm:$0xff]
    %275 = vmatpush.msra.mxu0 0.0
    %276 = vmatpush.msra.mxu0 0.0
    %277 = vmatpush.msra.mxu0 0.0
    %278 = vmatpush.msra.mxu0 0.0
    %279 = vmatpush.msra.mxu0 0.0
    %280 = vmatpush.msra.mxu0 0.0
    %281 = vmatpush.msra.mxu0 0.0
    %282 = vmatpush.msra.mxu0 0.0
    %283 = vmatpush.msra.mxu0 0.0
    %284 = vmatpush.msra.mxu0 0.0
    %285 = vmatpush.msra.mxu0 0.0
    %286 = vmatpush.msra.mxu0 0.0
    %287 = vmatpush.msra.mxu0 %v274
    %288 = vmatpush.msra.mxu0 %v273
    %289 = vmatpush.msra.mxu0 %v272
    %290 = vmatpush.msra.mxu0 %v271
    %291 = vmatmul.f32.gmra.mxu0 %v247
    %v292 = vpop.f32.mrf.mxu0
    %v293 = vadd.f32 0.0, %v292
    %294 = vdwg.mxu0
    %v295 = vadd.f32 %v270, %v293
    %v296 = vxor.u32 %v269, 2147483648
    %v297 = vmul.f32 %v296, 1.442695
    %v298 = vpow.pop %v297
    %v299 = vadd.f32 %v298, 1.0
    %v300 = vrcp.pop %v299
    %v301 = vmul.f32 %v299, %v300
    %v302 = vsub.f32 1.0, %v301
    %v303 = vmul.f32 %v300, %v302
    %v304 = vadd.f32 %v300, %v303
    %vm305 = vweird.f32 %v299
    %vm306 = vweird.f32 %v300
    %vm307 = vmor %vm305, %vm306
    %v308 = vsel %vm307, %v300, %v304
    %v309 = vand.u32 2147483647, %v299
    %vm310 = vcmp.eq.f32.partialorder %v309, 8.507059e+37
    %v311 = vand.u32 %v299, 2147483648
    %v312 = vor.u32 1.1754944e-38, %v311
    %v313 = vsel %vm310, %v312, %v308
    %v314 = vmul.f32 1.0, %v313
    %v315 = vtanh.pop %v269
    %v316 = vmul.f32 %v314, 0.0
    %318 = vrot.lane.b32.xlu0 %v315, 64
    %v319 = vpop.permute.xlu0 %318
    %v321 = vmul.f32 %v314, %v319
    %323 = vrot.lane.b32.xlu0 %v321, 32
    %v324 = vpop.permute.xlu0 %323
    %v326 = vadd.f32 %v316, %v324
    %v327 = vtanh.pop %v326
    %329 = vrot.lane.b32.xlu0 %v327, 64
    %v330 = vpop.permute.xlu0 %329
    %v332 = vmul.f32 %v314, %v330
    %v333 = vxor.u32 %v295, 2147483648
    %v334 = vmul.f32 %v333, 1.442695
    %v335 = vpow.pop %v334
    %v336 = vadd.f32 %v335, 1.0
    %v337 = vrcp.pop %v336
    %v338 = vmul.f32 %v336, %v337
    %v339 = vsub.f32 1.0, %v338
    %v340 = vmul.f32 %v337, %v339
    %v341 = vadd.f32 %v337, %v340
    %vm342 = vweird.f32 %v336
    %vm343 = vweird.f32 %v337
    %vm344 = vmor %vm342, %vm343
    %v345 = vsel %vm344, %v337, %v341
    %v346 = vand.u32 2147483647, %v336
    %vm347 = vcmp.eq.f32.partialorder %v346, 8.507059e+37
    %v348 = vand.u32 %v336, 2147483648
    %v349 = vor.u32 1.1754944e-38, %v348
    %v350 = vsel %vm347, %v349, %v345
    %v351 = vmul.f32 1.0, %v350
    %v352 = vtanh.pop %v295
    %v353 = vmul.f32 %v351, 0.0
    %355 = vrot.lane.b32.xlu0 %v352, 64
    %v356 = vpop.permute.xlu0 %355
    %v358 = vmul.f32 %v351, %v356
    %360 = vrot.lane.b32.xlu0 %v358, 32
    %v361 = vpop.permute.xlu0 %360
    %v363 = vadd.f32 %v353, %v361
    %v364 = vtanh.pop %v363
    %366 = vrot.lane.b32.xlu0 %v364, 64
    %v367 = vpop.permute.xlu0 %366
    %v369 = vmul.f32 %v351, %v367
    %371 = vrot.lane.b32.xlu0 %v332, 32
    %v372 = vpop.permute.xlu0 %371
    %vm374 = vcmask 254976
    %375 = vst.msk [vmem:[#allocation4] sm:$0x3] %vm374, %v372
    %377 = vrot.lane.b32.xlu0 %v369, 32
    %v378 = vpop.permute.xlu0 %377
    %380 = vst.msk [vmem:[#allocation5 + $0xe] sm:$0x3] %vm374, %v378
    %v381 = vld [vmem:[#allocation2 + $0x2] sm:$0x3]
    %v382 = vld [vmem:[#allocation11] sm:$0xff]
    %v383 = vld [vmem:[#allocation11 + $0x8] sm:$0xff]
    %v384 = vld [vmem:[#allocation11 + $0x10] sm:$0xff]
    %v385 = vld [vmem:[#allocation11 + $0x18] sm:$0xff]
    %v386 = vsel %vm180, %v372, 0
    %388 = vmatpush.msra.mxu0 0.0
    %389 = vmatpush.msra.mxu0 0.0
    %390 = vmatpush.msra.mxu0 0.0
    %391 = vmatpush.msra.mxu0 0.0
    %392 = vmatpush.msra.mxu0 0.0
    %393 = vmatpush.msra.mxu0 0.0
    %394 = vmatpush.msra.mxu0 0.0
    %395 = vmatpush.msra.mxu0 0.0
    %396 = vmatpush.msra.mxu0 0.0
    %397 = vmatpush.msra.mxu0 0.0
    %398 = vmatpush.msra.mxu0 0.0
    %399 = vmatpush.msra.mxu0 0.0
    %400 = vmatpush.msra.mxu0 %v385
    %401 = vmatpush.msra.mxu0 %v384
    %402 = vmatpush.msra.mxu0 %v383
    %403 = vmatpush.msra.mxu0 %v382
    %404 = vmatmul.f32.gmra.mxu0 %v386
    %v405 = vpop.f32.mrf.mxu0
    %v406 = vadd.f32 0.0, %v405
    %407 = vdwg.mxu0
    %v408 = vadd.f32 %v381, %v406
    %v409 = vld [vmem:[#allocation3 + $0xc] sm:$0x3]
    %v410 = vld [vmem:[#allocation12] sm:$0xff]
    %v411 = vld [vmem:[#allocation12 + $0x8] sm:$0xff]
    %v412 = vld [vmem:[#allocation12 + $0x10] sm:$0xff]
    %v413 = vld [vmem:[#allocation12 + $0x18] sm:$0xff]
    %v414 = vsel %vm180, %v378, 0
    %416 = vmatpush.msra.mxu0 0.0
    %417 = vmatpush.msra.mxu0 0.0
    %418 = vmatpush.msra.mxu0 0.0
    %419 = vmatpush.msra.mxu0 0.0
    %420 = vmatpush.msra.mxu0 0.0
    %421 = vmatpush.msra.mxu0 0.0
    %422 = vmatpush.msra.mxu0 0.0
    %423 = vmatpush.msra.mxu0 0.0
    %424 = vmatpush.msra.mxu0 0.0
    %425 = vmatpush.msra.mxu0 0.0
    %426 = vmatpush.msra.mxu0 0.0
    %427 = vmatpush.msra.mxu0 0.0
    %428 = vmatpush.msra.mxu0 %v413
    %429 = vmatpush.msra.mxu0 %v412
    %430 = vmatpush.msra.mxu0 %v411
    %431 = vmatpush.msra.mxu0 %v410
    %432 = vmatmul.f32.gmra.mxu0 %v414
    %v433 = vpop.f32.mrf.mxu0
    %v434 = vadd.f32 0.0, %v433
    %435 = vdwg.mxu0
    %v436 = vadd.f32 %v409, %v434
    %v437 = vxor.u32 %v408, 2147483648
    %v438 = vmul.f32 %v437, 1.442695
    %v439 = vpow.pop %v438
    %v440 = vadd.f32 %v439, 1.0
    %v441 = vrcp.pop %v440
    %v442 = vmul.f32 %v440, %v441
    %v443 = vsub.f32 1.0, %v442
    %v444 = vmul.f32 %v441, %v443
    %v445 = vadd.f32 %v441, %v444
    %vm446 = vweird.f32 %v440
    %vm447 = vweird.f32 %v441
    %vm448 = vmor %vm446, %vm447
    %v449 = vsel %vm448, %v441, %v445
    %v450 = vand.u32 2147483647, %v440
    %vm451 = vcmp.eq.f32.partialorder %v450, 8.507059e+37
    %v452 = vand.u32 %v440, 2147483648
    %v453 = vor.u32 1.1754944e-38, %v452
    %v454 = vsel %vm451, %v453, %v449
    %v455 = vmul.f32 1.0, %v454
    %v456 = vtanh.pop %v408
    %v457 = vmul.f32 %v455, %v326
    %459 = vrot.lane.b32.xlu0 %v456, 64
    %v460 = vpop.permute.xlu0 %459
    %v462 = vmul.f32 %v455, %v460
    %464 = vrot.lane.b32.xlu0 %v462, 32
    %v465 = vpop.permute.xlu0 %464
    %v467 = vadd.f32 %v457, %v465
    %v468 = vtanh.pop %v467
    %470 = vrot.lane.b32.xlu0 %v468, 64
    %v471 = vpop.permute.xlu0 %470
    %v473 = vmul.f32 %v455, %v471
    %v474 = vxor.u32 %v436, 2147483648
    %v475 = vmul.f32 %v474, 1.442695
    %v476 = vpow.pop %v475
    %v477 = vadd.f32 %v476, 1.0
    %v478 = vrcp.pop %v477
    %v479 = vmul.f32 %v477, %v478
    %v480 = vsub.f32 1.0, %v479
    %v481 = vmul.f32 %v478, %v480
    %v482 = vadd.f32 %v478, %v481
    %vm483 = vweird.f32 %v477
    %vm484 = vweird.f32 %v478
    %vm485 = vmor %vm483, %vm484
    %v486 = vsel %vm485, %v478, %v482
    %v487 = vand.u32 2147483647, %v477
    %vm488 = vcmp.eq.f32.partialorder %v487, 8.507059e+37
    %v489 = vand.u32 %v477, 2147483648
    %v490 = vor.u32 1.1754944e-38, %v489
    %v491 = vsel %vm488, %v490, %v486
    %v492 = vmul.f32 1.0, %v491
    %v493 = vtanh.pop %v436
    %v494 = vmul.f32 %v492, %v363
    %496 = vrot.lane.b32.xlu0 %v493, 64
    %v497 = vpop.permute.xlu0 %496
    %v499 = vmul.f32 %v492, %v497
    %501 = vrot.lane.b32.xlu0 %v499, 32
    %v502 = vpop.permute.xlu0 %501
    %v504 = vadd.f32 %v494, %v502
    %v505 = vtanh.pop %v504
    %507 = vrot.lane.b32.xlu0 %v505, 64
    %v508 = vpop.permute.xlu0 %507
    %v510 = vmul.f32 %v492, %v508
    %512 = vrot.lane.b32.xlu0 %v473, 32
    %v513 = vpop.permute.xlu0 %512
    %515 = vst.msk [vmem:[#allocation4 + $0x2] sm:$0x3] %vm374, %v513
    %517 = vrot.lane.b32.xlu0 %v510, 32
    %v518 = vpop.permute.xlu0 %517
    %520 = vst.msk [vmem:[#allocation5 + $0xc] sm:$0x3] %vm374, %v518
    %v521 = vld [vmem:[#allocation2 + $0x4] sm:$0x3]
    %v522 = vld [vmem:[#allocation11] sm:$0xff]
    %v523 = vld [vmem:[#allocation11 + $0x8] sm:$0xff]
    %v524 = vld [vmem:[#allocation11 + $0x10] sm:$0xff]
    %v525 = vld [vmem:[#allocation11 + $0x18] sm:$0xff]
    %v526 = vsel %vm180, %v513, 0
    %528 = vmatpush.msra.mxu0 0.0
    %529 = vmatpush.msra.mxu0 0.0
    %530 = vmatpush.msra.mxu0 0.0
    %531 = vmatpush.msra.mxu0 0.0
    %532 = vmatpush.msra.mxu0 0.0
    %533 = vmatpush.msra.mxu0 0.0
    %534 = vmatpush.msra.mxu0 0.0
    %535 = vmatpush.msra.mxu0 0.0
    %536 = vmatpush.msra.mxu0 0.0
    %537 = vmatpush.msra.mxu0 0.0
    %538 = vmatpush.msra.mxu0 0.0
    %539 = vmatpush.msra.mxu0 0.0
    %540 = vmatpush.msra.mxu0 %v525
    %541 = vmatpush.msra.mxu0 %v524
    %542 = vmatpush.msra.mxu0 %v523
    %543 = vmatpush.msra.mxu0 %v522
    %544 = vmatmul.f32.gmra.mxu0 %v526
    %v545 = vpop.f32.mrf.mxu0
    %v546 = vadd.f32 0.0, %v545
    %547 = vdwg.mxu0
    %v548 = vadd.f32 %v521, %v546
    %v549 = vld [vmem:[#allocation3 + $0xa] sm:$0x3]
    %v550 = vld [vmem:[#allocation12] sm:$0xff]
    %v551 = vld [vmem:[#allocation12 + $0x8] sm:$0xff]
    %v552 = vld [vmem:[#allocation12 + $0x10] sm:$0xff]
    %v553 = vld [vmem:[#allocation12 + $0x18] sm:$0xff]
    %v554 = vsel %vm180, %v518, 0
    %556 = vmatpush.msra.mxu0 0.0
    %557 = vmatpush.msra.mxu0 0.0
    %558 = vmatpush.msra.mxu0 0.0
    %559 = vmatpush.msra.mxu0 0.0
    %560 = vmatpush.msra.mxu0 0.0
    %561 = vmatpush.msra.mxu0 0.0
    %562 = vmatpush.msra.mxu0 0.0
    %563 = vmatpush.msra.mxu0 0.0
    %564 = vmatpush.msra.mxu0 0.0
    %565 = vmatpush.msra.mxu0 0.0
    %566 = vmatpush.msra.mxu0 0.0
    %567 = vmatpush.msra.mxu0 0.0
    %568 = vmatpush.msra.mxu0 %v553
    %569 = vmatpush.msra.mxu0 %v552
    %570 = vmatpush.msra.mxu0 %v551
    %571 = vmatpush.msra.mxu0 %v550
    %572 = vmatmul.f32.gmra.mxu0 %v554
    %v573 = vpop.f32.mrf.mxu0
    %v574 = vadd.f32 0.0, %v573
    %575 = vdwg.mxu0
    %v576 = vadd.f32 %v549, %v574
    %v577 = vxor.u32 %v548, 2147483648
    %v578 = vmul.f32 %v577, 1.442695
    %v579 = vpow.pop %v578
    %v580 = vadd.f32 %v579, 1.0
    %v581 = vrcp.pop %v580
    %v582 = vmul.f32 %v580, %v581
    %v583 = vsub.f32 1.0, %v582
    %v584 = vmul.f32 %v581, %v583
    %v585 = vadd.f32 %v581, %v584
    %vm586 = vweird.f32 %v580
    %vm587 = vweird.f32 %v581
    %vm588 = vmor %vm586, %vm587
    %v589 = vsel %vm588, %v581, %v585
    %v590 = vand.u32 2147483647, %v580
    %vm591 = vcmp.eq.f32.partialorder %v590, 8.507059e+37
    %v592 = vand.u32 %v580, 2147483648
    %v593 = vor.u32 1.1754944e-38, %v592
    %v594 = vsel %vm591, %v593, %v589
    %v595 = vmul.f32 1.0, %v594
    %v596 = vtanh.pop %v548
    %v597 = vmul.f32 %v595, %v467
    %599 = vrot.lane.b32.xlu0 %v596, 64
    %v600 = vpop.permute.xlu0 %599
    %v602 = vmul.f32 %v595, %v600
    %604 = vrot.lane.b32.xlu0 %v602, 32
    %v605 = vpop.permute.xlu0 %604
    %v607 = vadd.f32 %v597, %v605
    %v608 = vtanh.pop %v607
    %610 = vrot.lane.b32.xlu0 %v608, 64
    %v611 = vpop.permute.xlu0 %610
    %v613 = vmul.f32 %v595, %v611
    %v614 = vxor.u32 %v576, 2147483648
    %v615 = vmul.f32 %v614, 1.442695
    %v616 = vpow.pop %v615
    %v617 = vadd.f32 %v616, 1.0
    %v618 = vrcp.pop %v617
    %v619 = vmul.f32 %v617, %v618
    %v620 = vsub.f32 1.0, %v619
    %v621 = vmul.f32 %v618, %v620
    %v622 = vadd.f32 %v618, %v621
    %vm623 = vweird.f32 %v617
    %vm624 = vweird.f32 %v618
    %vm625 = vmor %vm623, %vm624
    %v626 = vsel %vm625, %v618, %v622
    %v627 = vand.u32 2147483647, %v617
    %vm628 = vcmp.eq.f32.partialorder %v627, 8.507059e+37
    %v629 = vand.u32 %v617, 2147483648
    %v630 = vor.u32 1.1754944e-38, %v629
    %v631 = vsel %vm628, %v630, %v626
    %v632 = vmul.f32 1.0, %v631
    %v633 = vtanh.pop %v576
    %v634 = vmul.f32 %v632, %v504
    %636 = vrot.lane.b32.xlu0 %v633, 64
    %v637 = vpop.permute.xlu0 %636
    %v639 = vmul.f32 %v632, %v637
    %641 = vrot.lane.b32.xlu0 %v639, 32
    %v642 = vpop.permute.xlu0 %641
    %v644 = vadd.f32 %v634, %v642
    %v645 = vtanh.pop %v644
    %647 = vrot.lane.b32.xlu0 %v645, 64
    %v648 = vpop.permute.xlu0 %647
    %v650 = vmul.f32 %v632, %v648
    %652 = vrot.lane.b32.xlu0 %v613, 32
    %v653 = vpop.permute.xlu0 %652
    %655 = vst.msk [vmem:[#allocation4 + $0x4] sm:$0x3] %vm374, %v653
    %657 = vrot.lane.b32.xlu0 %v650, 32
    %v658 = vpop.permute.xlu0 %657
    %660 = vst.msk [vmem:[#allocation5 + $0xa] sm:$0x3] %vm374, %v658
    %v661 = vld [vmem:[#allocation2 + $0x6] sm:$0x3]
    %v662 = vld [vmem:[#allocation11] sm:$0xff]
    %v663 = vld [vmem:[#allocation11 + $0x8] sm:$0xff]
    %v664 = vld [vmem:[#allocation11 + $0x10] sm:$0xff]
    %v665 = vld [vmem:[#allocation11 + $0x18] sm:$0xff]
    %v666 = vsel %vm180, %v653, 0
    %668 = vmatpush.msra.mxu0 0.0
    %669 = vmatpush.msra.mxu0 0.0
    %670 = vmatpush.msra.mxu0 0.0
    %671 = vmatpush.msra.mxu0 0.0
    %672 = vmatpush.msra.mxu0 0.0
    %673 = vmatpush.msra.mxu0 0.0
    %674 = vmatpush.msra.mxu0 0.0
    %675 = vmatpush.msra.mxu0 0.0
    %676 = vmatpush.msra.mxu0 0.0
    %677 = vmatpush.msra.mxu0 0.0
    %678 = vmatpush.msra.mxu0 0.0
    %679 = vmatpush.msra.mxu0 0.0
    %680 = vmatpush.msra.mxu0 %v665
    %681 = vmatpush.msra.mxu0 %v664
    %682 = vmatpush.msra.mxu0 %v663
    %683 = vmatpush.msra.mxu0 %v662
    %684 = vmatmul.f32.gmra.mxu0 %v666
    %v685 = vpop.f32.mrf.mxu0
    %v686 = vadd.f32 0.0, %v685
    %687 = vdwg.mxu0
    %v688 = vadd.f32 %v661, %v686
    %v689 = vld [vmem:[#allocation3 + $0x8] sm:$0x3]
    %v690 = vld [vmem:[#allocation12] sm:$0xff]
    %v691 = vld [vmem:[#allocation12 + $0x8] sm:$0xff]
    %v692 = vld [vmem:[#allocation12 + $0x10] sm:$0xff]
    %v693 = vld [vmem:[#allocation12 + $0x18] sm:$0xff]
    %v694 = vsel %vm180, %v658, 0
    %696 = vmatpush.msra.mxu0 0.0
    %697 = vmatpush.msra.mxu0 0.0
    %698 = vmatpush.msra.mxu0 0.0
    %699 = vmatpush.msra.mxu0 0.0
    %700 = vmatpush.msra.mxu0 0.0
    %701 = vmatpush.msra.mxu0 0.0
    %702 = vmatpush.msra.mxu0 0.0
    %703 = vmatpush.msra.mxu0 0.0
    %704 = vmatpush.msra.mxu0 0.0
    %705 = vmatpush.msra.mxu0 0.0
    %706 = vmatpush.msra.mxu0 0.0
    %707 = vmatpush.msra.mxu0 0.0
    %708 = vmatpush.msra.mxu0 %v693
    %709 = vmatpush.msra.mxu0 %v692
    %710 = vmatpush.msra.mxu0 %v691
    %711 = vmatpush.msra.mxu0 %v690
    %712 = vmatmul.f32.gmra.mxu0 %v694
    %v713 = vpop.f32.mrf.mxu0
    %v714 = vadd.f32 0.0, %v713
    %715 = vdwg.mxu0
    %v716 = vadd.f32 %v689, %v714
    %v717 = vxor.u32 %v688, 2147483648
    %v718 = vmul.f32 %v717, 1.442695
    %v719 = vpow.pop %v718
    %v720 = vadd.f32 %v719, 1.0
    %v721 = vrcp.pop %v720
    %v722 = vmul.f32 %v720, %v721
    %v723 = vsub.f32 1.0, %v722
    %v724 = vmul.f32 %v721, %v723
    %v725 = vadd.f32 %v721, %v724
    %vm726 = vweird.f32 %v720
    %vm727 = vweird.f32 %v721
    %vm728 = vmor %vm726, %vm727
    %v729 = vsel %vm728, %v721, %v725
    %v730 = vand.u32 2147483647, %v720
    %vm731 = vcmp.eq.f32.partialorder %v730, 8.507059e+37
    %v732 = vand.u32 %v720, 2147483648
    %v733 = vor.u32 1.1754944e-38, %v732
    %v734 = vsel %vm731, %v733, %v729
    %v735 = vmul.f32 1.0, %v734
    %v736 = vtanh.pop %v688
    %v737 = vmul.f32 %v735, %v607
    %739 = vrot.lane.b32.xlu0 %v736, 64
    %v740 = vpop.permute.xlu0 %739
    %v742 = vmul.f32 %v735, %v740
    %744 = vrot.lane.b32.xlu0 %v742, 32
    %v745 = vpop.permute.xlu0 %744
    %v747 = vadd.f32 %v737, %v745
    %v748 = vtanh.pop %v747
    %750 = vrot.lane.b32.xlu0 %v748, 64
    %v751 = vpop.permute.xlu0 %750
    %v753 = vmul.f32 %v735, %v751
    %v754 = vxor.u32 %v716, 2147483648
    %v755 = vmul.f32 %v754, 1.442695
    %v756 = vpow.pop %v755
    %v757 = vadd.f32 %v756, 1.0
    %v758 = vrcp.pop %v757
    %v759 = vmul.f32 %v757, %v758
    %v760 = vsub.f32 1.0, %v759
    %v761 = vmul.f32 %v758, %v760
    %v762 = vadd.f32 %v758, %v761
    %vm763 = vweird.f32 %v757
    %vm764 = vweird.f32 %v758
    %vm765 = vmor %vm763, %vm764
    %v766 = vsel %vm765, %v758, %v762
    %v767 = vand.u32 2147483647, %v757
    %vm768 = vcmp.eq.f32.partialorder %v767, 8.507059e+37
    %v769 = vand.u32 %v757, 2147483648
    %v770 = vor.u32 1.1754944e-38, %v769
    %v771 = vsel %vm768, %v770, %v766
    %v772 = vmul.f32 1.0, %v771
    %v773 = vtanh.pop %v716
    %v774 = vmul.f32 %v772, %v644
    %776 = vrot.lane.b32.xlu0 %v773, 64
    %v777 = vpop.permute.xlu0 %776
    %v779 = vmul.f32 %v772, %v777
    %781 = vrot.lane.b32.xlu0 %v779, 32
    %v782 = vpop.permute.xlu0 %781
    %v784 = vadd.f32 %v774, %v782
    %v785 = vtanh.pop %v784
    %787 = vrot.lane.b32.xlu0 %v785, 64
    %v788 = vpop.permute.xlu0 %787
    %v790 = vmul.f32 %v772, %v788
    %792 = vrot.lane.b32.xlu0 %v753, 32
    %v793 = vpop.permute.xlu0 %792
    %795 = vst.msk [vmem:[#allocation4 + $0x6] sm:$0x3] %vm374, %v793
    %797 = vrot.lane.b32.xlu0 %v790, 32
    %v798 = vpop.permute.xlu0 %797
    %800 = vst.msk [vmem:[#allocation5 + $0x8] sm:$0x3] %vm374, %v798
    %v801 = vld [vmem:[#allocation2 + $0x8] sm:$0x3]
    %v802 = vld [vmem:[#allocation11] sm:$0xff]
    %v803 = vld [vmem:[#allocation11 + $0x8] sm:$0xff]
    %v804 = vld [vmem:[#allocation11 + $0x10] sm:$0xff]
    %v805 = vld [vmem:[#allocation11 + $0x18] sm:$0xff]
    %v806 = vsel %vm180, %v793, 0
    %808 = vmatpush.msra.mxu0 0.0
    %809 = vmatpush.msra.mxu0 0.0
    %810 = vmatpush.msra.mxu0 0.0
    %811 = vmatpush.msra.mxu0 0.0
    %812 = vmatpush.msra.mxu0 0.0
    %813 = vmatpush.msra.mxu0 0.0
    %814 = vmatpush.msra.mxu0 0.0
    %815 = vmatpush.msra.mxu0 0.0
    %816 = vmatpush.msra.mxu0 0.0
    %817 = vmatpush.msra.mxu0 0.0
    %818 = vmatpush.msra.mxu0 0.0
    %819 = vmatpush.msra.mxu0 0.0
    %820 = vmatpush.msra.mxu0 %v805
    %821 = vmatpush.msra.mxu0 %v804
    %822 = vmatpush.msra.mxu0 %v803
    %823 = vmatpush.msra.mxu0 %v802
    %824 = vmatmul.f32.gmra.mxu0 %v806
    %v825 = vpop.f32.mrf.mxu0
    %v826 = vadd.f32 0.0, %v825
    %827 = vdwg.mxu0
    %v828 = vadd.f32 %v801, %v826
    %v829 = vld [vmem:[#allocation3 + $0x6] sm:$0x3]
    %v830 = vld [vmem:[#allocation12] sm:$0xff]
    %v831 = vld [vmem:[#allocation12 + $0x8] sm:$0xff]
    %v832 = vld [vmem:[#allocation12 + $0x10] sm:$0xff]
    %v833 = vld [vmem:[#allocation12 + $0x18] sm:$0xff]
    %v834 = vsel %vm180, %v798, 0
    %836 = vmatpush.msra.mxu0 0.0
    %837 = vmatpush.msra.mxu0 0.0
    %838 = vmatpush.msra.mxu0 0.0
    %839 = vmatpush.msra.mxu0 0.0
    %840 = vmatpush.msra.mxu0 0.0
    %841 = vmatpush.msra.mxu0 0.0
    %842 = vmatpush.msra.mxu0 0.0
    %843 = vmatpush.msra.mxu0 0.0
    %844 = vmatpush.msra.mxu0 0.0
    %845 = vmatpush.msra.mxu0 0.0
    %846 = vmatpush.msra.mxu0 0.0
    %847 = vmatpush.msra.mxu0 0.0
    %848 = vmatpush.msra.mxu0 %v833
    %849 = vmatpush.msra.mxu0 %v832
    %850 = vmatpush.msra.mxu0 %v831
    %851 = vmatpush.msra.mxu0 %v830
    %852 = vmatmul.f32.gmra.mxu0 %v834
    %v853 = vpop.f32.mrf.mxu0
    %v854 = vadd.f32 0.0, %v853
    %855 = vdwg.mxu0
    %v856 = vadd.f32 %v829, %v854
    %v857 = vxor.u32 %v828, 2147483648
    %v858 = vmul.f32 %v857, 1.442695
    %v859 = vpow.pop %v858
    %v860 = vadd.f32 %v859, 1.0
    %v861 = vrcp.pop %v860
    %v862 = vmul.f32 %v860, %v861
    %v863 = vsub.f32 1.0, %v862
    %v864 = vmul.f32 %v861, %v863
    %v865 = vadd.f32 %v861, %v864
    %vm866 = vweird.f32 %v860
    %vm867 = vweird.f32 %v861
    %vm868 = vmor %vm866, %vm867
    %v869 = vsel %vm868, %v861, %v865
    %v870 = vand.u32 2147483647, %v860
    %vm871 = vcmp.eq.f32.partialorder %v870, 8.507059e+37
    %v872 = vand.u32 %v860, 2147483648
    %v873 = vor.u32 1.1754944e-38, %v872
    %v874 = vsel %vm871, %v873, %v869
    %v875 = vmul.f32 1.0, %v874
    %v876 = vtanh.pop %v828
    %v877 = vmul.f32 %v875, %v747
    %879 = vrot.lane.b32.xlu0 %v876, 64
    %v880 = vpop.permute.xlu0 %879
    %v882 = vmul.f32 %v875, %v880
    %884 = vrot.lane.b32.xlu0 %v882, 32
    %v885 = vpop.permute.xlu0 %884
    %v887 = vadd.f32 %v877, %v885
    %v888 = vtanh.pop %v887
    %890 = vrot.lane.b32.xlu0 %v888, 64
    %v891 = vpop.permute.xlu0 %890
    %v893 = vmul.f32 %v875, %v891
    %v894 = vxor.u32 %v856, 2147483648
    %v895 = vmul.f32 %v894, 1.442695
    %v896 = vpow.pop %v895
    %v897 = vadd.f32 %v896, 1.0
    %v898 = vrcp.pop %v897
    %v899 = vmul.f32 %v897, %v898
    %v900 = vsub.f32 1.0, %v899
    %v901 = vmul.f32 %v898, %v900
    %v902 = vadd.f32 %v898, %v901
    %vm903 = vweird.f32 %v897
    %vm904 = vweird.f32 %v898
    %vm905 = vmor %vm903, %vm904
    %v906 = vsel %vm905, %v898, %v902
    %v907 = vand.u32 2147483647, %v897
    %vm908 = vcmp.eq.f32.partialorder %v907, 8.507059e+37
    %v909 = vand.u32 %v897, 2147483648
    %v910 = vor.u32 1.1754944e-38, %v909
    %v911 = vsel %vm908, %v910, %v906
    %v912 = vmul.f32 1.0, %v911
    %v913 = vtanh.pop %v856
    %v914 = vmul.f32 %v912, %v784
    %916 = vrot.lane.b32.xlu0 %v913, 64
    %v917 = vpop.permute.xlu0 %916
    %v919 = vmul.f32 %v912, %v917
    %921 = vrot.lane.b32.xlu0 %v919, 32
    %v922 = vpop.permute.xlu0 %921
    %v924 = vadd.f32 %v914, %v922
    %v925 = vtanh.pop %v924
    %927 = vrot.lane.b32.xlu0 %v925, 64
    %v928 = vpop.permute.xlu0 %927
    %v930 = vmul.f32 %v912, %v928
    %932 = vrot.lane.b32.xlu0 %v893, 32
    %v933 = vpop.permute.xlu0 %932
    %935 = vst.msk [vmem:[#allocation4 + $0x8] sm:$0x3] %vm374, %v933
    %937 = vrot.lane.b32.xlu0 %v930, 32
    %v938 = vpop.permute.xlu0 %937
    %940 = vst.msk [vmem:[#allocation5 + $0x6] sm:$0x3] %vm374, %v938
    %v941 = vld [vmem:[#allocation2 + $0xa] sm:$0x3]
    %v942 = vld [vmem:[#allocation11] sm:$0xff]
    %v943 = vld [vmem:[#allocation11 + $0x8] sm:$0xff]
    %v944 = vld [vmem:[#allocation11 + $0x10] sm:$0xff]
    %v945 = vld [vmem:[#allocation11 + $0x18] sm:$0xff]
    %v946 = vsel %vm180, %v933, 0
    %948 = vmatpush.msra.mxu0 0.0
    %949 = vmatpush.msra.mxu0 0.0
    %950 = vmatpush.msra.mxu0 0.0
    %951 = vmatpush.msra.mxu0 0.0
    %952 = vmatpush.msra.mxu0 0.0
    %953 = vmatpush.msra.mxu0 0.0
    %954 = vmatpush.msra.mxu0 0.0
    %955 = vmatpush.msra.mxu0 0.0
    %956 = vmatpush.msra.mxu0 0.0
    %957 = vmatpush.msra.mxu0 0.0
    %958 = vmatpush.msra.mxu0 0.0
    %959 = vmatpush.msra.mxu0 0.0
    %960 = vmatpush.msra.mxu0 %v945
    %961 = vmatpush.msra.mxu0 %v944
    %962 = vmatpush.msra.mxu0 %v943
    %963 = vmatpush.msra.mxu0 %v942
    %964 = vmatmul.f32.gmra.mxu0 %v946
    %v965 = vpop.f32.mrf.mxu0
    %v966 = vadd.f32 0.0, %v965
    %967 = vdwg.mxu0
    %v968 = vadd.f32 %v941, %v966
    %v969 = vld [vmem:[#allocation3 + $0x4] sm:$0x3]
    %v970 = vld [vmem:[#allocation12] sm:$0xff]
    %v971 = vld [vmem:[#allocation12 + $0x8] sm:$0xff]
    %v972 = vld [vmem:[#allocation12 + $0x10] sm:$0xff]
    %v973 = vld [vmem:[#allocation12 + $0x18] sm:$0xff]
    %v974 = vsel %vm180, %v938, 0
    %976 = vmatpush.msra.mxu0 0.0
    %977 = vmatpush.msra.mxu0 0.0
    %978 = vmatpush.msra.mxu0 0.0
    %979 = vmatpush.msra.mxu0 0.0
    %980 = vmatpush.msra.mxu0 0.0
    %981 = vmatpush.msra.mxu0 0.0
    %982 = vmatpush.msra.mxu0 0.0
    %983 = vmatpush.msra.mxu0 0.0
    %984 = vmatpush.msra.mxu0 0.0
    %985 = vmatpush.msra.mxu0 0.0
    %986 = vmatpush.msra.mxu0 0.0
    %987 = vmatpush.msra.mxu0 0.0
    %988 = vmatpush.msra.mxu0 %v973
    %989 = vmatpush.msra.mxu0 %v972
    %990 = vmatpush.msra.mxu0 %v971
    %991 = vmatpush.msra.mxu0 %v970
    %992 = vmatmul.f32.gmra.mxu0 %v974
    %v993 = vpop.f32.mrf.mxu0
    %v994 = vadd.f32 0.0, %v993
    %995 = vdwg.mxu0
    %v996 = vadd.f32 %v969, %v994
    %v997 = vxor.u32 %v968, 2147483648
    %v998 = vmul.f32 %v997, 1.442695
    %v999 = vpow.pop %v998
    %v1000 = vadd.f32 %v999, 1.0
    %v1001 = vrcp.pop %v1000
    %v1002 = vmul.f32 %v1000, %v1001
    %v1003 = vsub.f32 1.0, %v1002
    %v1004 = vmul.f32 %v1001, %v1003
    %v1005 = vadd.f32 %v1001, %v1004
    %vm1006 = vweird.f32 %v1000
    %vm1007 = vweird.f32 %v1001
    %vm1008 = vmor %vm1006, %vm1007
    %v1009 = vsel %vm1008, %v1001, %v1005
    %v1010 = vand.u32 2147483647, %v1000
    %vm1011 = vcmp.eq.f32.partialorder %v1010, 8.507059e+37
    %v1012 = vand.u32 %v1000, 2147483648
    %v1013 = vor.u32 1.1754944e-38, %v1012
    %v1014 = vsel %vm1011, %v1013, %v1009
    %v1015 = vmul.f32 1.0, %v1014
    %v1016 = vtanh.pop %v968
    %v1017 = vmul.f32 %v1015, %v887
    %1019 = vrot.lane.b32.xlu0 %v1016, 64
    %v1020 = vpop.permute.xlu0 %1019
    %v1022 = vmul.f32 %v1015, %v1020
    %1024 = vrot.lane.b32.xlu0 %v1022, 32
    %v1025 = vpop.permute.xlu0 %1024
    %v1027 = vadd.f32 %v1017, %v1025
    %v1028 = vtanh.pop %v1027
    %1030 = vrot.lane.b32.xlu0 %v1028, 64
    %v1031 = vpop.permute.xlu0 %1030
    %v1033 = vmul.f32 %v1015, %v1031
    %v1034 = vxor.u32 %v996, 2147483648
    %v1035 = vmul.f32 %v1034, 1.442695
    %v1036 = vpow.pop %v1035
    %v1037 = vadd.f32 %v1036, 1.0
    %v1038 = vrcp.pop %v1037
    %v1039 = vmul.f32 %v1037, %v1038
    %v1040 = vsub.f32 1.0, %v1039
    %v1041 = vmul.f32 %v1038, %v1040
    %v1042 = vadd.f32 %v1038, %v1041
    %vm1043 = vweird.f32 %v1037
    %vm1044 = vweird.f32 %v1038
    %vm1045 = vmor %vm1043, %vm1044
    %v1046 = vsel %vm1045, %v1038, %v1042
    %v1047 = vand.u32 2147483647, %v1037
    %vm1048 = vcmp.eq.f32.partialorder %v1047, 8.507059e+37
    %v1049 = vand.u32 %v1037, 2147483648
    %v1050 = vor.u32 1.1754944e-38, %v1049
    %v1051 = vsel %vm1048, %v1050, %v1046
    %v1052 = vmul.f32 1.0, %v1051
    %v1053 = vtanh.pop %v996
    %v1054 = vmul.f32 %v1052, %v924
    %1056 = vrot.lane.b32.xlu0 %v1053, 64
    %v1057 = vpop.permute.xlu0 %1056
    %v1059 = vmul.f32 %v1052, %v1057
    %1061 = vrot.lane.b32.xlu0 %v1059, 32
    %v1062 = vpop.permute.xlu0 %1061
    %v1064 = vadd.f32 %v1054, %v1062
    %v1065 = vtanh.pop %v1064
    %1067 = vrot.lane.b32.xlu0 %v1065, 64
    %v1068 = vpop.permute.xlu0 %1067
    %v1070 = vmul.f32 %v1052, %v1068
    %1072 = vrot.lane.b32.xlu0 %v1033, 32
    %v1073 = vpop.permute.xlu0 %1072
    %1075 = vst.msk [vmem:[#allocation4 + $0xa] sm:$0x3] %vm374, %v1073
    %1077 = vrot.lane.b32.xlu0 %v1070, 32
    %v1078 = vpop.permute.xlu0 %1077
    %1080 = vst.msk [vmem:[#allocation5 + $0x4] sm:$0x3] %vm374, %v1078
    %v1081 = vld [vmem:[#allocation2 + $0xc] sm:$0x3]
    %v1082 = vld [vmem:[#allocation11] sm:$0xff]
    %v1083 = vld [vmem:[#allocation11 + $0x8] sm:$0xff]
    %v1084 = vld [vmem:[#allocation11 + $0x10] sm:$0xff]
    %v1085 = vld [vmem:[#allocation11 + $0x18] sm:$0xff]
    %v1086 = vsel %vm180, %v1073, 0
    %1088 = vmatpush.msra.mxu0 0.0
    %1089 = vmatpush.msra.mxu0 0.0
    %1090 = vmatpush.msra.mxu0 0.0
    %1091 = vmatpush.msra.mxu0 0.0
    %1092 = vmatpush.msra.mxu0 0.0
    %1093 = vmatpush.msra.mxu0 0.0
    %1094 = vmatpush.msra.mxu0 0.0
    %1095 = vmatpush.msra.mxu0 0.0
    %1096 = vmatpush.msra.mxu0 0.0
    %1097 = vmatpush.msra.mxu0 0.0
    %1098 = vmatpush.msra.mxu0 0.0
    %1099 = vmatpush.msra.mxu0 0.0
    %1100 = vmatpush.msra.mxu0 %v1085
    %1101 = vmatpush.msra.mxu0 %v1084
    %1102 = vmatpush.msra.mxu0 %v1083
    %1103 = vmatpush.msra.mxu0 %v1082
    %1104 = vmatmul.f32.gmra.mxu0 %v1086
    %v1105 = vpop.f32.mrf.mxu0
    %v1106 = vadd.f32 0.0, %v1105
    %1107 = vdwg.mxu0
    %v1108 = vadd.f32 %v1081, %v1106
    %v1109 = vld [vmem:[#allocation3 + $0x2] sm:$0x3]
    %v1110 = vld [vmem:[#allocation12] sm:$0xff]
    %v1111 = vld [vmem:[#allocation12 + $0x8] sm:$0xff]
    %v1112 = vld [vmem:[#allocation12 + $0x10] sm:$0xff]
    %v1113 = vld [vmem:[#allocation12 + $0x18] sm:$0xff]
    %v1114 = vsel %vm180, %v1078, 0
    %1116 = vmatpush.msra.mxu0 0.0
    %1117 = vmatpush.msra.mxu0 0.0
    %1118 = vmatpush.msra.mxu0 0.0
    %1119 = vmatpush.msra.mxu0 0.0
    %1120 = vmatpush.msra.mxu0 0.0
    %1121 = vmatpush.msra.mxu0 0.0
    %1122 = vmatpush.msra.mxu0 0.0
    %1123 = vmatpush.msra.mxu0 0.0
    %1124 = vmatpush.msra.mxu0 0.0
    %1125 = vmatpush.msra.mxu0 0.0
    %1126 = vmatpush.msra.mxu0 0.0
    %1127 = vmatpush.msra.mxu0 0.0
    %1128 = vmatpush.msra.mxu0 %v1113
    %1129 = vmatpush.msra.mxu0 %v1112
    %1130 = vmatpush.msra.mxu0 %v1111
    %1131 = vmatpush.msra.mxu0 %v1110
    %1132 = vmatmul.f32.gmra.mxu0 %v1114
    %v1133 = vpop.f32.mrf.mxu0
    %v1134 = vadd.f32 0.0, %v1133
    %1135 = vdwg.mxu0
    %v1136 = vadd.f32 %v1109, %v1134
    %v1137 = vxor.u32 %v1108, 2147483648
    %v1138 = vmul.f32 %v1137, 1.442695
    %v1139 = vpow.pop %v1138
    %v1140 = vadd.f32 %v1139, 1.0
    %v1141 = vrcp.pop %v1140
    %v1142 = vmul.f32 %v1140, %v1141
    %v1143 = vsub.f32 1.0, %v1142
    %v1144 = vmul.f32 %v1141, %v1143
    %v1145 = vadd.f32 %v1141, %v1144
    %vm1146 = vweird.f32 %v1140
    %vm1147 = vweird.f32 %v1141
    %vm1148 = vmor %vm1146, %vm1147
    %v1149 = vsel %vm1148, %v1141, %v1145
    %v1150 = vand.u32 2147483647, %v1140
    %vm1151 = vcmp.eq.f32.partialorder %v1150, 8.507059e+37
    %v1152 = vand.u32 %v1140, 2147483648
    %v1153 = vor.u32 1.1754944e-38, %v1152
    %v1154 = vsel %vm1151, %v1153, %v1149
    %v1155 = vmul.f32 1.0, %v1154
    %v1156 = vtanh.pop %v1108
    %v1157 = vmul.f32 %v1155, %v1027
    %1159 = vrot.lane.b32.xlu0 %v1156, 64
    %v1160 = vpop.permute.xlu0 %1159
    %v1162 = vmul.f32 %v1155, %v1160
    %1164 = vrot.lane.b32.xlu0 %v1162, 32
    %v1165 = vpop.permute.xlu0 %1164
    %v1167 = vadd.f32 %v1157, %v1165
    %v1168 = vtanh.pop %v1167
    %1170 = vrot.lane.b32.xlu0 %v1168, 64
    %v1171 = vpop.permute.xlu0 %1170
    %v1173 = vmul.f32 %v1155, %v1171
    %v1174 = vxor.u32 %v1136, 2147483648
    %v1175 = vmul.f32 %v1174, 1.442695
    %v1176 = vpow.pop %v1175
    %v1177 = vadd.f32 %v1176, 1.0
    %v1178 = vrcp.pop %v1177
    %v1179 = vmul.f32 %v1177, %v1178
    %v1180 = vsub.f32 1.0, %v1179
    %v1181 = vmul.f32 %v1178, %v1180
    %v1182 = vadd.f32 %v1178, %v1181
    %vm1183 = vweird.f32 %v1177
    %vm1184 = vweird.f32 %v1178
    %vm1185 = vmor %vm1183, %vm1184
    %v1186 = vsel %vm1185, %v1178, %v1182
    %v1187 = vand.u32 2147483647, %v1177
    %vm1188 = vcmp.eq.f32.partialorder %v1187, 8.507059e+37
    %v1189 = vand.u32 %v1177, 2147483648
    %v1190 = vor.u32 1.1754944e-38, %v1189
    %v1191 = vsel %vm1188, %v1190, %v1186
    %v1192 = vmul.f32 1.0, %v1191
    %v1193 = vtanh.pop %v1136
    %v1194 = vmul.f32 %v1192, %v1064
    %1196 = vrot.lane.b32.xlu0 %v1193, 64
    %v1197 = vpop.permute.xlu0 %1196
    %v1199 = vmul.f32 %v1192, %v1197
    %1201 = vrot.lane.b32.xlu0 %v1199, 32
    %v1202 = vpop.permute.xlu0 %1201
    %v1204 = vadd.f32 %v1194, %v1202
    %v1205 = vtanh.pop %v1204
    %1207 = vrot.lane.b32.xlu0 %v1205, 64
    %v1208 = vpop.permute.xlu0 %1207
    %v1210 = vmul.f32 %v1192, %v1208
    %1212 = vrot.lane.b32.xlu0 %v1173, 32
    %v1213 = vpop.permute.xlu0 %1212
    %1215 = vst.msk [vmem:[#allocation4 + $0xc] sm:$0x3] %vm374, %v1213
    %1217 = vrot.lane.b32.xlu0 %v1210, 32
    %v1218 = vpop.permute.xlu0 %1217
    %1220 = vst.msk [vmem:[#allocation5 + $0x2] sm:$0x3] %vm374, %v1218
    %v1221 = vld [vmem:[#allocation2 + $0xe] sm:$0x3]
    %v1222 = vld [vmem:[#allocation11] sm:$0xff]
    %v1223 = vld [vmem:[#allocation11 + $0x8] sm:$0xff]
    %v1224 = vld [vmem:[#allocation11 + $0x10] sm:$0xff]
    %v1225 = vld [vmem:[#allocation11 + $0x18] sm:$0xff]
    %v1226 = vsel %vm180, %v1213, 0
    %1228 = vmatpush.msra.mxu0 0.0
    %1229 = vmatpush.msra.mxu0 0.0
    %1230 = vmatpush.msra.mxu0 0.0
    %1231 = vmatpush.msra.mxu0 0.0
    %1232 = vmatpush.msra.mxu0 0.0
    %1233 = vmatpush.msra.mxu0 0.0
    %1234 = vmatpush.msra.mxu0 0.0
    %1235 = vmatpush.msra.mxu0 0.0
    %1236 = vmatpush.msra.mxu0 0.0
    %1237 = vmatpush.msra.mxu0 0.0
    %1238 = vmatpush.msra.mxu0 0.0
    %1239 = vmatpush.msra.mxu0 0.0
    %1240 = vmatpush.msra.mxu0 %v1225
    %1241 = vmatpush.msra.mxu0 %v1224
    %1242 = vmatpush.msra.mxu0 %v1223
    %1243 = vmatpush.msra.mxu0 %v1222
    %1244 = vmatmul.f32.gmra.mxu0 %v1226
    %v1245 = vpop.f32.mrf.mxu0
    %v1246 = vadd.f32 0.0, %v1245
    %1247 = vdwg.mxu0
    %v1248 = vadd.f32 %v1221, %v1246
    %v1249 = vld [vmem:[#allocation3] sm:$0x3]
    %v1250 = vld [vmem:[#allocation12] sm:$0xff]
    %v1251 = vld [vmem:[#allocation12 + $0x8] sm:$0xff]
    %v1252 = vld [vmem:[#allocation12 + $0x10] sm:$0xff]
    %v1253 = vld [vmem:[#allocation12 + $0x18] sm:$0xff]
    %v1254 = vsel %vm180, %v1218, 0
    %1256 = vmatpush.msra.mxu0 0.0
    %1257 = vmatpush.msra.mxu0 0.0
    %1258 = vmatpush.msra.mxu0 0.0
    %1259 = vmatpush.msra.mxu0 0.0
    %1260 = vmatpush.msra.mxu0 0.0
    %1261 = vmatpush.msra.mxu0 0.0
    %1262 = vmatpush.msra.mxu0 0.0
    %1263 = vmatpush.msra.mxu0 0.0
    %1264 = vmatpush.msra.mxu0 0.0
    %1265 = vmatpush.msra.mxu0 0.0
    %1266 = vmatpush.msra.mxu0 0.0
    %1267 = vmatpush.msra.mxu0 0.0
    %1268 = vmatpush.msra.mxu0 %v1253
    %1269 = vmatpush.msra.mxu0 %v1252
    %1270 = vmatpush.msra.mxu0 %v1251
    %1271 = vmatpush.msra.mxu0 %v1250
    %1272 = vmatmul.f32.gmra.mxu0 %v1254
    %v1273 = vpop.f32.mrf.mxu0
    %v1274 = vadd.f32 0.0, %v1273
    %1275 = vdwg.mxu0
    %v1276 = vadd.f32 %v1249, %v1274
    %v1277 = vxor.u32 %v1248, 2147483648
    %v1278 = vmul.f32 %v1277, 1.442695
    %v1279 = vpow.pop %v1278
    %v1280 = vadd.f32 %v1279, 1.0
    %v1281 = vrcp.pop %v1280
    %v1282 = vmul.f32 %v1280, %v1281
    %v1283 = vsub.f32 1.0, %v1282
    %v1284 = vmul.f32 %v1281, %v1283
    %v1285 = vadd.f32 %v1281, %v1284
    %vm1286 = vweird.f32 %v1280
    %vm1287 = vweird.f32 %v1281
    %vm1288 = vmor %vm1286, %vm1287
    %v1289 = vsel %vm1288, %v1281, %v1285
    %v1290 = vand.u32 2147483647, %v1280
    %vm1291 = vcmp.eq.f32.partialorder %v1290, 8.507059e+37
    %v1292 = vand.u32 %v1280, 2147483648
    %v1293 = vor.u32 1.1754944e-38, %v1292
    %v1294 = vsel %vm1291, %v1293, %v1289
    %v1295 = vmul.f32 1.0, %v1294
    %v1296 = vtanh.pop %v1248
    %v1297 = vmul.f32 %v1295, %v1167
    %1299 = vrot.lane.b32.xlu0 %v1296, 64
    %v1300 = vpop.permute.xlu0 %1299
    %v1302 = vmul.f32 %v1295, %v1300
    %1304 = vrot.lane.b32.xlu0 %v1302, 32
    %v1305 = vpop.permute.xlu0 %1304
    %v1307 = vadd.f32 %v1297, %v1305
    %v1308 = vtanh.pop %v1307
    %1310 = vrot.lane.b32.xlu0 %v1308, 64
    %v1311 = vpop.permute.xlu0 %1310
    %v1313 = vmul.f32 %v1295, %v1311
    %v1314 = vxor.u32 %v1276, 2147483648
    %v1315 = vmul.f32 %v1314, 1.442695
    %v1316 = vpow.pop %v1315
    %v1317 = vadd.f32 %v1316, 1.0
    %v1318 = vrcp.pop %v1317
    %v1319 = vmul.f32 %v1317, %v1318
    %v1320 = vsub.f32 1.0, %v1319
    %v1321 = vmul.f32 %v1318, %v1320
    %v1322 = vadd.f32 %v1318, %v1321
    %vm1323 = vweird.f32 %v1317
    %vm1324 = vweird.f32 %v1318
    %vm1325 = vmor %vm1323, %vm1324
    %v1326 = vsel %vm1325, %v1318, %v1322
    %v1327 = vand.u32 2147483647, %v1317
    %vm1328 = vcmp.eq.f32.partialorder %v1327, 8.507059e+37
    %v1329 = vand.u32 %v1317, 2147483648
    %v1330 = vor.u32 1.1754944e-38, %v1329
    %v1331 = vsel %vm1328, %v1330, %v1326
    %v1332 = vmul.f32 1.0, %v1331
    %v1333 = vtanh.pop %v1276
    %v1334 = vmul.f32 %v1332, %v1204
    %1336 = vrot.lane.b32.xlu0 %v1333, 64
    %v1337 = vpop.permute.xlu0 %1336
    %v1339 = vmul.f32 %v1332, %v1337
    %1341 = vrot.lane.b32.xlu0 %v1339, 32
    %v1342 = vpop.permute.xlu0 %1341
    %v1344 = vadd.f32 %v1334, %v1342
    %v1345 = vtanh.pop %v1344
    %1347 = vrot.lane.b32.xlu0 %v1345, 64
    %v1348 = vpop.permute.xlu0 %1347
    %v1350 = vmul.f32 %v1332, %v1348
    %1352 = vrot.lane.b32.xlu0 %v1313, 32
    %v1353 = vpop.permute.xlu0 %1352
    %1355 = vst.msk [vmem:[#allocation4 + $0xe] sm:$0x3] %vm374, %v1353
    %1357 = vrot.lane.b32.xlu0 %v1350, 32
    %v1358 = vpop.permute.xlu0 %1357
    %1360 = vst.msk [vmem:[#allocation5] sm:$0x3] %vm374, %v1358
    %v1361 = vld [vmem:[#allocation4] sm:$0xff]
    %v1362 = vld [vmem:[#allocation4 + $0x8] sm:$0xff]
    %v1363 = vld [vmem:[#allocation5] sm:$0xff]
    %v1364 = vld [vmem:[#allocation5 + $0x8] sm:$0xff]
    %v1365 = vld [vmem:[%s7] sm:$0xff]
    %v1366 = vld [vmem:[%s7 + $0x8] sm:$0xff]
    %v1367 = vld [vmem:[%s7 + $0x10] sm:$0xff]
    %v1368 = vld [vmem:[%s7 + $0x18] sm:$0xff]
    %v1369 = vld [vmem:[%s7 + $0x20] sm:$0xff]
    %v1370 = vld [vmem:[%s7 + $0x28] sm:$0xff]
    %v1371 = vld [vmem:[%s7 + $0x30] sm:$0xff]
    %v1372 = vld [vmem:[%s7 + $0x38] sm:$0xff]
    %v1374 = vsel %vm180, %v1363, 0
    %v1377 = vsel %vm180, %v1364, 0
    %1379 = vmatpush.msra.mxu0 0.0
    %1380 = vmatpush.msra.mxu0 0.0
    %1381 = vmatpush.msra.mxu0 0.0
    %1382 = vmatpush.msra.mxu0 0.0
    %1383 = vmatpush.msra.mxu0 0.0
    %1384 = vmatpush.msra.mxu0 0.0
    %1385 = vmatpush.msra.mxu0 0.0
    %1386 = vmatpush.msra.mxu0 0.0
    %1387 = vmatpush.msra.mxu0 0.0
    %1388 = vmatpush.msra.mxu0 0.0
    %1389 = vmatpush.msra.mxu0 0.0
    %1390 = vmatpush.msra.mxu0 0.0
    %1391 = vmatpush.msra.mxu0 %v1372
    %1392 = vmatpush.msra.mxu0 %v1371
    %1393 = vmatpush.msra.mxu0 %v1370
    %1394 = vmatpush.msra.mxu0 %v1369
    %1395 = vmatmul.f32.gmra.mxu0 %v1374
    %v1396 = vpop.f32.mrf.mxu0
    %v1397 = vadd.f32 0.0, %v1396
    %1398 = vmatmul.f32.gmra.mxu0 %v1377
    %v1399 = vpop.f32.mrf.mxu0
    %v1400 = vadd.f32 0.0, %v1399
    %1401 = vdwg.mxu0
    %v1403 = vsel %vm180, %v1361, 0
    %v1406 = vsel %vm180, %v1362, 0
    %1408 = vmatpush.msra.mxu0 0.0
    %1409 = vmatpush.msra.mxu0 0.0
    %1410 = vmatpush.msra.mxu0 0.0
    %1411 = vmatpush.msra.mxu0 0.0
    %1412 = vmatpush.msra.mxu0 0.0
    %1413 = vmatpush.msra.mxu0 0.0
    %1414 = vmatpush.msra.mxu0 0.0
    %1415 = vmatpush.msra.mxu0 0.0
    %1416 = vmatpush.msra.mxu0 0.0
    %1417 = vmatpush.msra.mxu0 0.0
    %1418 = vmatpush.msra.mxu0 0.0
    %1419 = vmatpush.msra.mxu0 0.0
    %1420 = vmatpush.msra.mxu0 %v1368
    %1421 = vmatpush.msra.mxu0 %v1367
    %1422 = vmatpush.msra.mxu0 %v1366
    %1423 = vmatpush.msra.mxu0 %v1365
    %1424 = vmatmul.f32.gmra.mxu0 %v1403
    %v1425 = vpop.f32.mrf.mxu0
    %v1426 = vadd.f32 %v1397, %v1425
    %1427 = vmatmul.f32.gmra.mxu0 %v1406
    %v1428 = vpop.f32.mrf.mxu0
    %v1429 = vadd.f32 %v1400, %v1428
    %1430 = vdwg.mxu0
    %v1431 = vld [vmem:[#allocation14] sm:$0xff]
    %v1432 = vld [vmem:[#allocation14 + $0x8] sm:$0xff]
    %v1433 = vld [vmem:[#allocation14 + $0x10] sm:$0xff]
    %v1434 = vld [vmem:[#allocation14 + $0x18] sm:$0xff]
    %v1435 = vld [vmem:[#allocation14 + $0x20] sm:$0xff]
    %v1436 = vld [vmem:[#allocation14 + $0x28] sm:$0xff]
    %v1437 = vld [vmem:[#allocation14 + $0x30] sm:$0xff]
    %v1438 = vld [vmem:[#allocation14 + $0x38] sm:$0xff]
    %1439 = vmatpush.msra.mxu0 0.0
    %1440 = vmatpush.msra.mxu0 0.0
    %1441 = vmatpush.msra.mxu0 0.0
    %1442 = vmatpush.msra.mxu0 0.0
    %1443 = vmatpush.msra.mxu0 0.0
    %1444 = vmatpush.msra.mxu0 0.0
    %1445 = vmatpush.msra.mxu0 0.0
    %1446 = vmatpush.msra.mxu0 0.0
    %1447 = vmatpush.msra.mxu0 0.0
    %1448 = vmatpush.msra.mxu0 0.0
    %1449 = vmatpush.msra.mxu0 0.0
    %1450 = vmatpush.msra.mxu0 0.0
    %1451 = vmatpush.msra.mxu0 %v1438
    %1452 = vmatpush.msra.mxu0 %v1437
    %1453 = vmatpush.msra.mxu0 %v1436
    %1454 = vmatpush.msra.mxu0 %v1435
    %1455 = vmatmul.f32.gmra.mxu0 %v1374
    %v1456 = vpop.f32.mrf.mxu0
    %v1457 = vadd.f32 0.0, %v1456
    %1458 = vmatmul.f32.gmra.mxu0 %v1377
    %v1459 = vpop.f32.mrf.mxu0
    %v1460 = vadd.f32 0.0, %v1459
    %1461 = vdwg.mxu0
    %1462 = vmatpush.msra.mxu0 0.0
    %1463 = vmatpush.msra.mxu0 0.0
    %1464 = vmatpush.msra.mxu0 0.0
    %1465 = vmatpush.msra.mxu0 0.0
    %1466 = vmatpush.msra.mxu0 0.0
    %1467 = vmatpush.msra.mxu0 0.0
    %1468 = vmatpush.msra.mxu0 0.0
    %1469 = vmatpush.msra.mxu0 0.0
    %1470 = vmatpush.msra.mxu0 0.0
    %1471 = vmatpush.msra.mxu0 0.0
    %1472 = vmatpush.msra.mxu0 0.0
    %1473 = vmatpush.msra.mxu0 0.0
    %1474 = vmatpush.msra.mxu0 %v1434
    %1475 = vmatpush.msra.mxu0 %v1433
    %1476 = vmatpush.msra.mxu0 %v1432
    %1477 = vmatpush.msra.mxu0 %v1431
    %1478 = vmatmul.f32.gmra.mxu0 %v1403
    %v1479 = vpop.f32.mrf.mxu0
    %v1480 = vadd.f32 %v1457, %v1479
    %1481 = vmatmul.f32.gmra.mxu0 %v1406
    %v1482 = vpop.f32.mrf.mxu0
    %v1483 = vadd.f32 %v1460, %v1482
    %1484 = vdwg.mxu0
    %v1485 = vld [vmem:[%s11] sm:$0x1]
    %v1487 = vperm.slane %v1485, 0
    %v1489 = vadd.f32 %v1426, %v1487
    %v1490 = vadd.f32 %v1429, %v1487
    %1491 = vst [vmem:[#allocation2] sm:$0xff] %v1489
    %1492 = vst [vmem:[#allocation2 + $0x8] sm:$0xff] %v1490
    %v1493 = vld [vmem:[%s12] sm:$0x1]
    %v1495 = vperm.slane %v1493, 0
    %v1497 = vadd.f32 %v1480, %v1495
    %v1498 = vadd.f32 %v1483, %v1495
    %1499 = vst [vmem:[#allocation3] sm:$0xff] %v1497
    %1500 = vst [vmem:[#allocation3 + $0x8] sm:$0xff] %v1498
    %v1501 = vld [vmem:[#allocation2] sm:$0x3]
    %v1502 = vld [vmem:[#allocation15] sm:$0xff]
    %v1503 = vld [vmem:[#allocation15 + $0x8] sm:$0xff]
    %v1504 = vld [vmem:[#allocation15 + $0x10] sm:$0xff]
    %v1505 = vld [vmem:[#allocation15 + $0x18] sm:$0xff]
    %1506 = vmatpush.msra.mxu0 0.0
    %1507 = vmatpush.msra.mxu0 0.0
    %1508 = vmatpush.msra.mxu0 0.0
    %1509 = vmatpush.msra.mxu0 0.0
    %1510 = vmatpush.msra.mxu0 0.0
    %1511 = vmatpush.msra.mxu0 0.0
    %1512 = vmatpush.msra.mxu0 0.0
    %1513 = vmatpush.msra.mxu0 0.0
    %1514 = vmatpush.msra.mxu0 0.0
    %1515 = vmatpush.msra.mxu0 0.0
    %1516 = vmatpush.msra.mxu0 0.0
    %1517 = vmatpush.msra.mxu0 0.0
    %1518 = vmatpush.msra.mxu0 %v1505
    %1519 = vmatpush.msra.mxu0 %v1504
    %1520 = vmatpush.msra.mxu0 %v1503
    %1521 = vmatpush.msra.mxu0 %v1502
    %1522 = vmatmul.f32.gmra.mxu0 %v247
    %v1523 = vpop.f32.mrf.mxu0
    %v1524 = vadd.f32 0.0, %v1523
    %1525 = vdwg.mxu0
    %v1526 = vadd.f32 %v1501, %v1524
    %v1527 = vld [vmem:[#allocation3 + $0xe] sm:$0x3]
    %v1528 = vld [vmem:[#allocation17] sm:$0xff]
    %v1529 = vld [vmem:[#allocation17 + $0x8] sm:$0xff]
    %v1530 = vld [vmem:[#allocation17 + $0x10] sm:$0xff]
    %v1531 = vld [vmem:[#allocation17 + $0x18] sm:$0xff]
    %1532 = vmatpush.msra.mxu0 0.0
    %1533 = vmatpush.msra.mxu0 0.0
    %1534 = vmatpush.msra.mxu0 0.0
    %1535 = vmatpush.msra.mxu0 0.0
    %1536 = vmatpush.msra.mxu0 0.0
    %1537 = vmatpush.msra.mxu0 0.0
    %1538 = vmatpush.msra.mxu0 0.0
    %1539 = vmatpush.msra.mxu0 0.0
    %1540 = vmatpush.msra.mxu0 0.0
    %1541 = vmatpush.msra.mxu0 0.0
    %1542 = vmatpush.msra.mxu0 0.0
    %1543 = vmatpush.msra.mxu0 0.0
    %1544 = vmatpush.msra.mxu0 %v1531
    %1545 = vmatpush.msra.mxu0 %v1530
    %1546 = vmatpush.msra.mxu0 %v1529
    %1547 = vmatpush.msra.mxu0 %v1528
    %1548 = vmatmul.f32.gmra.mxu0 %v247
    %v1549 = vpop.f32.mrf.mxu0
    %v1550 = vadd.f32 0.0, %v1549
    %1551 = vdwg.mxu0
    %v1552 = vadd.f32 %v1527, %v1550
    %v1553 = vxor.u32 %v1526, 2147483648
    %v1554 = vmul.f32 %v1553, 1.442695
    %v1555 = vpow.pop %v1554
    %v1556 = vadd.f32 %v1555, 1.0
    %v1557 = vrcp.pop %v1556
    %v1558 = vmul.f32 %v1556, %v1557
    %v1559 = vsub.f32 1.0, %v1558
    %v1560 = vmul.f32 %v1557, %v1559
    %v1561 = vadd.f32 %v1557, %v1560
    %vm1562 = vweird.f32 %v1556
    %vm1563 = vweird.f32 %v1557
    %vm1564 = vmor %vm1562, %vm1563
    %v1565 = vsel %vm1564, %v1557, %v1561
    %v1566 = vand.u32 2147483647, %v1556
    %vm1567 = vcmp.eq.f32.partialorder %v1566, 8.507059e+37
    %v1568 = vand.u32 %v1556, 2147483648
    %v1569 = vor.u32 1.1754944e-38, %v1568
    %v1570 = vsel %vm1567, %v1569, %v1565
    %v1571 = vmul.f32 1.0, %v1570
    %v1572 = vtanh.pop %v1526
    %v1573 = vmul.f32 %v1571, 0.0
    %1575 = vrot.lane.b32.xlu0 %v1572, 64
    %v1576 = vpop.permute.xlu0 %1575
    %v1578 = vmul.f32 %v1571, %v1576
    %1580 = vrot.lane.b32.xlu0 %v1578, 32
    %v1581 = vpop.permute.xlu0 %1580
    %v1583 = vadd.f32 %v1573, %v1581
    %v1584 = vtanh.pop %v1583
    %1586 = vrot.lane.b32.xlu0 %v1584, 64
    %v1587 = vpop.permute.xlu0 %1586
    %v1589 = vmul.f32 %v1571, %v1587
    %v1590 = vxor.u32 %v1552, 2147483648
    %v1591 = vmul.f32 %v1590, 1.442695
    %v1592 = vpow.pop %v1591
    %v1593 = vadd.f32 %v1592, 1.0
    %v1594 = vrcp.pop %v1593
    %v1595 = vmul.f32 %v1593, %v1594
    %v1596 = vsub.f32 1.0, %v1595
    %v1597 = vmul.f32 %v1594, %v1596
    %v1598 = vadd.f32 %v1594, %v1597
    %vm1599 = vweird.f32 %v1593
    %vm1600 = vweird.f32 %v1594
    %vm1601 = vmor %vm1599, %vm1600
    %v1602 = vsel %vm1601, %v1594, %v1598
    %v1603 = vand.u32 2147483647, %v1593
    %vm1604 = vcmp.eq.f32.partialorder %v1603, 8.507059e+37
    %v1605 = vand.u32 %v1593, 2147483648
    %v1606 = vor.u32 1.1754944e-38, %v1605
    %v1607 = vsel %vm1604, %v1606, %v1602
    %v1608 = vmul.f32 1.0, %v1607
    %v1609 = vtanh.pop %v1552
    %v1610 = vmul.f32 %v1608, 0.0
    %1612 = vrot.lane.b32.xlu0 %v1609, 64
    %v1613 = vpop.permute.xlu0 %1612
    %v1615 = vmul.f32 %v1608, %v1613
    %1617 = vrot.lane.b32.xlu0 %v1615, 32
    %v1618 = vpop.permute.xlu0 %1617
    %v1620 = vadd.f32 %v1610, %v1618
    %v1621 = vtanh.pop %v1620
    %1623 = vrot.lane.b32.xlu0 %v1621, 64
    %v1624 = vpop.permute.xlu0 %1623
    %v1626 = vmul.f32 %v1608, %v1624
    %v1627 = vld [vmem:[#allocation2 + $0x2] sm:$0x3]
    %1629 = vrot.lane.b32.xlu0 %v1589, 32
    %v1630 = vpop.permute.xlu0 %1629
    %v1631 = vsel %vm180, %v1630, 0
    %1633 = vmatpush.msra.mxu0 0.0
    %1634 = vmatpush.msra.mxu0 0.0
    %1635 = vmatpush.msra.mxu0 0.0
    %1636 = vmatpush.msra.mxu0 0.0
    %1637 = vmatpush.msra.mxu0 0.0
    %1638 = vmatpush.msra.mxu0 0.0
    %1639 = vmatpush.msra.mxu0 0.0
    %1640 = vmatpush.msra.mxu0 0.0
    %1641 = vmatpush.msra.mxu0 0.0
    %1642 = vmatpush.msra.mxu0 0.0
    %1643 = vmatpush.msra.mxu0 0.0
    %1644 = vmatpush.msra.mxu0 0.0
    %1645 = vmatpush.msra.mxu0 %v1505
    %1646 = vmatpush.msra.mxu0 %v1504
    %1647 = vmatpush.msra.mxu0 %v1503
    %1648 = vmatpush.msra.mxu0 %v1502
    %1649 = vmatmul.f32.gmra.mxu0 %v1631
    %v1650 = vpop.f32.mrf.mxu0
    %v1651 = vadd.f32 0.0, %v1650
    %1652 = vdwg.mxu0
    %v1653 = vadd.f32 %v1627, %v1651
    %v1654 = vld [vmem:[#allocation3 + $0xc] sm:$0x3]
    %1656 = vrot.lane.b32.xlu0 %v1626, 32
    %v1657 = vpop.permute.xlu0 %1656
    %v1658 = vsel %vm180, %v1657, 0
    %1660 = vmatpush.msra.mxu0 0.0
    %1661 = vmatpush.msra.mxu0 0.0
    %1662 = vmatpush.msra.mxu0 0.0
    %1663 = vmatpush.msra.mxu0 0.0
    %1664 = vmatpush.msra.mxu0 0.0
    %1665 = vmatpush.msra.mxu0 0.0
    %1666 = vmatpush.msra.mxu0 0.0
    %1667 = vmatpush.msra.mxu0 0.0
    %1668 = vmatpush.msra.mxu0 0.0
    %1669 = vmatpush.msra.mxu0 0.0
    %1670 = vmatpush.msra.mxu0 0.0
    %1671 = vmatpush.msra.mxu0 0.0
    %1672 = vmatpush.msra.mxu0 %v1531
    %1673 = vmatpush.msra.mxu0 %v1530
    %1674 = vmatpush.msra.mxu0 %v1529
    %1675 = vmatpush.msra.mxu0 %v1528
    %1676 = vmatmul.f32.gmra.mxu0 %v1658
    %v1677 = vpop.f32.mrf.mxu0
    %v1678 = vadd.f32 0.0, %v1677
    %1679 = vdwg.mxu0
    %v1680 = vadd.f32 %v1654, %v1678
    %v1681 = vxor.u32 %v1653, 2147483648
    %v1682 = vmul.f32 %v1681, 1.442695
    %v1683 = vpow.pop %v1682
    %v1684 = vadd.f32 %v1683, 1.0
    %v1685 = vrcp.pop %v1684
    %v1686 = vmul.f32 %v1684, %v1685
    %v1687 = vsub.f32 1.0, %v1686
    %v1688 = vmul.f32 %v1685, %v1687
    %v1689 = vadd.f32 %v1685, %v1688
    %vm1690 = vweird.f32 %v1684
    %vm1691 = vweird.f32 %v1685
    %vm1692 = vmor %vm1690, %vm1691
    %v1693 = vsel %vm1692, %v1685, %v1689
    %v1694 = vand.u32 2147483647, %v1684
    %vm1695 = vcmp.eq.f32.partialorder %v1694, 8.507059e+37
    %v1696 = vand.u32 %v1684, 2147483648
    %v1697 = vor.u32 1.1754944e-38, %v1696
    %v1698 = vsel %vm1695, %v1697, %v1693
    %v1699 = vmul.f32 1.0, %v1698
    %v1700 = vtanh.pop %v1653
    %v1701 = vmul.f32 %v1699, %v1583
    %1703 = vrot.lane.b32.xlu0 %v1700, 64
    %v1704 = vpop.permute.xlu0 %1703
    %v1706 = vmul.f32 %v1699, %v1704
    %1708 = vrot.lane.b32.xlu0 %v1706, 32
    %v1709 = vpop.permute.xlu0 %1708
    %v1711 = vadd.f32 %v1701, %v1709
    %v1712 = vtanh.pop %v1711
    %1714 = vrot.lane.b32.xlu0 %v1712, 64
    %v1715 = vpop.permute.xlu0 %1714
    %v1717 = vmul.f32 %v1699, %v1715
    %v1718 = vxor.u32 %v1680, 2147483648
    %v1719 = vmul.f32 %v1718, 1.442695
    %v1720 = vpow.pop %v1719
    %v1721 = vadd.f32 %v1720, 1.0
    %v1722 = vrcp.pop %v1721
    %v1723 = vmul.f32 %v1721, %v1722
    %v1724 = vsub.f32 1.0, %v1723
    %v1725 = vmul.f32 %v1722, %v1724
    %v1726 = vadd.f32 %v1722, %v1725
    %vm1727 = vweird.f32 %v1721
    %vm1728 = vweird.f32 %v1722
    %vm1729 = vmor %vm1727, %vm1728
    %v1730 = vsel %vm1729, %v1722, %v1726
    %v1731 = vand.u32 2147483647, %v1721
    %vm1732 = vcmp.eq.f32.partialorder %v1731, 8.507059e+37
    %v1733 = vand.u32 %v1721, 2147483648
    %v1734 = vor.u32 1.1754944e-38, %v1733
    %v1735 = vsel %vm1732, %v1734, %v1730
    %v1736 = vmul.f32 1.0, %v1735
    %v1737 = vtanh.pop %v1680
    %v1738 = vmul.f32 %v1736, %v1620
    %1740 = vrot.lane.b32.xlu0 %v1737, 64
    %v1741 = vpop.permute.xlu0 %1740
    %v1743 = vmul.f32 %v1736, %v1741
    %1745 = vrot.lane.b32.xlu0 %v1743, 32
    %v1746 = vpop.permute.xlu0 %1745
    %v1748 = vadd.f32 %v1738, %v1746
    %v1749 = vtanh.pop %v1748
    %1751 = vrot.lane.b32.xlu0 %v1749, 64
    %v1752 = vpop.permute.xlu0 %1751
    %v1754 = vmul.f32 %v1736, %v1752
    %v1755 = vld [vmem:[#allocation2 + $0x4] sm:$0x3]
    %1757 = vrot.lane.b32.xlu0 %v1717, 32
    %v1758 = vpop.permute.xlu0 %1757
    %v1759 = vsel %vm180, %v1758, 0
    %1761 = vmatpush.msra.mxu0 0.0
    %1762 = vmatpush.msra.mxu0 0.0
    %1763 = vmatpush.msra.mxu0 0.0
    %1764 = vmatpush.msra.mxu0 0.0
    %1765 = vmatpush.msra.mxu0 0.0
    %1766 = vmatpush.msra.mxu0 0.0
    %1767 = vmatpush.msra.mxu0 0.0
    %1768 = vmatpush.msra.mxu0 0.0
    %1769 = vmatpush.msra.mxu0 0.0
    %1770 = vmatpush.msra.mxu0 0.0
    %1771 = vmatpush.msra.mxu0 0.0
    %1772 = vmatpush.msra.mxu0 0.0
    %1773 = vmatpush.msra.mxu0 %v1505
    %1774 = vmatpush.msra.mxu0 %v1504
    %1775 = vmatpush.msra.mxu0 %v1503
    %1776 = vmatpush.msra.mxu0 %v1502
    %1777 = vmatmul.f32.gmra.mxu0 %v1759
    %v1778 = vpop.f32.mrf.mxu0
    %v1779 = vadd.f32 0.0, %v1778
    %1780 = vdwg.mxu0
    %v1781 = vadd.f32 %v1755, %v1779
    %v1782 = vld [vmem:[#allocation3 + $0xa] sm:$0x3]
    %1784 = vrot.lane.b32.xlu0 %v1754, 32
    %v1785 = vpop.permute.xlu0 %1784
    %v1786 = vsel %vm180, %v1785, 0
    %1788 = vmatpush.msra.mxu0 0.0
    %1789 = vmatpush.msra.mxu0 0.0
    %1790 = vmatpush.msra.mxu0 0.0
    %1791 = vmatpush.msra.mxu0 0.0
    %1792 = vmatpush.msra.mxu0 0.0
    %1793 = vmatpush.msra.mxu0 0.0
    %1794 = vmatpush.msra.mxu0 0.0
    %1795 = vmatpush.msra.mxu0 0.0
    %1796 = vmatpush.msra.mxu0 0.0
    %1797 = vmatpush.msra.mxu0 0.0
    %1798 = vmatpush.msra.mxu0 0.0
    %1799 = vmatpush.msra.mxu0 0.0
    %1800 = vmatpush.msra.mxu0 %v1531
    %1801 = vmatpush.msra.mxu0 %v1530
    %1802 = vmatpush.msra.mxu0 %v1529
    %1803 = vmatpush.msra.mxu0 %v1528
    %1804 = vmatmul.f32.gmra.mxu0 %v1786
    %v1805 = vpop.f32.mrf.mxu0
    %v1806 = vadd.f32 0.0, %v1805
    %1807 = vdwg.mxu0
    %v1808 = vadd.f32 %v1782, %v1806
    %v1809 = vxor.u32 %v1781, 2147483648
    %v1810 = vmul.f32 %v1809, 1.442695
    %v1811 = vpow.pop %v1810
    %v1812 = vadd.f32 %v1811, 1.0
    %v1813 = vrcp.pop %v1812
    %v1814 = vmul.f32 %v1812, %v1813
    %v1815 = vsub.f32 1.0, %v1814
    %v1816 = vmul.f32 %v1813, %v1815
    %v1817 = vadd.f32 %v1813, %v1816
    %vm1818 = vweird.f32 %v1812
    %vm1819 = vweird.f32 %v1813
    %vm1820 = vmor %vm1818, %vm1819
    %v1821 = vsel %vm1820, %v1813, %v1817
    %v1822 = vand.u32 2147483647, %v1812
    %vm1823 = vcmp.eq.f32.partialorder %v1822, 8.507059e+37
    %v1824 = vand.u32 %v1812, 2147483648
    %v1825 = vor.u32 1.1754944e-38, %v1824
    %v1826 = vsel %vm1823, %v1825, %v1821
    %v1827 = vmul.f32 1.0, %v1826
    %v1828 = vtanh.pop %v1781
    %v1829 = vmul.f32 %v1827, %v1711
    %1831 = vrot.lane.b32.xlu0 %v1828, 64
    %v1832 = vpop.permute.xlu0 %1831
    %v1834 = vmul.f32 %v1827, %v1832
    %1836 = vrot.lane.b32.xlu0 %v1834, 32
    %v1837 = vpop.permute.xlu0 %1836
    %v1839 = vadd.f32 %v1829, %v1837
    %v1840 = vtanh.pop %v1839
    %1842 = vrot.lane.b32.xlu0 %v1840, 64
    %v1843 = vpop.permute.xlu0 %1842
    %v1845 = vmul.f32 %v1827, %v1843
    %v1846 = vxor.u32 %v1808, 2147483648
    %v1847 = vmul.f32 %v1846, 1.442695
    %v1848 = vpow.pop %v1847
    %v1849 = vadd.f32 %v1848, 1.0
    %v1850 = vrcp.pop %v1849
    %v1851 = vmul.f32 %v1849, %v1850
    %v1852 = vsub.f32 1.0, %v1851
    %v1853 = vmul.f32 %v1850, %v1852
    %v1854 = vadd.f32 %v1850, %v1853
    %vm1855 = vweird.f32 %v1849
    %vm1856 = vweird.f32 %v1850
    %vm1857 = vmor %vm1855, %vm1856
    %v1858 = vsel %vm1857, %v1850, %v1854
    %v1859 = vand.u32 2147483647, %v1849
    %vm1860 = vcmp.eq.f32.partialorder %v1859, 8.507059e+37
    %v1861 = vand.u32 %v1849, 2147483648
    %v1862 = vor.u32 1.1754944e-38, %v1861
    %v1863 = vsel %vm1860, %v1862, %v1858
    %v1864 = vmul.f32 1.0, %v1863
    %v1865 = vtanh.pop %v1808
    %v1866 = vmul.f32 %v1864, %v1748
    %1868 = vrot.lane.b32.xlu0 %v1865, 64
    %v1869 = vpop.permute.xlu0 %1868
    %v1871 = vmul.f32 %v1864, %v1869
    %1873 = vrot.lane.b32.xlu0 %v1871, 32
    %v1874 = vpop.permute.xlu0 %1873
    %v1876 = vadd.f32 %v1866, %v1874
    %v1877 = vtanh.pop %v1876
    %1879 = vrot.lane.b32.xlu0 %v1877, 64
    %v1880 = vpop.permute.xlu0 %1879
    %v1882 = vmul.f32 %v1864, %v1880
    %v1883 = vld [vmem:[#allocation2 + $0x6] sm:$0x3]
    %1885 = vrot.lane.b32.xlu0 %v1845, 32
    %v1886 = vpop.permute.xlu0 %1885
    %v1887 = vsel %vm180, %v1886, 0
    %1889 = vmatpush.msra.mxu0 0.0
    %1890 = vmatpush.msra.mxu0 0.0
    %1891 = vmatpush.msra.mxu0 0.0
    %1892 = vmatpush.msra.mxu0 0.0
    %1893 = vmatpush.msra.mxu0 0.0
    %1894 = vmatpush.msra.mxu0 0.0
    %1895 = vmatpush.msra.mxu0 0.0
    %1896 = vmatpush.msra.mxu0 0.0
    %1897 = vmatpush.msra.mxu0 0.0
    %1898 = vmatpush.msra.mxu0 0.0
    %1899 = vmatpush.msra.mxu0 0.0
    %1900 = vmatpush.msra.mxu0 0.0
    %1901 = vmatpush.msra.mxu0 %v1505
    %1902 = vmatpush.msra.mxu0 %v1504
    %1903 = vmatpush.msra.mxu0 %v1503
    %1904 = vmatpush.msra.mxu0 %v1502
    %1905 = vmatmul.f32.gmra.mxu0 %v1887
    %v1906 = vpop.f32.mrf.mxu0
    %v1907 = vadd.f32 0.0, %v1906
    %1908 = vdwg.mxu0
    %v1909 = vadd.f32 %v1883, %v1907
    %v1910 = vld [vmem:[#allocation3 + $0x8] sm:$0x3]
    %1912 = vrot.lane.b32.xlu0 %v1882, 32
    %v1913 = vpop.permute.xlu0 %1912
    %v1914 = vsel %vm180, %v1913, 0
    %1916 = vmatpush.msra.mxu0 0.0
    %1917 = vmatpush.msra.mxu0 0.0
    %1918 = vmatpush.msra.mxu0 0.0
    %1919 = vmatpush.msra.mxu0 0.0
    %1920 = vmatpush.msra.mxu0 0.0
    %1921 = vmatpush.msra.mxu0 0.0
    %1922 = vmatpush.msra.mxu0 0.0
    %1923 = vmatpush.msra.mxu0 0.0
    %1924 = vmatpush.msra.mxu0 0.0
    %1925 = vmatpush.msra.mxu0 0.0
    %1926 = vmatpush.msra.mxu0 0.0
    %1927 = vmatpush.msra.mxu0 0.0
    %1928 = vmatpush.msra.mxu0 %v1531
    %1929 = vmatpush.msra.mxu0 %v1530
    %1930 = vmatpush.msra.mxu0 %v1529
    %1931 = vmatpush.msra.mxu0 %v1528
    %1932 = vmatmul.f32.gmra.mxu0 %v1914
    %v1933 = vpop.f32.mrf.mxu0
    %v1934 = vadd.f32 0.0, %v1933
    %1935 = vdwg.mxu0
    %v1936 = vadd.f32 %v1910, %v1934
    %v1937 = vxor.u32 %v1909, 2147483648
    %v1938 = vmul.f32 %v1937, 1.442695
    %v1939 = vpow.pop %v1938
    %v1940 = vadd.f32 %v1939, 1.0
    %v1941 = vrcp.pop %v1940
    %v1942 = vmul.f32 %v1940, %v1941
    %v1943 = vsub.f32 1.0, %v1942
    %v1944 = vmul.f32 %v1941, %v1943
    %v1945 = vadd.f32 %v1941, %v1944
    %vm1946 = vweird.f32 %v1940
    %vm1947 = vweird.f32 %v1941
    %vm1948 = vmor %vm1946, %vm1947
    %v1949 = vsel %vm1948, %v1941, %v1945
    %v1950 = vand.u32 2147483647, %v1940
    %vm1951 = vcmp.eq.f32.partialorder %v1950, 8.507059e+37
    %v1952 = vand.u32 %v1940, 2147483648
    %v1953 = vor.u32 1.1754944e-38, %v1952
    %v1954 = vsel %vm1951, %v1953, %v1949
    %v1955 = vmul.f32 1.0, %v1954
    %v1956 = vtanh.pop %v1909
    %v1957 = vmul.f32 %v1955, %v1839
    %1959 = vrot.lane.b32.xlu0 %v1956, 64
    %v1960 = vpop.permute.xlu0 %1959
    %v1962 = vmul.f32 %v1955, %v1960
    %1964 = vrot.lane.b32.xlu0 %v1962, 32
    %v1965 = vpop.permute.xlu0 %1964
    %v1967 = vadd.f32 %v1957, %v1965
    %v1968 = vtanh.pop %v1967
    %1970 = vrot.lane.b32.xlu0 %v1968, 64
    %v1971 = vpop.permute.xlu0 %1970
    %v1973 = vmul.f32 %v1955, %v1971
    %v1974 = vxor.u32 %v1936, 2147483648
    %v1975 = vmul.f32 %v1974, 1.442695
    %v1976 = vpow.pop %v1975
    %v1977 = vadd.f32 %v1976, 1.0
    %v1978 = vrcp.pop %v1977
    %v1979 = vmul.f32 %v1977, %v1978
    %v1980 = vsub.f32 1.0, %v1979
    %v1981 = vmul.f32 %v1978, %v1980
    %v1982 = vadd.f32 %v1978, %v1981
    %vm1983 = vweird.f32 %v1977
    %vm1984 = vweird.f32 %v1978
    %vm1985 = vmor %vm1983, %vm1984
    %v1986 = vsel %vm1985, %v1978, %v1982
    %v1987 = vand.u32 2147483647, %v1977
    %vm1988 = vcmp.eq.f32.partialorder %v1987, 8.507059e+37
    %v1989 = vand.u32 %v1977, 2147483648
    %v1990 = vor.u32 1.1754944e-38, %v1989
    %v1991 = vsel %vm1988, %v1990, %v1986
    %v1992 = vmul.f32 1.0, %v1991
    %v1993 = vtanh.pop %v1936
    %v1994 = vmul.f32 %v1992, %v1876
    %1996 = vrot.lane.b32.xlu0 %v1993, 64
    %v1997 = vpop.permute.xlu0 %1996
    %v1999 = vmul.f32 %v1992, %v1997
    %2001 = vrot.lane.b32.xlu0 %v1999, 32
    %v2002 = vpop.permute.xlu0 %2001
    %v2004 = vadd.f32 %v1994, %v2002
    %v2005 = vtanh.pop %v2004
    %2007 = vrot.lane.b32.xlu0 %v2005, 64
    %v2008 = vpop.permute.xlu0 %2007
    %v2010 = vmul.f32 %v1992, %v2008
    %v2011 = vld [vmem:[#allocation2 + $0x8] sm:$0x3]
    %2013 = vrot.lane.b32.xlu0 %v1973, 32
    %v2014 = vpop.permute.xlu0 %2013
    %v2015 = vsel %vm180, %v2014, 0
    %2017 = vmatpush.msra.mxu0 0.0
    %2018 = vmatpush.msra.mxu0 0.0
    %2019 = vmatpush.msra.mxu0 0.0
    %2020 = vmatpush.msra.mxu0 0.0
    %2021 = vmatpush.msra.mxu0 0.0
    %2022 = vmatpush.msra.mxu0 0.0
    %2023 = vmatpush.msra.mxu0 0.0
    %2024 = vmatpush.msra.mxu0 0.0
    %2025 = vmatpush.msra.mxu0 0.0
    %2026 = vmatpush.msra.mxu0 0.0
    %2027 = vmatpush.msra.mxu0 0.0
    %2028 = vmatpush.msra.mxu0 0.0
    %2029 = vmatpush.msra.mxu0 %v1505
    %2030 = vmatpush.msra.mxu0 %v1504
    %2031 = vmatpush.msra.mxu0 %v1503
    %2032 = vmatpush.msra.mxu0 %v1502
    %2033 = vmatmul.f32.gmra.mxu0 %v2015
    %v2034 = vpop.f32.mrf.mxu0
    %v2035 = vadd.f32 0.0, %v2034
    %2036 = vdwg.mxu0
    %v2037 = vadd.f32 %v2011, %v2035
    %v2038 = vld [vmem:[#allocation3 + $0x6] sm:$0x3]
    %2040 = vrot.lane.b32.xlu0 %v2010, 32
    %v2041 = vpop.permute.xlu0 %2040
    %v2042 = vsel %vm180, %v2041, 0
    %2044 = vmatpush.msra.mxu0 0.0
    %2045 = vmatpush.msra.mxu0 0.0
    %2046 = vmatpush.msra.mxu0 0.0
    %2047 = vmatpush.msra.mxu0 0.0
    %2048 = vmatpush.msra.mxu0 0.0
    %2049 = vmatpush.msra.mxu0 0.0
    %2050 = vmatpush.msra.mxu0 0.0
    %2051 = vmatpush.msra.mxu0 0.0
    %2052 = vmatpush.msra.mxu0 0.0
    %2053 = vmatpush.msra.mxu0 0.0
    %2054 = vmatpush.msra.mxu0 0.0
    %2055 = vmatpush.msra.mxu0 0.0
    %2056 = vmatpush.msra.mxu0 %v1531
    %2057 = vmatpush.msra.mxu0 %v1530
    %2058 = vmatpush.msra.mxu0 %v1529
    %2059 = vmatpush.msra.mxu0 %v1528
    %2060 = vmatmul.f32.gmra.mxu0 %v2042
    %v2061 = vpop.f32.mrf.mxu0
    %v2062 = vadd.f32 0.0, %v2061
    %2063 = vdwg.mxu0
    %v2064 = vadd.f32 %v2038, %v2062
    %v2065 = vxor.u32 %v2037, 2147483648
    %v2066 = vmul.f32 %v2065, 1.442695
    %v2067 = vpow.pop %v2066
    %v2068 = vadd.f32 %v2067, 1.0
    %v2069 = vrcp.pop %v2068
    %v2070 = vmul.f32 %v2068, %v2069
    %v2071 = vsub.f32 1.0, %v2070
    %v2072 = vmul.f32 %v2069, %v2071
    %v2073 = vadd.f32 %v2069, %v2072
    %vm2074 = vweird.f32 %v2068
    %vm2075 = vweird.f32 %v2069
    %vm2076 = vmor %vm2074, %vm2075
    %v2077 = vsel %vm2076, %v2069, %v2073
    %v2078 = vand.u32 2147483647, %v2068
    %vm2079 = vcmp.eq.f32.partialorder %v2078, 8.507059e+37
    %v2080 = vand.u32 %v2068, 2147483648
    %v2081 = vor.u32 1.1754944e-38, %v2080
    %v2082 = vsel %vm2079, %v2081, %v2077
    %v2083 = vmul.f32 1.0, %v2082
    %v2084 = vtanh.pop %v2037
    %v2085 = vmul.f32 %v2083, %v1967
    %2087 = vrot.lane.b32.xlu0 %v2084, 64
    %v2088 = vpop.permute.xlu0 %2087
    %v2090 = vmul.f32 %v2083, %v2088
    %2092 = vrot.lane.b32.xlu0 %v2090, 32
    %v2093 = vpop.permute.xlu0 %2092
    %v2095 = vadd.f32 %v2085, %v2093
    %v2096 = vtanh.pop %v2095
    %2098 = vrot.lane.b32.xlu0 %v2096, 64
    %v2099 = vpop.permute.xlu0 %2098
    %v2101 = vmul.f32 %v2083, %v2099
    %v2102 = vxor.u32 %v2064, 2147483648
    %v2103 = vmul.f32 %v2102, 1.442695
    %v2104 = vpow.pop %v2103
    %v2105 = vadd.f32 %v2104, 1.0
    %v2106 = vrcp.pop %v2105
    %v2107 = vmul.f32 %v2105, %v2106
    %v2108 = vsub.f32 1.0, %v2107
    %v2109 = vmul.f32 %v2106, %v2108
    %v2110 = vadd.f32 %v2106, %v2109
    %vm2111 = vweird.f32 %v2105
    %vm2112 = vweird.f32 %v2106
    %vm2113 = vmor %vm2111, %vm2112
    %v2114 = vsel %vm2113, %v2106, %v2110
    %v2115 = vand.u32 2147483647, %v2105
    %vm2116 = vcmp.eq.f32.partialorder %v2115, 8.507059e+37
    %v2117 = vand.u32 %v2105, 2147483648
    %v2118 = vor.u32 1.1754944e-38, %v2117
    %v2119 = vsel %vm2116, %v2118, %v2114
    %v2120 = vmul.f32 1.0, %v2119
    %v2121 = vtanh.pop %v2064
    %v2122 = vmul.f32 %v2120, %v2004
    %2124 = vrot.lane.b32.xlu0 %v2121, 64
    %v2125 = vpop.permute.xlu0 %2124
    %v2127 = vmul.f32 %v2120, %v2125
    %2129 = vrot.lane.b32.xlu0 %v2127, 32
    %v2130 = vpop.permute.xlu0 %2129
    %v2132 = vadd.f32 %v2122, %v2130
    %v2133 = vtanh.pop %v2132
    %2135 = vrot.lane.b32.xlu0 %v2133, 64
    %v2136 = vpop.permute.xlu0 %2135
    %v2138 = vmul.f32 %v2120, %v2136
    %v2139 = vld [vmem:[#allocation2 + $0xa] sm:$0x3]
    %2141 = vrot.lane.b32.xlu0 %v2101, 32
    %v2142 = vpop.permute.xlu0 %2141
    %v2143 = vsel %vm180, %v2142, 0
    %2145 = vmatpush.msra.mxu0 0.0
    %2146 = vmatpush.msra.mxu0 0.0
    %2147 = vmatpush.msra.mxu0 0.0
    %2148 = vmatpush.msra.mxu0 0.0
    %2149 = vmatpush.msra.mxu0 0.0
    %2150 = vmatpush.msra.mxu0 0.0
    %2151 = vmatpush.msra.mxu0 0.0
    %2152 = vmatpush.msra.mxu0 0.0
    %2153 = vmatpush.msra.mxu0 0.0
    %2154 = vmatpush.msra.mxu0 0.0
    %2155 = vmatpush.msra.mxu0 0.0
    %2156 = vmatpush.msra.mxu0 0.0
    %2157 = vmatpush.msra.mxu0 %v1505
    %2158 = vmatpush.msra.mxu0 %v1504
    %2159 = vmatpush.msra.mxu0 %v1503
    %2160 = vmatpush.msra.mxu0 %v1502
    %2161 = vmatmul.f32.gmra.mxu0 %v2143
    %v2162 = vpop.f32.mrf.mxu0
    %v2163 = vadd.f32 0.0, %v2162
    %2164 = vdwg.mxu0
    %v2165 = vadd.f32 %v2139, %v2163
    %v2166 = vld [vmem:[#allocation3 + $0x4] sm:$0x3]
    %2168 = vrot.lane.b32.xlu0 %v2138, 32
    %v2169 = vpop.permute.xlu0 %2168
    %v2170 = vsel %vm180, %v2169, 0
    %2172 = vmatpush.msra.mxu0 0.0
    %2173 = vmatpush.msra.mxu0 0.0
    %2174 = vmatpush.msra.mxu0 0.0
    %2175 = vmatpush.msra.mxu0 0.0
    %2176 = vmatpush.msra.mxu0 0.0
    %2177 = vmatpush.msra.mxu0 0.0
    %2178 = vmatpush.msra.mxu0 0.0
    %2179 = vmatpush.msra.mxu0 0.0
    %2180 = vmatpush.msra.mxu0 0.0
    %2181 = vmatpush.msra.mxu0 0.0
    %2182 = vmatpush.msra.mxu0 0.0
    %2183 = vmatpush.msra.mxu0 0.0
    %2184 = vmatpush.msra.mxu0 %v1531
    %2185 = vmatpush.msra.mxu0 %v1530
    %2186 = vmatpush.msra.mxu0 %v1529
    %2187 = vmatpush.msra.mxu0 %v1528
    %2188 = vmatmul.f32.gmra.mxu0 %v2170
    %v2189 = vpop.f32.mrf.mxu0
    %v2190 = vadd.f32 0.0, %v2189
    %2191 = vdwg.mxu0
    %v2192 = vadd.f32 %v2166, %v2190
    %v2193 = vxor.u32 %v2165, 2147483648
    %v2194 = vmul.f32 %v2193, 1.442695
    %v2195 = vpow.pop %v2194
    %v2196 = vadd.f32 %v2195, 1.0
    %v2197 = vrcp.pop %v2196
    %v2198 = vmul.f32 %v2196, %v2197
    %v2199 = vsub.f32 1.0, %v2198
    %v2200 = vmul.f32 %v2197, %v2199
    %v2201 = vadd.f32 %v2197, %v2200
    %vm2202 = vweird.f32 %v2196
    %vm2203 = vweird.f32 %v2197
    %vm2204 = vmor %vm2202, %vm2203
    %v2205 = vsel %vm2204, %v2197, %v2201
    %v2206 = vand.u32 2147483647, %v2196
    %vm2207 = vcmp.eq.f32.partialorder %v2206, 8.507059e+37
    %v2208 = vand.u32 %v2196, 2147483648
    %v2209 = vor.u32 1.1754944e-38, %v2208
    %v2210 = vsel %vm2207, %v2209, %v2205
    %v2211 = vmul.f32 1.0, %v2210
    %v2212 = vtanh.pop %v2165
    %v2213 = vmul.f32 %v2211, %v2095
    %2215 = vrot.lane.b32.xlu0 %v2212, 64
    %v2216 = vpop.permute.xlu0 %2215
    %v2218 = vmul.f32 %v2211, %v2216
    %2220 = vrot.lane.b32.xlu0 %v2218, 32
    %v2221 = vpop.permute.xlu0 %2220
    %v2223 = vadd.f32 %v2213, %v2221
    %v2224 = vtanh.pop %v2223
    %2226 = vrot.lane.b32.xlu0 %v2224, 64
    %v2227 = vpop.permute.xlu0 %2226
    %v2229 = vmul.f32 %v2211, %v2227
    %v2230 = vxor.u32 %v2192, 2147483648
    %v2231 = vmul.f32 %v2230, 1.442695
    %v2232 = vpow.pop %v2231
    %v2233 = vadd.f32 %v2232, 1.0
    %v2234 = vrcp.pop %v2233
    %v2235 = vmul.f32 %v2233, %v2234
    %v2236 = vsub.f32 1.0, %v2235
    %v2237 = vmul.f32 %v2234, %v2236
    %v2238 = vadd.f32 %v2234, %v2237
    %vm2239 = vweird.f32 %v2233
    %vm2240 = vweird.f32 %v2234
    %vm2241 = vmor %vm2239, %vm2240
    %v2242 = vsel %vm2241, %v2234, %v2238
    %v2243 = vand.u32 2147483647, %v2233
    %vm2244 = vcmp.eq.f32.partialorder %v2243, 8.507059e+37
    %v2245 = vand.u32 %v2233, 2147483648
    %v2246 = vor.u32 1.1754944e-38, %v2245
    %v2247 = vsel %vm2244, %v2246, %v2242
    %v2248 = vmul.f32 1.0, %v2247
    %v2249 = vtanh.pop %v2192
    %v2250 = vmul.f32 %v2248, %v2132
    %2252 = vrot.lane.b32.xlu0 %v2249, 64
    %v2253 = vpop.permute.xlu0 %2252
    %v2255 = vmul.f32 %v2248, %v2253
    %2257 = vrot.lane.b32.xlu0 %v2255, 32
    %v2258 = vpop.permute.xlu0 %2257
    %v2260 = vadd.f32 %v2250, %v2258
    %v2261 = vtanh.pop %v2260
    %2263 = vrot.lane.b32.xlu0 %v2261, 64
    %v2264 = vpop.permute.xlu0 %2263
    %v2266 = vmul.f32 %v2248, %v2264
    %v2267 = vld [vmem:[#allocation2 + $0xc] sm:$0x3]
    %2269 = vrot.lane.b32.xlu0 %v2229, 32
    %v2270 = vpop.permute.xlu0 %2269
    %v2271 = vsel %vm180, %v2270, 0
    %2273 = vmatpush.msra.mxu0 0.0
    %2274 = vmatpush.msra.mxu0 0.0
    %2275 = vmatpush.msra.mxu0 0.0
    %2276 = vmatpush.msra.mxu0 0.0
    %2277 = vmatpush.msra.mxu0 0.0
    %2278 = vmatpush.msra.mxu0 0.0
    %2279 = vmatpush.msra.mxu0 0.0
    %2280 = vmatpush.msra.mxu0 0.0
    %2281 = vmatpush.msra.mxu0 0.0
    %2282 = vmatpush.msra.mxu0 0.0
    %2283 = vmatpush.msra.mxu0 0.0
    %2284 = vmatpush.msra.mxu0 0.0
    %2285 = vmatpush.msra.mxu0 %v1505
    %2286 = vmatpush.msra.mxu0 %v1504
    %2287 = vmatpush.msra.mxu0 %v1503
    %2288 = vmatpush.msra.mxu0 %v1502
    %2289 = vmatmul.f32.gmra.mxu0 %v2271
    %v2290 = vpop.f32.mrf.mxu0
    %v2291 = vadd.f32 0.0, %v2290
    %2292 = vdwg.mxu0
    %v2293 = vadd.f32 %v2267, %v2291
    %v2294 = vld [vmem:[#allocation3 + $0x2] sm:$0x3]
    %2296 = vrot.lane.b32.xlu0 %v2266, 32
    %v2297 = vpop.permute.xlu0 %2296
    %v2298 = vsel %vm180, %v2297, 0
    %2300 = vmatpush.msra.mxu0 0.0
    %2301 = vmatpush.msra.mxu0 0.0
    %2302 = vmatpush.msra.mxu0 0.0
    %2303 = vmatpush.msra.mxu0 0.0
    %2304 = vmatpush.msra.mxu0 0.0
    %2305 = vmatpush.msra.mxu0 0.0
    %2306 = vmatpush.msra.mxu0 0.0
    %2307 = vmatpush.msra.mxu0 0.0
    %2308 = vmatpush.msra.mxu0 0.0
    %2309 = vmatpush.msra.mxu0 0.0
    %2310 = vmatpush.msra.mxu0 0.0
    %2311 = vmatpush.msra.mxu0 0.0
    %2312 = vmatpush.msra.mxu0 %v1531
    %2313 = vmatpush.msra.mxu0 %v1530
    %2314 = vmatpush.msra.mxu0 %v1529
    %2315 = vmatpush.msra.mxu0 %v1528
    %2316 = vmatmul.f32.gmra.mxu0 %v2298
    %v2317 = vpop.f32.mrf.mxu0
    %v2318 = vadd.f32 0.0, %v2317
    %2319 = vdwg.mxu0
    %v2320 = vadd.f32 %v2294, %v2318
    %v2321 = vxor.u32 %v2293, 2147483648
    %v2322 = vmul.f32 %v2321, 1.442695
    %v2323 = vpow.pop %v2322
    %v2324 = vadd.f32 %v2323, 1.0
    %v2325 = vrcp.pop %v2324
    %v2326 = vmul.f32 %v2324, %v2325
    %v2327 = vsub.f32 1.0, %v2326
    %v2328 = vmul.f32 %v2325, %v2327
    %v2329 = vadd.f32 %v2325, %v2328
    %vm2330 = vweird.f32 %v2324
    %vm2331 = vweird.f32 %v2325
    %vm2332 = vmor %vm2330, %vm2331
    %v2333 = vsel %vm2332, %v2325, %v2329
    %v2334 = vand.u32 2147483647, %v2324
    %vm2335 = vcmp.eq.f32.partialorder %v2334, 8.507059e+37
    %v2336 = vand.u32 %v2324, 2147483648
    %v2337 = vor.u32 1.1754944e-38, %v2336
    %v2338 = vsel %vm2335, %v2337, %v2333
    %v2339 = vmul.f32 1.0, %v2338
    %v2340 = vtanh.pop %v2293
    %v2341 = vmul.f32 %v2339, %v2223
    %2343 = vrot.lane.b32.xlu0 %v2340, 64
    %v2344 = vpop.permute.xlu0 %2343
    %v2346 = vmul.f32 %v2339, %v2344
    %2348 = vrot.lane.b32.xlu0 %v2346, 32
    %v2349 = vpop.permute.xlu0 %2348
    %v2351 = vadd.f32 %v2341, %v2349
    %v2352 = vtanh.pop %v2351
    %2354 = vrot.lane.b32.xlu0 %v2352, 64
    %v2355 = vpop.permute.xlu0 %2354
    %v2357 = vmul.f32 %v2339, %v2355
    %v2358 = vxor.u32 %v2320, 2147483648
    %v2359 = vmul.f32 %v2358, 1.442695
    %v2360 = vpow.pop %v2359
    %v2361 = vadd.f32 %v2360, 1.0
    %v2362 = vrcp.pop %v2361
    %v2363 = vmul.f32 %v2361, %v2362
    %v2364 = vsub.f32 1.0, %v2363
    %v2365 = vmul.f32 %v2362, %v2364
    %v2366 = vadd.f32 %v2362, %v2365
    %vm2367 = vweird.f32 %v2361
    %vm2368 = vweird.f32 %v2362
    %vm2369 = vmor %vm2367, %vm2368
    %v2370 = vsel %vm2369, %v2362, %v2366
    %v2371 = vand.u32 2147483647, %v2361
    %vm2372 = vcmp.eq.f32.partialorder %v2371, 8.507059e+37
    %v2373 = vand.u32 %v2361, 2147483648
    %v2374 = vor.u32 1.1754944e-38, %v2373
    %v2375 = vsel %vm2372, %v2374, %v2370
    %v2376 = vmul.f32 1.0, %v2375
    %v2377 = vtanh.pop %v2320
    %v2378 = vmul.f32 %v2376, %v2260
    %2380 = vrot.lane.b32.xlu0 %v2377, 64
    %v2381 = vpop.permute.xlu0 %2380
    %v2383 = vmul.f32 %v2376, %v2381
    %2385 = vrot.lane.b32.xlu0 %v2383, 32
    %v2386 = vpop.permute.xlu0 %2385
    %v2388 = vadd.f32 %v2378, %v2386
    %v2389 = vtanh.pop %v2388
    %2391 = vrot.lane.b32.xlu0 %v2389, 64
    %v2392 = vpop.permute.xlu0 %2391
    %v2394 = vmul.f32 %v2376, %v2392
    %v2395 = vld [vmem:[#allocation2 + $0xe] sm:$0x3]
    %2397 = vrot.lane.b32.xlu0 %v2357, 32
    %v2398 = vpop.permute.xlu0 %2397
    %v2399 = vsel %vm180, %v2398, 0
    %2401 = vmatpush.msra.mxu0 0.0
    %2402 = vmatpush.msra.mxu0 0.0
    %2403 = vmatpush.msra.mxu0 0.0
    %2404 = vmatpush.msra.mxu0 0.0
    %2405 = vmatpush.msra.mxu0 0.0
    %2406 = vmatpush.msra.mxu0 0.0
    %2407 = vmatpush.msra.mxu0 0.0
    %2408 = vmatpush.msra.mxu0 0.0
    %2409 = vmatpush.msra.mxu0 0.0
    %2410 = vmatpush.msra.mxu0 0.0
    %2411 = vmatpush.msra.mxu0 0.0
    %2412 = vmatpush.msra.mxu0 0.0
    %2413 = vmatpush.msra.mxu0 %v1505
    %2414 = vmatpush.msra.mxu0 %v1504
    %2415 = vmatpush.msra.mxu0 %v1503
    %2416 = vmatpush.msra.mxu0 %v1502
    %2417 = vmatmul.f32.gmra.mxu0 %v2399
    %v2418 = vpop.f32.mrf.mxu0
    %v2419 = vadd.f32 0.0, %v2418
    %2420 = vdwg.mxu0
    %v2421 = vadd.f32 %v2395, %v2419
    %v2422 = vld [vmem:[#allocation3] sm:$0x3]
    %2424 = vrot.lane.b32.xlu0 %v2394, 32
    %v2425 = vpop.permute.xlu0 %2424
    %v2426 = vsel %vm180, %v2425, 0
    %2428 = vmatpush.msra.mxu0 0.0
    %2429 = vmatpush.msra.mxu0 0.0
    %2430 = vmatpush.msra.mxu0 0.0
    %2431 = vmatpush.msra.mxu0 0.0
    %2432 = vmatpush.msra.mxu0 0.0
    %2433 = vmatpush.msra.mxu0 0.0
    %2434 = vmatpush.msra.mxu0 0.0
    %2435 = vmatpush.msra.mxu0 0.0
    %2436 = vmatpush.msra.mxu0 0.0
    %2437 = vmatpush.msra.mxu0 0.0
    %2438 = vmatpush.msra.mxu0 0.0
    %2439 = vmatpush.msra.mxu0 0.0
    %2440 = vmatpush.msra.mxu0 %v1531
    %2441 = vmatpush.msra.mxu0 %v1530
    %2442 = vmatpush.msra.mxu0 %v1529
    %2443 = vmatpush.msra.mxu0 %v1528
    %2444 = vmatmul.f32.gmra.mxu0 %v2426
    %v2445 = vpop.f32.mrf.mxu0
    %v2446 = vadd.f32 0.0, %v2445
    %2447 = vdwg.mxu0
    %v2448 = vadd.f32 %v2422, %v2446
    %v2449 = vxor.u32 %v2421, 2147483648
    %v2450 = vmul.f32 %v2449, 1.442695
    %v2451 = vpow.pop %v2450
    %v2452 = vadd.f32 %v2451, 1.0
    %v2453 = vrcp.pop %v2452
    %v2454 = vmul.f32 %v2452, %v2453
    %v2455 = vsub.f32 1.0, %v2454
    %v2456 = vmul.f32 %v2453, %v2455
    %v2457 = vadd.f32 %v2453, %v2456
    %vm2458 = vweird.f32 %v2452
    %vm2459 = vweird.f32 %v2453
    %vm2460 = vmor %vm2458, %vm2459
    %v2461 = vsel %vm2460, %v2453, %v2457
    %v2462 = vand.u32 2147483647, %v2452
    %vm2463 = vcmp.eq.f32.partialorder %v2462, 8.507059e+37
    %v2464 = vand.u32 %v2452, 2147483648
    %v2465 = vor.u32 1.1754944e-38, %v2464
    %v2466 = vsel %vm2463, %v2465, %v2461
    %v2467 = vmul.f32 1.0, %v2466
    %v2468 = vtanh.pop %v2421
    %v2469 = vmul.f32 %v2467, %v2351
    %2471 = vrot.lane.b32.xlu0 %v2468, 64
    %v2472 = vpop.permute.xlu0 %2471
    %v2474 = vmul.f32 %v2467, %v2472
    %2476 = vrot.lane.b32.xlu0 %v2474, 32
    %v2477 = vpop.permute.xlu0 %2476
    %v2479 = vadd.f32 %v2469, %v2477
    %v2480 = vtanh.pop %v2479
    %2482 = vrot.lane.b32.xlu0 %v2480, 64
    %v2483 = vpop.permute.xlu0 %2482
    %v2485 = vmul.f32 %v2467, %v2483
    %v2486 = vxor.u32 %v2448, 2147483648
    %v2487 = vmul.f32 %v2486, 1.442695
    %v2488 = vpow.pop %v2487
    %v2489 = vadd.f32 %v2488, 1.0
    %v2490 = vrcp.pop %v2489
    %v2491 = vmul.f32 %v2489, %v2490
    %v2492 = vsub.f32 1.0, %v2491
    %v2493 = vmul.f32 %v2490, %v2492
    %v2494 = vadd.f32 %v2490, %v2493
    %vm2495 = vweird.f32 %v2489
    %vm2496 = vweird.f32 %v2490
    %vm2497 = vmor %vm2495, %vm2496
    %v2498 = vsel %vm2497, %v2490, %v2494
    %v2499 = vand.u32 2147483647, %v2489
    %vm2500 = vcmp.eq.f32.partialorder %v2499, 8.507059e+37
    %v2501 = vand.u32 %v2489, 2147483648
    %v2502 = vor.u32 1.1754944e-38, %v2501
    %v2503 = vsel %vm2500, %v2502, %v2498
    %v2504 = vmul.f32 1.0, %v2503
    %v2505 = vtanh.pop %v2448
    %v2506 = vmul.f32 %v2504, %v2388
    %2508 = vrot.lane.b32.xlu0 %v2505, 64
    %v2509 = vpop.permute.xlu0 %2508
    %v2511 = vmul.f32 %v2504, %v2509
    %2513 = vrot.lane.b32.xlu0 %v2511, 32
    %v2514 = vpop.permute.xlu0 %2513
    %v2516 = vadd.f32 %v2506, %v2514
    %v2517 = vtanh.pop %v2516
    %2519 = vrot.lane.b32.xlu0 %v2517, 64
    %v2520 = vpop.permute.xlu0 %2519
    %v2522 = vmul.f32 %v2504, %v2520
    %v2523 = vld [vmem:[%s13] sm:$0xff]
    %v2524 = vld [vmem:[%s13 + $0x8] sm:$0xff]
    %v2525 = vld [vmem:[%s13 + $0x10] sm:$0xff]
    %v2526 = vld [vmem:[%s13 + $0x18] sm:$0xff]
    %v2527 = vld [vmem:[%s13 + $0x20] sm:$0xff]
    %v2528 = vld [vmem:[%s13 + $0x28] sm:$0xff]
    %v2529 = vld [vmem:[%s13 + $0x30] sm:$0xff]
    %v2530 = vld [vmem:[%s13 + $0x38] sm:$0xff]
    %2532 = vrot.lane.b32.xlu0 %v2522, 32
    %v2533 = vpop.permute.xlu0 %2532
    %v2534 = vsel %vm180, %v2533, 0
    %2536 = vmatpush.msra.mxu0 0.0
    %2537 = vmatpush.msra.mxu0 0.0
    %2538 = vmatpush.msra.mxu0 0.0
    %2539 = vmatpush.msra.mxu0 0.0
    %2540 = vmatpush.msra.mxu0 0.0
    %2541 = vmatpush.msra.mxu0 0.0
    %2542 = vmatpush.msra.mxu0 0.0
    %2543 = vmatpush.msra.mxu0 0.0
    %2544 = vmatpush.msra.mxu0 0.0
    %2545 = vmatpush.msra.mxu0 0.0
    %2546 = vmatpush.msra.mxu0 0.0
    %2547 = vmatpush.msra.mxu0 0.0
    %2548 = vmatpush.msra.mxu0 %v2530
    %2549 = vmatpush.msra.mxu0 %v2529
    %2550 = vmatpush.msra.mxu0 %v2528
    %2551 = vmatpush.msra.mxu0 %v2527
    %2552 = vmatmul.f32.gmra.mxu0 %v2534
    %v2553 = vpop.f32.mrf.mxu0
    %v2554 = vadd.f32 0.0, %v2553
    %2555 = vdwg.mxu0
    %2557 = vrot.lane.b32.xlu0 %v2485, 32
    %v2558 = vpop.permute.xlu0 %2557
    %v2559 = vsel %vm180, %v2558, 0
    %2561 = vmatpush.msra.mxu0 0.0
    %2562 = vmatpush.msra.mxu0 0.0
    %2563 = vmatpush.msra.mxu0 0.0
    %2564 = vmatpush.msra.mxu0 0.0
    %2565 = vmatpush.msra.mxu0 0.0
    %2566 = vmatpush.msra.mxu0 0.0
    %2567 = vmatpush.msra.mxu0 0.0
    %2568 = vmatpush.msra.mxu0 0.0
    %2569 = vmatpush.msra.mxu0 0.0
    %2570 = vmatpush.msra.mxu0 0.0
    %2571 = vmatpush.msra.mxu0 0.0
    %2572 = vmatpush.msra.mxu0 0.0
    %2573 = vmatpush.msra.mxu0 %v2526
    %2574 = vmatpush.msra.mxu0 %v2525
    %2575 = vmatpush.msra.mxu0 %v2524
    %2576 = vmatpush.msra.mxu0 %v2523
    %2577 = vmatmul.f32.gmra.mxu0 %v2559
    %v2578 = vpop.f32.mrf.mxu0
    %v2579 = vadd.f32 %v2554, %v2578
    %2580 = vdwg.mxu0
    %v2581 = vld [vmem:[%s14] sm:$0x1]
    %v2583 = vperm.slane %v2581, 0
    %v2585 = vadd.f32 %v2579, %v2583
    %v2586 = vtanh.pop %v2585
    %v2587 = vsel %vm374, %v2586, 0.0
    %2588 = vadd.xlane.f32.xlu0 %v2587
    %v2589 = vpop.xlane.xlu0 %2588
    %v2590 = vrcp.pop 32.0
    %v2591 = vmul.f32 32.0, %v2590
    %v2592 = vsub.f32 1.0, %v2591
    %v2593 = vmul.f32 %v2590, %v2592
    %v2594 = vadd.f32 %v2590, %v2593
    %vm2595 = vweird.f32 %v2590
    %v2596 = vsel %vm2595, %v2590, %v2594
    %v2597 = vmul.f32 %v2589, %v2596
    %v2598 = vsub.f32 %v2586, %v2597
    %v2599 = vmul.f32 %v2598, %v2598
    %v2600 = vsel %vm374, %v2599, 0.0
    %2601 = vadd.xlane.f32.xlu0 %v2600
    %v2602 = vpop.xlane.xlu0 %2601
    %v2603 = vmul.f32 %v2602, %v2596
    %v2604 = vadd.f32 %v2603, 1e-05
    %v2605 = vrsqrt.pop %v2604
    %v2606 = vmul.f32 %v2605, %v2604
    %v2607 = vmul.f32 %v2606, %v2605
    %v2608 = vmul.f32 0.5, %v2607
    %v2609 = vsub.f32 1.5, %v2608
    %v2610 = vmul.f32 %v2605, %v2609
    %vm2611 = vweird.f32 %v2604
    %vm2612 = vweird.f32 %v2605
    %vm2613 = vmor %vm2611, %vm2612
    %v2614 = vsel %vm2613, %v2605, %v2610
    %v2615 = vmul.f32 %v2598, %v2614
    %v2616 = vld [vmem:[%s15] sm:$0x1]
    %v2618 = vperm.slane %v2616, 0
    %v2620 = vmul.f32 %v2615, %v2618
    %v2621 = vld [vmem:[%s16] sm:$0x1]
    %v2623 = vperm.slane %v2621, 0
    %v2625 = vadd.f32 %v2620, %v2623
    %2626 = vst.msk [vmem:[#allocation18] sm:$0x3] %vm374, %v2625
    // Predicated region
    $region98: #{tpu_custom_call.1} parent=1 // pred_check
      _
    $region99: #{tpu_custom_call.1} parent=1 // pred_check_branch
      %2628 = sbr.rel (0) target = $region101
    $region100: #{tpu_custom_call.1} parent=1 // pred_region
      %2630 = vsyncadd [#allocation8], 0
      %s2632 = sshll.u32 [#allocation18], 4
      %s2633 = int_to_ptr.vmem [resolvable:$true] %s2632
      %s2634 = sshll.u32 %s17, 4
      %s2635 = int_to_ptr.hbm [resolvable:$true] %s2634
      %2637 = dma.vmem_to_hbm [thread:$0]  %s2633, 32, %s2635, [#allocation8]
    $region101: #{tpu_custom_call.1} parent=1 // pred_fallthru
      _
    // Predicated region
    $region102: #{tpu_custom_call.1} parent=1 // pred_check
      _
    $region103: #{tpu_custom_call.1} parent=1 // pred_check_branch
      %2639 = sbr.rel (0) target = $region105
    $region104: #{tpu_custom_call.1} parent=1 // pred_region
      %2641 = dma.done [#allocation8], 32
    $region105: #{tpu_custom_call.1} parent=1 // pred_fallthru
      _
    %2642 = vsyncpa [#allocation7], 1
    %2643 = vsyncpa [#allocation10], 1
    %2644 = vsyncpa [#allocation13], 1
    %2645 = vsyncpa [#allocation16], 1
    %2646 = vsyncpa [#allocation8], 1

</llo_original>
